<compile_context>
chip_gen: v5e
topology: v5e:2x2
jax: 0.10.0
libtpu: 0.0.40
codegen_flags: <defaults>
</compile_context>

<pallas_src>
import functools

import jax
import jax.numpy as jnp
from jax import lax
from jax.experimental import pallas as pl
from jax.experimental.pallas import tpu as pltpu

BN_EPS = 1e-5
LRELU_SLOPE = 0.1
VMEM_LIMIT = 32 * 1024 * 1024      # fits v5e/v6e (128 MiB) and v7x (64 MiB)
FOLD_MAX_CIN = 32                  # fold 9 taps into one dot when 9*Cin <= 288


def _round_up(x, m):
    return (x + m - 1) // m * m


def _pick_row_tile(H, Wp, Cin, Cout, fold, budget_bytes=8 << 20):
    """Image-row tile TH so one pass-1 step's VMEM footprint is ~<= budget."""
    lane = 128
    cin_l = _round_up(Cin, lane)           # x tile is lane-padded in VMEM
    cout_l = _round_up(Cout, lane)
    k_l = _round_up(9 * Cin, lane) if fold else 0
    # bytes per flat output row: x tile (bf16, 2 buffers) + y tile (bf16, 2
    # buffers) + im2col LHS (bf16) + f32 accumulator, all lane-padded in VMEM.
    per_row = 4 * cin_l + 4 * cout_l + 2 * k_l + 4 * cout_l
    w_bytes = 2 * (9 * Cin) * cout_l * 2   # resident weights (double-buffered)
    # TODO(synk): for very large Cin*Cout the resident weights need their own
    # Cout/K tiling (extra grid axes); not needed for tiny-yolo test shapes.
    avail = max(budget_bytes - w_bytes, 1 << 20)
    return int(max(1, min(H, avail // (per_row * Wp))))


def _conv_stats_kernel(x_ref, w_ref, y_ref, stats_ref, *, Wp, W, H, TH, fold):
    """3x3 conv on one row tile (stride-trick layout) + partial BN statistics.

    x_ref    : (R_alloc, Cin)  bf16  flat padded rows for this tile (+ halo)
    w_ref    : (9*Cin, Cout)   bf16  im2col-ordered weights
    y_ref    : (TH*Wp, Cout)   bf16  conv output (wrap columns included)
    stats_ref: (2, Cout)       f32   [sum; sum_sq] over this tile's valid pixels
    """
    r_out = y_ref.shape[0]
    cin = x_ref.shape[1]

    if fold:
        # One deep MXU contraction: K = 9*Cin (big win whenever Cin << 128).
        taps = [x_ref[pl.ds(kh * Wp + kw, r_out), :]
                for kh in range(3) for kw in range(3)]
        lhs = jnp.concatenate(taps, axis=-1)               # (r_out, 9*Cin) bf16
        acc = jnp.dot(lhs, w_ref[...], preferred_element_type=jnp.float32)
    else:
        # Cin already fills the MXU K dim: keep 9 shallow dots, f32 accumulate.
        acc = jnp.zeros((r_out, y_ref.shape[1]), jnp.float32)
        for t in range(9):
            kh, kw = t // 3, t % 3
            lhs = x_ref[pl.ds(kh * Wp + kw, r_out), :]
            acc = acc + jnp.dot(lhs, w_ref[pl.ds(t * cin, cin), :],
                                preferred_element_type=jnp.float32)

    y_ref[...] = acc.astype(y_ref.dtype)

    # Validity mask generated in-kernel (no HBM mask input): drop the 2 wrap
    # columns per image row, and rows past H in the last row tile.
    lr = lax.broadcasted_iota(jnp.int32, (r_out, 1), 0)     # local flat row idx
    col = lr % Wp                                           # column within row
    valid_rows = (H - pl.program_id(1) * TH) * Wp           # scalar bound
    m = jnp.logical_and(col < W, lr < valid_rows).astype(jnp.float32)

    ym = acc * m
    s = jnp.sum(ym, axis=0, keepdims=True)                  # (1, Cout)
    ss = jnp.sum(ym * acc, axis=0, keepdims=True)           # (1, Cout)
    stats_ref[...] = jnp.concatenate([s, ss], axis=0)


def _bn_lrelu_kernel(y_ref, scale_ref, shift_ref, o_ref):
    """Elementwise y*scale + shift, then LeakyReLU(0.1); f32 epilogue math."""
    z = y_ref[...].astype(jnp.float32) * scale_ref[...] + shift_ref[...]
    o_ref[...] = jnp.where(z > 0, z, LRELU_SLOPE * z)


@jax.jit
def conv_bn_relu(x_nchw, weight, gamma, beta):
    """x_nchw: (N, Cin, H, W); weight: (Cout, Cin, 3, 3); gamma/beta: (Cout,)."""
    N, Cin, H, W = x_nchw.shape
    Cout, _, KH, KW = weight.shape
    assert (KH, KW) == (3, 3), "module is fixed 3x3, stride 1, pad 1"

    Wp, Hp = W + 2, H + 2              # padded width == flat row stride
    fold = Cin <= FOLD_MAX_CIN
    TH = _pick_row_tile(H, Wp, Cin, Cout, fold)
    n_tiles = pl.cdiv(H, TH)
    R_y = TH * Wp                      # flat output rows per tile
    max_off = 2 * Wp + 2               # largest tap offset (2-row + 2-col halo)
    R_alloc = _round_up(R_y + max_off, 8)

    # ---- single padded NHWC copy, flattened with row stride Wp; per-row-tile
    # views with a halo are materialized once (duplication ~2/TH of x, which is
    # tiny next to the Cout-wide intermediate). ----
    # TODO(synk): accept NHWC input / fuse pad+cast to drop the XLA prep passes.
    x_nhwc = jnp.transpose(x_nchw, (0, 2, 3, 1)).astype(jnp.bfloat16)
    x_pad = jnp.pad(x_nhwc, ((0, 0), (1, 1), (1, 1), (0, 0)))
    x_flat = x_pad.reshape(N, Hp * Wp, Cin)
    need = (n_tiles - 1) * R_y + R_alloc
    x_flat = jnp.pad(x_flat, ((0, 0), (0, max(0, need - Hp * Wp)), (0, 0)))
    idx = (jnp.arange(n_tiles) * R_y)[:, None] + jnp.arange(R_alloc)[None, :]
    x_tiles = x_flat[:, idx, :]        # (N, n_tiles, R_alloc, Cin) bf16

    # im2col-ordered weights: rows (kh, kw, cin), columns cout; bf16 for MXU.
    w_flat = jnp.transpose(weight, (2, 3, 1, 0)).reshape(KH * KW * Cin, Cout)
    w_flat = w_flat.astype(jnp.bfloat16)

    kernel1 = functools.partial(_conv_stats_kernel,
                                Wp=Wp, W=W, H=H, TH=TH, fold=fold)

    # -------- pass 1: conv + per-tile BN partial sums, grid=(N, row tiles) ----
    y, stats = pl.pallas_call(
        kernel1,
        out_shape=(
            jax.ShapeDtypeStruct((N, n_tiles, R_y, Cout), jnp.bfloat16),
            jax.ShapeDtypeStruct((N, n_tiles, 2, Cout), jnp.float32),
        ),
        grid_spec=pltpu.PrefetchScalarGridSpec(
            num_scalar_prefetch=0,
            grid=(N, n_tiles),
            in_specs=[
                pl.BlockSpec((None, None, R_alloc, Cin),
                             lambda n, t: (n, t, 0, 0)),
                # grid-invariant weights (DMA'd once, stays resident).
                # TODO(synk): pipeline_mode=pl.Buffered(1) to single-buffer it.
                pl.BlockSpec((KH * KW * Cin, Cout), lambda n, t: (0, 0)),
            ],
            out_specs=(
                pl.BlockSpec((None, None, R_y, Cout),
                             lambda n, t: (n, t, 0, 0)),
                pl.BlockSpec((None, None, 2, Cout),
                             lambda n, t: (n, t, 0, 0)),
            ),
        ),
        compiler_params=pltpu.CompilerParams(
            dimension_semantics=("parallel", "parallel"),
            vmem_limit_bytes=VMEM_LIMIT,
        ),
    )(x_tiles, w_flat)

    # -------- tiny cross-tile BN reduction (train-mode batch statistics) -----
    # TODO(synk): running_mean/running_var buffer updates (training-side state)
    # are not modeled; they do not affect the forward output.
    # TODO(synk): switch to shifted sums if channel means can be very large
    # (E[x^2]-E[x]^2 cancellation); fine for conv outputs with zero-mean init.
    count = jnp.float32(N * H * W)
    sum_c = jnp.sum(stats[:, :, 0, :], axis=(0, 1))
    sumsq_c = jnp.sum(stats[:, :, 1, :], axis=(0, 1))
    mean = sum_c / count
    var = jnp.maximum(sumsq_c / count - mean * mean, 0.0)   # biased (train mode)
    inv = lax.rsqrt(var + BN_EPS)
    g = gamma.astype(jnp.float32)
    b = beta.astype(jnp.float32)
    scale = (g * inv).reshape(1, Cout)
    shift = (b - mean * g * inv).reshape(1, Cout)

    # -------- pass 2: normalize + LeakyReLU; same (N, n_tiles) tiling ---------
    z = pl.pallas_call(
        _bn_lrelu_kernel,
        out_shape=jax.ShapeDtypeStruct((N, n_tiles, R_y, Cout), jnp.float32),
        grid_spec=pltpu.PrefetchScalarGridSpec(
            num_scalar_prefetch=0,
            grid=(N, n_tiles),
            in_specs=[
                pl.BlockSpec((None, None, R_y, Cout),
                             lambda n, t: (n, t, 0, 0)),
                pl.BlockSpec((1, Cout), lambda n, t: (0, 0)),
                pl.BlockSpec((1, Cout), lambda n, t: (0, 0)),
            ],
            out_specs=pl.BlockSpec((None, None, R_y, Cout),
                                   lambda n, t: (n, t, 0, 0)),
        ),
        compiler_params=pltpu.CompilerParams(
            dimension_semantics=("parallel", "parallel"),
            vmem_limit_bytes=VMEM_LIMIT,
        ),
    )(y, scale, shift)

    # drop wrap columns / padded rows, back to NCHW f32 (module's output dtype).
    # TODO(synk): fold this slice/transpose into pass 2's out_spec (write the
    # final layout directly) to avoid one extra XLA pass over the intermediate.
    out = z.reshape(N, n_tiles * TH, Wp, Cout)[:, :H, :W, :]
    return jnp.transpose(out, (0, 3, 1, 2))


def _reference(x_nchw, weight, gamma, beta):
    """Pure-JAX f32 reference: conv -> train-mode BN -> LeakyReLU (NCHW)."""
    y = lax.conv_general_dilated(
        x_nchw.astype(jnp.float32), weight.astype(jnp.float32),
        window_strides=(1, 1), padding=((1, 1), (1, 1)),
        dimension_numbers=("NCHW", "OIHW", "NCHW"),
    )
    mean = jnp.mean(y, axis=(0, 2, 3), keepdims=True)
    var = jnp.mean(jnp.square(y - mean), axis=(0, 2, 3), keepdims=True)
    y = (y - mean) * lax.rsqrt(var + BN_EPS)
    y = y * gamma.reshape(1, -1, 1, 1) + beta.reshape(1, -1, 1, 1)
    return jnp.where(y > 0, y, LRELU_SLOPE * y)


if __name__ == "__main__":
    key = jax.random.PRNGKey(0)
    N, Cin, H, W = 2, 4, 16, 16
    Cout, K = 8, 3

    k_x, k_w = jax.random.split(key)
    x = jax.random.normal(k_x, (N, Cin, H, W), dtype=jnp.float32)

    # xavier_uniform_ init for the conv weight (deterministic, no checkpoint)
    fan_in, fan_out = Cin * K * K, Cout * K * K
    bound = (6.0 / (fan_in + fan_out)) ** 0.5
    weight = jax.random.uniform(
        k_w, (Cout, Cin, K, K), minval=-bound, maxval=bound, dtype=jnp.float32
    )
    # BatchNorm2d default init
    gamma = jnp.ones((Cout,), dtype=jnp.float32)
    beta = jnp.zeros((Cout,), dtype=jnp.float32)

    out = jax.block_until_ready(conv_bn_relu(x, weight, gamma, beta))
    ref = jax.block_until_ready(_reference(x, weight, gamma, beta))

    assert out.shape == (N, Cout, H, W), out.shape
    # bf16 MXU inputs + bf16 conv intermediate -> loosened tolerance vs f32 ref
    # (intentional: fused Conv+BN; stats come from the f32 accumulator).
    assert jnp.allclose(out, ref, atol=5e-2, rtol=5e-2), float(
        jnp.max(jnp.abs(out - ref))
    )
    print("KERNEL_OK")
</pallas_src>

<mosaic_0001>
module attributes {stable_mosaic.version = 11 : i64} {
  func.func @_conv_stats_kernel(%arg0: i32, %arg1: i32, %arg2: memref<1x1x328x4xbf16, #tpu.memory_space<vmem>>, %arg3: memref<36x8xbf16, #tpu.memory_space<vmem>>, %arg4: memref<1x1x288x8xbf16, #tpu.memory_space<vmem>>, %arg5: memref<1x1x2x8xf32, #tpu.memory_space<vmem>>) attributes {dimension_semantics = [#tpu.dimension_semantics<parallel>, #tpu.dimension_semantics<parallel>], iteration_bounds = array<i64: 2, 1>, scalar_prefetch = 0 : i64, scratch_operands = 0 : i64, tpu.core_type = #tpu.core_type<tc>, window_params = [{transform_indices = @transform_0, window_bounds = array<i64: 1, 1, 328, 4>}, {pipeline_mode = #tpu.pipeline_mode<synchronous>, transform_indices = @transform_1, window_bounds = array<i64: 36, 8>}, {transform_indices = @transform_2, window_bounds = array<i64: 1, 1, 288, 8>}, {transform_indices = @transform_3, window_bounds = array<i64: 1, 1, 2, 8>}]} {
    %c0 = arith.constant 0 : index
    %c0_0 = arith.constant 0 : index
    %c0_1 = arith.constant 0 : index
    %c0_2 = arith.constant 0 : index
    %0 = vector.load %arg2[%c0, %c0_0, %c0_1, %c0_2] : memref<1x1x328x4xbf16, #tpu.memory_space<vmem>>, vector<1x1x288x4xbf16>
    %1 = vector.shape_cast %0 : vector<1x1x288x4xbf16> to vector<288x4xbf16>
    %c0_3 = arith.constant 0 : index
    %c0_4 = arith.constant 0 : index
    %c1 = arith.constant 1 : index
    %c0_5 = arith.constant 0 : index
    %2 = vector.load %arg2[%c0_3, %c0_4, %c1, %c0_5] : memref<1x1x328x4xbf16, #tpu.memory_space<vmem>>, vector<1x1x288x4xbf16>
    %3 = vector.shape_cast %2 : vector<1x1x288x4xbf16> to vector<288x4xbf16>
    %c0_6 = arith.constant 0 : index
    %c0_7 = arith.constant 0 : index
    %c2 = arith.constant 2 : index
    %c0_8 = arith.constant 0 : index
    %4 = vector.load %arg2[%c0_6, %c0_7, %c2, %c0_8] : memref<1x1x328x4xbf16, #tpu.memory_space<vmem>>, vector<1x1x288x4xbf16>
    %5 = vector.shape_cast %4 : vector<1x1x288x4xbf16> to vector<288x4xbf16>
    %c0_9 = arith.constant 0 : index
    %c0_10 = arith.constant 0 : index
    %c18 = arith.constant 18 : index
    %c0_11 = arith.constant 0 : index
    %6 = vector.load %arg2[%c0_9, %c0_10, %c18, %c0_11] : memref<1x1x328x4xbf16, #tpu.memory_space<vmem>>, vector<1x1x288x4xbf16>
    %7 = vector.shape_cast %6 : vector<1x1x288x4xbf16> to vector<288x4xbf16>
    %c0_12 = arith.constant 0 : index
    %c0_13 = arith.constant 0 : index
    %c19 = arith.constant 19 : index
    %c0_14 = arith.constant 0 : index
    %8 = vector.load %arg2[%c0_12, %c0_13, %c19, %c0_14] : memref<1x1x328x4xbf16, #tpu.memory_space<vmem>>, vector<1x1x288x4xbf16>
    %9 = vector.shape_cast %8 : vector<1x1x288x4xbf16> to vector<288x4xbf16>
    %c0_15 = arith.constant 0 : index
    %c0_16 = arith.constant 0 : index
    %c20 = arith.constant 20 : index
    %c0_17 = arith.constant 0 : index
    %10 = vector.load %arg2[%c0_15, %c0_16, %c20, %c0_17] : memref<1x1x328x4xbf16, #tpu.memory_space<vmem>>, vector<1x1x288x4xbf16>
    %11 = vector.shape_cast %10 : vector<1x1x288x4xbf16> to vector<288x4xbf16>
    %c0_18 = arith.constant 0 : index
    %c0_19 = arith.constant 0 : index
    %c36 = arith.constant 36 : index
    %c0_20 = arith.constant 0 : index
    %12 = vector.load %arg2[%c0_18, %c0_19, %c36, %c0_20] : memref<1x1x328x4xbf16, #tpu.memory_space<vmem>>, vector<1x1x288x4xbf16>
    %13 = vector.shape_cast %12 : vector<1x1x288x4xbf16> to vector<288x4xbf16>
    %c0_21 = arith.constant 0 : index
    %c0_22 = arith.constant 0 : index
    %c37 = arith.constant 37 : index
    %c0_23 = arith.constant 0 : index
    %14 = vector.load %arg2[%c0_21, %c0_22, %c37, %c0_23] : memref<1x1x328x4xbf16, #tpu.memory_space<vmem>>, vector<1x1x288x4xbf16>
    %15 = vector.shape_cast %14 : vector<1x1x288x4xbf16> to vector<288x4xbf16>
    %c0_24 = arith.constant 0 : index
    %c0_25 = arith.constant 0 : index
    %c38 = arith.constant 38 : index
    %c0_26 = arith.constant 0 : index
    %16 = vector.load %arg2[%c0_24, %c0_25, %c38, %c0_26] : memref<1x1x328x4xbf16, #tpu.memory_space<vmem>>, vector<1x1x288x4xbf16>
    %17 = vector.shape_cast %16 : vector<1x1x288x4xbf16> to vector<288x4xbf16>
    %18 = tpu.concatenate %1, %3, %5, %7, %9, %11, %13, %15, %17 in 1 : vector<288x4xbf16>, vector<288x4xbf16>, vector<288x4xbf16>, vector<288x4xbf16>, vector<288x4xbf16>, vector<288x4xbf16>, vector<288x4xbf16>, vector<288x4xbf16>, vector<288x4xbf16> -> vector<288x36xbf16>
    %c0_27 = arith.constant 0 : index
    %c0_28 = arith.constant 0 : index
    %19 = vector.load %arg3[%c0_27, %c0_28] : memref<36x8xbf16, #tpu.memory_space<vmem>>, vector<36x8xbf16>
    %cst = arith.constant dense<0.000000e+00> : vector<288x8xf32>
    %20 = tpu.matmul %18, %19, %cst {dimension_numbers = #tpu.dot_dimension_numbers<[1], [0], [0], [1], [0, 0, 1, 1], [], []>} : vector<288x36xbf16>, vector<36x8xbf16>, vector<288x8xf32> -> vector<288x8xf32>
    %21 = arith.truncf %20 : vector<288x8xf32> to vector<288x8xbf16>
    %c0_29 = arith.constant 0 : index
    %c0_30 = arith.constant 0 : index
    %c0_31 = arith.constant 0 : index
    %c0_32 = arith.constant 0 : index
    %22 = vector.load %arg4[%c0_29, %c0_30, %c0_31, %c0_32] : memref<1x1x288x8xbf16, #tpu.memory_space<vmem>>, vector<1x1x288x8xbf16>
    %23 = vector.shape_cast %22 : vector<1x1x288x8xbf16> to vector<288x8xbf16>
    %24 = vector.shape_cast %21 : vector<288x8xbf16> to vector<1x1x288x8xbf16>
    tpu.vector_store %arg4[%c0_29, %c0_30, %c0_31, %c0_32], %24 {strides = array<i32>} : memref<1x1x288x8xbf16, #tpu.memory_space<vmem>>, vector<1x1x288x8xbf16>,
    %25 = tpu.iota {dimensions = array<i32: 0>} : vector<288x1xi32>
    %c18_i32 = arith.constant 18 : i32
    %c0_i32 = arith.constant 0 : i32
    %26 = arith.cmpi eq, %c18_i32, %c0_i32 : i32
    %c1_i32 = arith.constant 1 : i32
    %27 = arith.select %26, %c1_i32, %c18_i32 : i32
    %28 = vector.broadcast %27 : i32 to vector<288x1xi32>
    %29 = arith.remsi %25, %28 : vector<288x1xi32>
    %c0_i32_33 = arith.constant 0 : i32
    %30 = vector.broadcast %c0_i32_33 : i32 to vector<288x1xi32>
    %31 = arith.cmpi ne, %29, %30 : vector<288x1xi32>
    %c0_i32_34 = arith.constant 0 : i32
    %32 = vector.broadcast %c0_i32_34 : i32 to vector<288x1xi32>
    %33 = arith.cmpi slt, %29, %32 : vector<288x1xi32>
    %c0_i32_35 = arith.constant 0 : i32
    %34 = arith.cmpi slt, %27, %c0_i32_35 : i32
    %35 = vector.broadcast %34 : i1 to vector<288x1xi1>
    %36 = vector.broadcast %35 : vector<288x1xi1> to vector<288x1xi1>
    %37 = arith.xori %33, %36 : vector<288x1xi1>
    %38 = arith.andi %37, %31 : vector<288x1xi1>
    %39 = vector.broadcast %27 : i32 to vector<288x1xi32>
    %40 = arith.addi %29, %39 : vector<288x1xi32>
    %41 = arith.select %38, %40, %29 : vector<288x1xi1>, vector<288x1xi32>
    %c16_i32 = arith.constant 16 : i32
    %42 = arith.muli %arg1, %c16_i32 : i32
    %c16_i32_36 = arith.constant 16 : i32
    %43 = arith.subi %c16_i32_36, %42 : i32
    %c18_i32_37 = arith.constant 18 : i32
    %44 = arith.muli %43, %c18_i32_37 : i32
    %c16_i32_38 = arith.constant 16 : i32
    %45 = vector.broadcast %c16_i32_38 : i32 to vector<288x1xi32>
    %46 = arith.cmpi slt, %41, %45 : vector<288x1xi32>
    %47 = vector.broadcast %44 : i32 to vector<288x1xi32>
    %48 = arith.cmpi slt, %25, %47 : vector<288x1xi32>
    %49 = arith.andi %46, %48 : vector<288x1xi1>
    %50 = arith.extui %49 : vector<288x1xi1> to vector<288x1xi32>
    %51 = arith.sitofp %50 : vector<288x1xi32> to vector<288x1xf32>
    %52 = vector.broadcast %51 : vector<288x1xf32> to vector<288x8xf32>
    %53 = arith.mulf %20, %52 : vector<288x8xf32>
    %cst_39 = arith.constant dense<0.000000e+00> : vector<8xf32>
    %54 = vector.multi_reduction <add>, %53, %cst_39 [0] : vector<288x8xf32> to vector<8xf32>
    %55 = vector.shape_cast %54 : vector<8xf32> to vector<1x8xf32>
    %56 = arith.mulf %53, %20 : vector<288x8xf32>
    %cst_40 = arith.constant dense<0.000000e+00> : vector<8xf32>
    %57 = vector.multi_reduction <add>, %56, %cst_40 [0] : vector<288x8xf32> to vector<8xf32>
    %58 = vector.shape_cast %57 : vector<8xf32> to vector<1x8xf32>
    %59 = tpu.concatenate %55, %58 in 0 : vector<1x8xf32>, vector<1x8xf32> -> vector<2x8xf32>
    %c0_41 = arith.constant 0 : index
    %c0_42 = arith.constant 0 : index
    %c0_43 = arith.constant 0 : index
    %c0_44 = arith.constant 0 : index
    %60 = vector.load %arg5[%c0_41, %c0_42, %c0_43, %c0_44] : memref<1x1x2x8xf32, #tpu.memory_space<vmem>>, vector<1x1x2x8xf32>
    %61 = vector.shape_cast %60 : vector<1x1x2x8xf32> to vector<2x8xf32>
    %62 = vector.shape_cast %59 : vector<2x8xf32> to vector<1x1x2x8xf32>
    tpu.vector_store %arg5[%c0_41, %c0_42, %c0_43, %c0_44], %62 {strides = array<i32>} : memref<1x1x2x8xf32, #tpu.memory_space<vmem>>, vector<1x1x2x8xf32>,
    return
  }
  func.func @transform_0(%arg0: i32, %arg1: i32) -> (i32, i32, i32, i32) {
    %c0_i32 = arith.constant 0 : i32
    %c0_i32_0 = arith.constant 0 : i32
    %c0_i32_1 = arith.constant 0 : i32
    return %arg0, %arg1, %c0_i32, %c0_i32_0 : i32, i32, i32, i32
  }
  func.func @transform_1(%arg0: i32, %arg1: i32) -> (i32, i32) {
    %c0_i32 = arith.constant 0 : i32
    %c0_i32_0 = arith.constant 0 : i32
    %c0_i32_1 = arith.constant 0 : i32
    return %c0_i32, %c0_i32_0 : i32, i32
  }
  func.func @transform_2(%arg0: i32, %arg1: i32) -> (i32, i32, i32, i32) {
    %c0_i32 = arith.constant 0 : i32
    %c0_i32_0 = arith.constant 0 : i32
    %c0_i32_1 = arith.constant 0 : i32
    return %arg0, %arg1, %c0_i32, %c0_i32_0 : i32, i32, i32, i32
  }
  func.func @transform_3(%arg0: i32, %arg1: i32) -> (i32, i32, i32, i32) {
    %c0_i32 = arith.constant 0 : i32
    %c0_i32_0 = arith.constant 0 : i32
    %c0_i32_1 = arith.constant 0 : i32
    return %arg0, %arg1, %c0_i32, %c0_i32_0 : i32, i32, i32, i32
  }
}

module attributes {stable_mosaic.version = 11 : i64} {
  func.func @_bn_lrelu_kernel(%arg0: i32, %arg1: i32, %arg2: memref<1x1x288x8xbf16, #tpu.memory_space<vmem>>, %arg3: memref<1x8xf32, #tpu.memory_space<vmem>>, %arg4: memref<1x8xf32, #tpu.memory_space<vmem>>, %arg5: memref<1x1x288x8xf32, #tpu.memory_space<vmem>>) attributes {dimension_semantics = [#tpu.dimension_semantics<parallel>, #tpu.dimension_semantics<parallel>], iteration_bounds = array<i64: 2, 1>, scalar_prefetch = 0 : i64, scratch_operands = 0 : i64, tpu.core_type = #tpu.core_type<tc>, window_params = [{transform_indices = @transform_0, window_bounds = array<i64: 1, 1, 288, 8>}, {pipeline_mode = #tpu.pipeline_mode<synchronous>, transform_indices = @transform_1, window_bounds = array<i64: 1, 8>}, {pipeline_mode = #tpu.pipeline_mode<synchronous>, transform_indices = @transform_2, window_bounds = array<i64: 1, 8>}, {transform_indices = @transform_3, window_bounds = array<i64: 1, 1, 288, 8>}]} {
    %c0 = arith.constant 0 : index
    %c0_0 = arith.constant 0 : index
    %c0_1 = arith.constant 0 : index
    %c0_2 = arith.constant 0 : index
    %0 = vector.load %arg2[%c0, %c0_0, %c0_1, %c0_2] : memref<1x1x288x8xbf16, #tpu.memory_space<vmem>>, vector<1x1x288x8xbf16>
    %1 = vector.shape_cast %0 : vector<1x1x288x8xbf16> to vector<288x8xbf16>
    %2 = arith.extf %1 : vector<288x8xbf16> to vector<288x8xf32>
    %c0_3 = arith.constant 0 : index
    %c0_4 = arith.constant 0 : index
    %3 = vector.load %arg3[%c0_3, %c0_4] : memref<1x8xf32, #tpu.memory_space<vmem>>, vector<1x8xf32>
    %4 = vector.broadcast %3 : vector<1x8xf32> to vector<288x8xf32>
    %5 = arith.mulf %2, %4 : vector<288x8xf32>
    %c0_5 = arith.constant 0 : index
    %c0_6 = arith.constant 0 : index
    %6 = vector.load %arg4[%c0_5, %c0_6] : memref<1x8xf32, #tpu.memory_space<vmem>>, vector<1x8xf32>
    %7 = vector.broadcast %6 : vector<1x8xf32> to vector<288x8xf32>
    %8 = arith.addf %5, %7 : vector<288x8xf32>
    %cst = arith.constant 0.000000e+00 : f32
    %9 = vector.broadcast %cst : f32 to vector<288x8xf32>
    %10 = arith.cmpf ogt, %8, %9 : vector<288x8xf32>
    %cst_7 = arith.constant 1.000000e-01 : f32
    %11 = vector.broadcast %cst_7 : f32 to vector<288x8xf32>
    %12 = arith.mulf %11, %8 : vector<288x8xf32>
    %13 = arith.select %10, %8, %12 : vector<288x8xi1>, vector<288x8xf32>
    %c0_8 = arith.constant 0 : index
    %c0_9 = arith.constant 0 : index
    %c0_10 = arith.constant 0 : index
    %c0_11 = arith.constant 0 : index
    %14 = vector.load %arg5[%c0_8, %c0_9, %c0_10, %c0_11] : memref<1x1x288x8xf32, #tpu.memory_space<vmem>>, vector<1x1x288x8xf32>
    %15 = vector.shape_cast %14 : vector<1x1x288x8xf32> to vector<288x8xf32>
    %16 = vector.shape_cast %13 : vector<288x8xf32> to vector<1x1x288x8xf32>
    tpu.vector_store %arg5[%c0_8, %c0_9, %c0_10, %c0_11], %16 {strides = array<i32>} : memref<1x1x288x8xf32, #tpu.memory_space<vmem>>, vector<1x1x288x8xf32>,
    return
  }
  func.func @transform_0(%arg0: i32, %arg1: i32) -> (i32, i32, i32, i32) {
    %c0_i32 = arith.constant 0 : i32
    %c0_i32_0 = arith.constant 0 : i32
    %c0_i32_1 = arith.constant 0 : i32
    return %arg0, %arg1, %c0_i32, %c0_i32_0 : i32, i32, i32, i32
  }
  func.func @transform_1(%arg0: i32, %arg1: i32) -> (i32, i32) {
    %c0_i32 = arith.constant 0 : i32
    %c0_i32_0 = arith.constant 0 : i32
    %c0_i32_1 = arith.constant 0 : i32
    return %c0_i32, %c0_i32_0 : i32, i32
  }
  func.func @transform_2(%arg0: i32, %arg1: i32) -> (i32, i32) {
    %c0_i32 = arith.constant 0 : i32
    %c0_i32_0 = arith.constant 0 : i32
    %c0_i32_1 = arith.constant 0 : i32
    return %c0_i32, %c0_i32_0 : i32, i32
  }
  func.func @transform_3(%arg0: i32, %arg1: i32) -> (i32, i32, i32, i32) {
    %c0_i32 = arith.constant 0 : i32
    %c0_i32_0 = arith.constant 0 : i32
    %c0_i32_1 = arith.constant 0 : i32
    return %arg0, %arg1, %c0_i32, %c0_i32_0 : i32, i32, i32, i32
  }
}

</mosaic_0001>

<llo_original>
// kernel: conv_bn_relu.3
$region0: #{conv_bn_relu.3}
  #allocation0 [shape = 'u32[]', space=smem, size = 0x4, offset = 0x4, fixed_abs, tag = 'smem constant byte address 0x4 - core index']
  #allocation1 [shape = 'u32[72,128]{1,0:T(1,128)}', space=vmem, size = 0x9000, scoped, tag = 'internal scratch']
  %s0 = inlined_call_operand.vmem [shape: bf16[2,1,288,8], index: 0, kind: input, shape index: {}]
  %s1 = inlined_call_operand.vmem [shape: f32[1,8], index: 1, kind: input, shape index: {}]
  %s2 = inlined_call_operand.vmem [shape: f32[1,8], index: 2, kind: input, shape index: {}]
  %s3 = inlined_call_operand.vmem [shape: f32[2,1,288,8], index: 3, kind: output, shape index: {}]
  %s4 = sld [smem:[#allocation0]]
  $region45: #{conv_bn_relu.3} parent=0
    _
  %s6 = ssub.s32 1, %s4
  %s7 = scalar_select 0, %s6, %s4
  loop: start=0, step=1, limit=4
  $region2: #{conv_bn_relu.3} parent=0 // loop_pre_header
    _
  $region3: #{conv_bn_relu.3} parent=0 // loop_header
    %s9 = sphi 0, %s13
    %p10 = scmp.ge.s32.totalorder %s9, 4
    %s16 = sphi 0, %s28
    %s17 = sphi 0, %s24
    %s18 = sphi 0, %s16
    %s19 = sphi 0, %s17
    %s20 = sphi 0, %s18
    %s21 = sphi 0, %s19
    %s33 = sphi 0, %s35
    %s36 = sphi 0, %s33
    %s37 = sphi 0, %s36
    %s53 = sphi 0, %s37
    %s57 = sphi 0, %s57
    %s59 = sphi 0, %s57
    %s60 = sphi 0, %s59
    %s74 = sphi 0, %s60
    %s78 = sphi 0, %s78
    %s80 = sphi 0, %s78
    %s81 = sphi 0, %s80
    %s95 = sphi 0, %s81
    %s103 = sphi 0, %s105
    %s106 = sphi 0, %s103
    %s107 = sphi 0, %s106
    %s123 = sphi 0, %s107
  $region4: #{conv_bn_relu.3} parent=0 // loop_header_branch
    %12 = sbr.rel (%p10) target = $region8
  $region5: #{conv_bn_relu.3} parent=0 // loop_body
    %s14 = ssub.s32 %s9, 1
    %s15 = ssub.s32 %s9, 2
    %s22 = sadd.s32 1, %s17
    %p23 = scmp.ge.s32.totalorder %s22, 1
    %s24 = scalar_select %p23, 0, %s22
    %s25 = sadd.s32 1, %s16
    %s26 = scalar_select %p23, %s25, %s16
    %p27 = scmp.ge.s32.totalorder %s26, 2
    %s28 = scalar_select %p27, 0, %s26
    %s29 = ssub.s32 %s16, %s28
    %s30 = ssub.s32 %s17, %s24
    %s31 = sor.u32 %s29, %s30
    %p32 = scmp.eq.s32.totalorder %s31, 0
    %s34 = sadd.s32 %s33, 1
    %s35 = scalar_select %p32, %s33, %s34
    %p38 = pneg %p32
    %p39 = scmp.eq.s32.totalorder %s9, 1
    %p40 = por %p38, %p39
    %p41 = scmp.ne.s32.totalorder %s33, %s36
    %p42 = scmp.eq.s32.totalorder %s9, 0
    %p43 = por %p41, %p42
    %p44 = scmp.ne.s32.totalorder %s33, %s36
    %p45 = scmp.eq.s32.totalorder %s14, 1
    %p46 = por %p44, %p45
    %p47 = scmp.ne.s32.totalorder %s36, %s37
    %p48 = scmp.eq.s32.totalorder %s14, 0
    %p49 = por %p47, %p48
    %p50 = scmp.ne.s32.totalorder %s36, %s37
    %p51 = scmp.eq.s32.totalorder %s15, 1
    %p52 = por %p50, %p51
    %p54 = scmp.ne.s32.totalorder %s37, %s53
    %p55 = scmp.eq.s32.totalorder %s15, 0
    %p56 = por %p54, %p55
    %s58 = sadd.s32 %s57, 1
    %p61 = scmp.eq.s32.totalorder %s9, 1
    %p62 = scmp.ne.s32.totalorder %s57, %s59
    %p63 = scmp.eq.s32.totalorder %s9, 0
    %p64 = por %p62, %p63
    %p65 = scmp.ne.s32.totalorder %s57, %s59
    %p66 = scmp.eq.s32.totalorder %s14, 1
    %p67 = por %p65, %p66
    %p68 = scmp.ne.s32.totalorder %s59, %s60
    %p69 = scmp.eq.s32.totalorder %s14, 0
    %p70 = por %p68, %p69
    %p71 = scmp.ne.s32.totalorder %s59, %s60
    %p72 = scmp.eq.s32.totalorder %s15, 1
    %p73 = por %p71, %p72
    %p75 = scmp.ne.s32.totalorder %s60, %s74
    %p76 = scmp.eq.s32.totalorder %s15, 0
    %p77 = por %p75, %p76
    %s79 = sadd.s32 %s78, 1
    %p82 = scmp.eq.s32.totalorder %s9, 1
    %p83 = scmp.ne.s32.totalorder %s78, %s80
    %p84 = scmp.eq.s32.totalorder %s9, 0
    %p85 = por %p83, %p84
    %p86 = scmp.ne.s32.totalorder %s78, %s80
    %p87 = scmp.eq.s32.totalorder %s14, 1
    %p88 = por %p86, %p87
    %p89 = scmp.ne.s32.totalorder %s80, %s81
    %p90 = scmp.eq.s32.totalorder %s14, 0
    %p91 = por %p89, %p90
    %p92 = scmp.ne.s32.totalorder %s80, %s81
    %p93 = scmp.eq.s32.totalorder %s15, 1
    %p94 = por %p92, %p93
    %p96 = scmp.ne.s32.totalorder %s81, %s95
    %p97 = scmp.eq.s32.totalorder %s15, 0
    %p98 = por %p96, %p97
    %s99 = ssub.s32 %s16, %s28
    %s100 = ssub.s32 %s17, %s24
    %s101 = sor.u32 %s99, %s100
    %p102 = scmp.eq.s32.totalorder %s101, 0
    %s104 = sadd.s32 %s103, 1
    %s105 = scalar_select %p102, %s103, %s104
    %p108 = pneg %p102
    %p109 = scmp.eq.s32.totalorder %s9, 1
    %p110 = por %p108, %p109
    %p111 = scmp.ne.s32.totalorder %s103, %s106
    %p112 = scmp.eq.s32.totalorder %s9, 0
    %p113 = por %p111, %p112
    %p114 = scmp.ne.s32.totalorder %s103, %s106
    %p115 = scmp.eq.s32.totalorder %s14, 1
    %p116 = por %p114, %p115
    %p117 = scmp.ne.s32.totalorder %s106, %s107
    %p118 = scmp.eq.s32.totalorder %s14, 0
    %p119 = por %p117, %p118
    %p120 = scmp.ne.s32.totalorder %s106, %s107
    %p121 = scmp.eq.s32.totalorder %s15, 1
    %p122 = por %p120, %p121
    %p124 = scmp.ne.s32.totalorder %s107, %s123
    %p125 = scmp.eq.s32.totalorder %s15, 0
    %p126 = por %p124, %p125
    %p127 = scmp.le.s32.totalorder 1, %s9
    %p128 = scmp.lt.s32.totalorder %s9, 3
    %p129 = pnand %p127, %p128
    %p130 = pneg %p129
    // Predicated region
    $region9: #{conv_bn_relu.3} parent=5 // pred_check
      _
    $region10: #{conv_bn_relu.3} parent=5 // pred_check_branch
      %132 = sbr.rel (%p129) target = $region12
    $region11: #{conv_bn_relu.3} parent=5 // pred_region
      %s133 = ssub.s32 %s9, 1
      // Predicated region
      $region13: #{conv_bn_relu.3} parent=11 // pred_check
        %p134 = pneg %p70
      $region14: #{conv_bn_relu.3} parent=11 // pred_check_branch
        %136 = sbr.rel (%p134) target = $region16
      $region15: #{conv_bn_relu.3} parent=11 // pred_region
        _
      $region16: #{conv_bn_relu.3} parent=11 // pred_fallthru
        _
      // Predicated region
      $region17: #{conv_bn_relu.3} parent=11 // pred_check
        %p137 = pneg %p91
      $region18: #{conv_bn_relu.3} parent=11 // pred_check_branch
        %139 = sbr.rel (%p137) target = $region20
      $region19: #{conv_bn_relu.3} parent=11 // pred_region
        _
      $region20: #{conv_bn_relu.3} parent=11 // pred_fallthru
        _
    $region12: #{conv_bn_relu.3} parent=5 // pred_fallthru
      _
    %p140 = scmp.lt.s32.totalorder %s9, 2
    // Predicated region
    $region21: #{conv_bn_relu.3} parent=5 // pred_check
      %p141 = pneg %p140
    $region22: #{conv_bn_relu.3} parent=5 // pred_check_branch
      %143 = sbr.rel (%p141) target = $region24
    $region23: #{conv_bn_relu.3} parent=5 // pred_region
      // Predicated region
      $region25: #{conv_bn_relu.3} parent=23 // pred_check
        %p144 = pneg %p43
      $region26: #{conv_bn_relu.3} parent=23 // pred_check_branch
        %146 = sbr.rel (%p144) target = $region28
      $region27: #{conv_bn_relu.3} parent=23 // pred_region
        %p147 = scmp.lt.s32.totalorder %s16, 1
        %s148 = scalar_select %p147, %s16, 1
        %p149 = scmp.lt.s32.totalorder %s17, 0
        %s150 = scalar_select %p149, %s17, 0
        %s151 = smul.addr %s150, 36
        %s152 = smul.addr %s148, 36
        %s153 = sadd.s32 %s151, %s152
        %s154 = smul.addr %s153, 4
        %s155 = scalar_lea.vmem %s0, %s154
      $region28: #{conv_bn_relu.3} parent=23 // pred_fallthru
        _
    $region24: #{conv_bn_relu.3} parent=5 // pred_fallthru
      _
    %p156 = scmp.le.s32.totalorder 1, %s9
    %p157 = scmp.lt.s32.totalorder %s9, 3
    %p158 = pnand %p156, %p157
    %p159 = pneg %p158
    // Predicated region
    $region29: #{conv_bn_relu.3} parent=5 // pred_check
      _
    $region30: #{conv_bn_relu.3} parent=5 // pred_check_branch
      %161 = sbr.rel (%p158) target = $region32
    $region31: #{conv_bn_relu.3} parent=5 // pred_region
      %s162 = ssub.s32 %s9, 1
      %p163 = scmp.lt.s32.totalorder %s18, 1
      %s164 = scalar_select %p163, %s18, 1
      %p165 = scmp.lt.s32.totalorder %s19, 0
      %s166 = scalar_select %p165, %s19, 0
      %s167 = smul.addr %s166, 36
      %s168 = smul.addr %s164, 36
      %s169 = sadd.s32 %s167, %s168
      %s170 = smul.addr %s169, 4
      %s171 = scalar_lea.vmem %s0, %s170
      %p172 = pneg %p49
      %p173 = pneg %p46
      %p174 = pneg %p70
      %p175 = pneg %p67
      %p176 = pneg %p91
      %p177 = pneg %p88
      %p178 = pneg %p119
      %p179 = pneg %p116
      %p180 = scmp.lt.s32.totalorder %s18, 1
      %s181 = scalar_select %p180, %s18, 1
      %p182 = scmp.lt.s32.totalorder %s19, 0
      %s183 = scalar_select %p182, %s19, 0
      %s184 = smul.addr %s183, 36
      %s185 = smul.addr %s181, 36
      %s186 = sadd.s32 %s184, %s185
      %s187 = smul.addr %s186, 8
      %s188 = scalar_lea.vmem %s3, %s187
      %p189 = scmp.lt.s32.totalorder %s18, 1
      %s190 = scalar_select %p189, %s18, 1
      %p191 = scmp.lt.s32.totalorder %s19, 0
      %s192 = scalar_select %p191, %s19, 0
      %s193 = smul.addr %s192, 36
      %s194 = smul.addr %s190, 36
      %s195 = sadd.s32 %s193, %s194
      %s196 = smul.addr %s195, 4
      %s197 = scalar_lea.vmem %s0, %s196
      %p198 = scmp.lt.s32.totalorder %s18, 1
      %s199 = scalar_select %p198, %s18, 1
      %p200 = scmp.lt.s32.totalorder %s19, 0
      %s201 = scalar_select %p200, %s19, 0
      %s202 = smul.addr %s201, 36
      %s203 = smul.addr %s199, 36
      %s204 = sadd.s32 %s202, %s203
      %s205 = smul.addr %s204, 8
      %s206 = scalar_lea.vmem %s3, %s205
      %v207 = vld [vmem:[%s197] sm:$0xf]
      %v208 = vld [vmem:[%s197 + $0x4] sm:$0xf]
      %v209 = vld [vmem:[%s197 + $0x8] sm:$0xf]
      %v210 = vld [vmem:[%s197 + $0xc] sm:$0xf]
      %v211 = vld [vmem:[%s197 + $0x10] sm:$0xf]
      %v212 = vld [vmem:[%s197 + $0x14] sm:$0xf]
      %v213 = vld [vmem:[%s197 + $0x18] sm:$0xf]
      %v214 = vld [vmem:[%s197 + $0x1c] sm:$0xf]
      %v215 = vld [vmem:[%s197 + $0x20] sm:$0xf]
      %v216 = vld [vmem:[%s197 + $0x24] sm:$0xf]
      %v217 = vld [vmem:[%s197 + $0x28] sm:$0xf]
      %v218 = vld [vmem:[%s197 + $0x2c] sm:$0xf]
      %v219 = vld [vmem:[%s197 + $0x30] sm:$0xf]
      %v220 = vld [vmem:[%s197 + $0x34] sm:$0xf]
      %v221 = vld [vmem:[%s197 + $0x38] sm:$0xf]
      %v222 = vld [vmem:[%s197 + $0x3c] sm:$0xf]
      %v223 = vld [vmem:[%s197 + $0x40] sm:$0xf]
      %v224 = vld [vmem:[%s197 + $0x44] sm:$0xf]
      %v225 = vld [vmem:[%s197 + $0x48] sm:$0xf]
      %v226 = vld [vmem:[%s197 + $0x4c] sm:$0xf]
      %v227 = vld [vmem:[%s197 + $0x50] sm:$0xf]
      %v228 = vld [vmem:[%s197 + $0x54] sm:$0xf]
      %v229 = vld [vmem:[%s197 + $0x58] sm:$0xf]
      %v230 = vld [vmem:[%s197 + $0x5c] sm:$0xf]
      %v231 = vld [vmem:[%s197 + $0x60] sm:$0xf]
      %v232 = vld [vmem:[%s197 + $0x64] sm:$0xf]
      %v233 = vld [vmem:[%s197 + $0x68] sm:$0xf]
      %v234 = vld [vmem:[%s197 + $0x6c] sm:$0xf]
      %v235 = vld [vmem:[%s197 + $0x70] sm:$0xf]
      %v236 = vld [vmem:[%s197 + $0x74] sm:$0xf]
      %v237 = vld [vmem:[%s197 + $0x78] sm:$0xf]
      %v238 = vld [vmem:[%s197 + $0x7c] sm:$0xf]
      %v239 = vld [vmem:[%s197 + $0x80] sm:$0xf]
      %v240 = vld [vmem:[%s197 + $0x84] sm:$0xf]
      %v241 = vld [vmem:[%s197 + $0x88] sm:$0xf]
      %v242 = vld [vmem:[%s197 + $0x8c] sm:$0xf]
      %v243 = vunpack.c.l.bf16 %v207
      %v244 = vunpack.c.l.bf16 %v208
      %v245 = vunpack.c.l.bf16 %v209
      %v246 = vunpack.c.l.bf16 %v210
      %v247 = vunpack.c.l.bf16 %v211
      %v248 = vunpack.c.l.bf16 %v212
      %v249 = vunpack.c.l.bf16 %v213
      %v250 = vunpack.c.l.bf16 %v214
      %v251 = vunpack.c.l.bf16 %v215
      %v252 = vunpack.c.l.bf16 %v216
      %v253 = vunpack.c.l.bf16 %v217
      %v254 = vunpack.c.l.bf16 %v218
      %v255 = vunpack.c.l.bf16 %v219
      %v256 = vunpack.c.l.bf16 %v220
      %v257 = vunpack.c.l.bf16 %v221
      %v258 = vunpack.c.l.bf16 %v222
      %v259 = vunpack.c.l.bf16 %v223
      %v260 = vunpack.c.l.bf16 %v224
      %v261 = vunpack.c.l.bf16 %v225
      %v262 = vunpack.c.l.bf16 %v226
      %v263 = vunpack.c.l.bf16 %v227
      %v264 = vunpack.c.l.bf16 %v228
      %v265 = vunpack.c.l.bf16 %v229
      %v266 = vunpack.c.l.bf16 %v230
      %v267 = vunpack.c.l.bf16 %v231
      %v268 = vunpack.c.l.bf16 %v232
      %v269 = vunpack.c.l.bf16 %v233
      %v270 = vunpack.c.l.bf16 %v234
      %v271 = vunpack.c.l.bf16 %v235
      %v272 = vunpack.c.l.bf16 %v236
      %v273 = vunpack.c.l.bf16 %v237
      %v274 = vunpack.c.l.bf16 %v238
      %v275 = vunpack.c.l.bf16 %v239
      %v276 = vunpack.c.l.bf16 %v240
      %v277 = vunpack.c.l.bf16 %v241
      %v278 = vunpack.c.l.bf16 %v242
      %v279 = vld [vmem:[%s1] sm:$0x1]
      %v281 = vperm.slane %v279, 0
      %v283 = vmul.f32 %v243, %v281
      %v284 = vmul.f32 %v244, %v281
      %v285 = vmul.f32 %v245, %v281
      %v286 = vmul.f32 %v246, %v281
      %v287 = vmul.f32 %v247, %v281
      %v288 = vmul.f32 %v248, %v281
      %v289 = vmul.f32 %v249, %v281
      %v290 = vmul.f32 %v250, %v281
      %v291 = vmul.f32 %v251, %v281
      %v292 = vmul.f32 %v252, %v281
      %v293 = vmul.f32 %v253, %v281
      %v294 = vmul.f32 %v254, %v281
      %v295 = vmul.f32 %v255, %v281
      %v296 = vmul.f32 %v256, %v281
      %v297 = vmul.f32 %v257, %v281
      %v298 = vmul.f32 %v258, %v281
      %v299 = vmul.f32 %v259, %v281
      %v300 = vmul.f32 %v260, %v281
      %v301 = vmul.f32 %v261, %v281
      %v302 = vmul.f32 %v262, %v281
      %v303 = vmul.f32 %v263, %v281
      %v304 = vmul.f32 %v264, %v281
      %v305 = vmul.f32 %v265, %v281
      %v306 = vmul.f32 %v266, %v281
      %v307 = vmul.f32 %v267, %v281
      %v308 = vmul.f32 %v268, %v281
      %v309 = vmul.f32 %v269, %v281
      %v310 = vmul.f32 %v270, %v281
      %v311 = vmul.f32 %v271, %v281
      %v312 = vmul.f32 %v272, %v281
      %v313 = vmul.f32 %v273, %v281
      %v314 = vmul.f32 %v274, %v281
      %v315 = vmul.f32 %v275, %v281
      %v316 = vmul.f32 %v276, %v281
      %v317 = vmul.f32 %v277, %v281
      %v318 = vmul.f32 %v278, %v281
      %v319 = vld [vmem:[%s2] sm:$0x1]
      %v321 = vperm.slane %v319, 0
      %v323 = vadd.f32 %v283, %v321
      %v324 = vadd.f32 %v284, %v321
      %v325 = vadd.f32 %v285, %v321
      %v326 = vadd.f32 %v286, %v321
      %v327 = vadd.f32 %v287, %v321
      %v328 = vadd.f32 %v288, %v321
      %v329 = vadd.f32 %v289, %v321
      %v330 = vadd.f32 %v290, %v321
      %v331 = vadd.f32 %v291, %v321
      %v332 = vadd.f32 %v292, %v321
      %v333 = vadd.f32 %v293, %v321
      %v334 = vadd.f32 %v294, %v321
      %v335 = vadd.f32 %v295, %v321
      %v336 = vadd.f32 %v296, %v321
      %v337 = vadd.f32 %v297, %v321
      %v338 = vadd.f32 %v298, %v321
      %v339 = vadd.f32 %v299, %v321
      %v340 = vadd.f32 %v300, %v321
      %v341 = vadd.f32 %v301, %v321
      %v342 = vadd.f32 %v302, %v321
      %v343 = vadd.f32 %v303, %v321
      %v344 = vadd.f32 %v304, %v321
      %v345 = vadd.f32 %v305, %v321
      %v346 = vadd.f32 %v306, %v321
      %v347 = vadd.f32 %v307, %v321
      %v348 = vadd.f32 %v308, %v321
      %v349 = vadd.f32 %v309, %v321
      %v350 = vadd.f32 %v310, %v321
      %v351 = vadd.f32 %v311, %v321
      %v352 = vadd.f32 %v312, %v321
      %v353 = vadd.f32 %v313, %v321
      %v354 = vadd.f32 %v314, %v321
      %v355 = vadd.f32 %v315, %v321
      %v356 = vadd.f32 %v316, %v321
      %v357 = vadd.f32 %v317, %v321
      %v358 = vadd.f32 %v318, %v321
      %vm359 = vcmp.gt.f32.partialorder %v323, 0.0
      %vm360 = vcmp.gt.f32.partialorder %v324, 0.0
      %vm361 = vcmp.gt.f32.partialorder %v325, 0.0
      %vm362 = vcmp.gt.f32.partialorder %v326, 0.0
      %vm363 = vcmp.gt.f32.partialorder %v327, 0.0
      %vm364 = vcmp.gt.f32.partialorder %v328, 0.0
      %vm365 = vcmp.gt.f32.partialorder %v329, 0.0
      %vm366 = vcmp.gt.f32.partialorder %v330, 0.0
      %vm367 = vcmp.gt.f32.partialorder %v331, 0.0
      %vm368 = vcmp.gt.f32.partialorder %v332, 0.0
      %vm369 = vcmp.gt.f32.partialorder %v333, 0.0
      %vm370 = vcmp.gt.f32.partialorder %v334, 0.0
      %vm371 = vcmp.gt.f32.partialorder %v335, 0.0
      %vm372 = vcmp.gt.f32.partialorder %v336, 0.0
      %vm373 = vcmp.gt.f32.partialorder %v337, 0.0
      %vm374 = vcmp.gt.f32.partialorder %v338, 0.0
      %vm375 = vcmp.gt.f32.partialorder %v339, 0.0
      %vm376 = vcmp.gt.f32.partialorder %v340, 0.0
      %vm377 = vcmp.gt.f32.partialorder %v341, 0.0
      %vm378 = vcmp.gt.f32.partialorder %v342, 0.0
      %vm379 = vcmp.gt.f32.partialorder %v343, 0.0
      %vm380 = vcmp.gt.f32.partialorder %v344, 0.0
      %vm381 = vcmp.gt.f32.partialorder %v345, 0.0
      %vm382 = vcmp.gt.f32.partialorder %v346, 0.0
      %vm383 = vcmp.gt.f32.partialorder %v347, 0.0
      %vm384 = vcmp.gt.f32.partialorder %v348, 0.0
      %vm385 = vcmp.gt.f32.partialorder %v349, 0.0
      %vm386 = vcmp.gt.f32.partialorder %v350, 0.0
      %vm387 = vcmp.gt.f32.partialorder %v351, 0.0
      %vm388 = vcmp.gt.f32.partialorder %v352, 0.0
      %vm389 = vcmp.gt.f32.partialorder %v353, 0.0
      %vm390 = vcmp.gt.f32.partialorder %v354, 0.0
      %vm391 = vcmp.gt.f32.partialorder %v355, 0.0
      %vm392 = vcmp.gt.f32.partialorder %v356, 0.0
      %vm393 = vcmp.gt.f32.partialorder %v357, 0.0
      %vm394 = vcmp.gt.f32.partialorder %v358, 0.0
      %v395 = vmul.f32 %v323, 0.1
      %v396 = vmul.f32 %v324, 0.1
      %v397 = vmul.f32 %v325, 0.1
      %v398 = vmul.f32 %v326, 0.1
      %v399 = vmul.f32 %v327, 0.1
      %v400 = vmul.f32 %v328, 0.1
      %v401 = vmul.f32 %v329, 0.1
      %v402 = vmul.f32 %v330, 0.1
      %v403 = vmul.f32 %v331, 0.1
      %v404 = vmul.f32 %v332, 0.1
      %v405 = vmul.f32 %v333, 0.1
      %v406 = vmul.f32 %v334, 0.1
      %v407 = vmul.f32 %v335, 0.1
      %v408 = vmul.f32 %v336, 0.1
      %v409 = vmul.f32 %v337, 0.1
      %v410 = vmul.f32 %v338, 0.1
      %v411 = vmul.f32 %v339, 0.1
      %v412 = vmul.f32 %v340, 0.1
      %v413 = vmul.f32 %v341, 0.1
      %v414 = vmul.f32 %v342, 0.1
      %v415 = vmul.f32 %v343, 0.1
      %v416 = vmul.f32 %v344, 0.1
      %v417 = vmul.f32 %v345, 0.1
      %v418 = vmul.f32 %v346, 0.1
      %v419 = vmul.f32 %v347, 0.1
      %v420 = vmul.f32 %v348, 0.1
      %v421 = vmul.f32 %v349, 0.1
      %v422 = vmul.f32 %v350, 0.1
      %v423 = vmul.f32 %v351, 0.1
      %v424 = vmul.f32 %v352, 0.1
      %v425 = vmul.f32 %v353, 0.1
      %v426 = vmul.f32 %v354, 0.1
      %v427 = vmul.f32 %v355, 0.1
      %v428 = vmul.f32 %v356, 0.1
      %v429 = vmul.f32 %v357, 0.1
      %v430 = vmul.f32 %v358, 0.1
      %v431 = vsel %vm359, %v323, %v395
      %v432 = vsel %vm360, %v324, %v396
      %v433 = vsel %vm361, %v325, %v397
      %v434 = vsel %vm362, %v326, %v398
      %v435 = vsel %vm363, %v327, %v399
      %v436 = vsel %vm364, %v328, %v400
      %v437 = vsel %vm365, %v329, %v401
      %v438 = vsel %vm366, %v330, %v402
      %v439 = vsel %vm367, %v331, %v403
      %v440 = vsel %vm368, %v332, %v404
      %v441 = vsel %vm369, %v333, %v405
      %v442 = vsel %vm370, %v334, %v406
      %v443 = vsel %vm371, %v335, %v407
      %v444 = vsel %vm372, %v336, %v408
      %v445 = vsel %vm373, %v337, %v409
      %v446 = vsel %vm374, %v338, %v410
      %v447 = vsel %vm375, %v339, %v411
      %v448 = vsel %vm376, %v340, %v412
      %v449 = vsel %vm377, %v341, %v413
      %v450 = vsel %vm378, %v342, %v414
      %v451 = vsel %vm379, %v343, %v415
      %v452 = vsel %vm380, %v344, %v416
      %v453 = vsel %vm381, %v345, %v417
      %v454 = vsel %vm382, %v346, %v418
      %v455 = vsel %vm383, %v347, %v419
      %v456 = vsel %vm384, %v348, %v420
      %v457 = vsel %vm385, %v349, %v421
      %v458 = vsel %vm386, %v350, %v422
      %v459 = vsel %vm387, %v351, %v423
      %v460 = vsel %vm388, %v352, %v424
      %v461 = vsel %vm389, %v353, %v425
      %v462 = vsel %vm390, %v354, %v426
      %v463 = vsel %vm391, %v355, %v427
      %v464 = vsel %vm392, %v356, %v428
      %v465 = vsel %vm393, %v357, %v429
      %v466 = vsel %vm394, %v358, %v430
      %vm467 = vcmask 64512
      %468 = vst.msk [vmem:[%s206] sm:$0xff] %vm467, %v431
      %469 = vst.msk [vmem:[%s206 + $0x8] sm:$0xff] %vm467, %v432
      %470 = vst.msk [vmem:[%s206 + $0x10] sm:$0xff] %vm467, %v433
      %471 = vst.msk [vmem:[%s206 + $0x18] sm:$0xff] %vm467, %v434
      %472 = vst.msk [vmem:[%s206 + $0x20] sm:$0xff] %vm467, %v435
      %473 = vst.msk [vmem:[%s206 + $0x28] sm:$0xff] %vm467, %v436
      %474 = vst.msk [vmem:[%s206 + $0x30] sm:$0xff] %vm467, %v437
      %475 = vst.msk [vmem:[%s206 + $0x38] sm:$0xff] %vm467, %v438
      %476 = vst.msk [vmem:[%s206 + $0x40] sm:$0xff] %vm467, %v439
      %477 = vst.msk [vmem:[%s206 + $0x48] sm:$0xff] %vm467, %v440
      %478 = vst.msk [vmem:[%s206 + $0x50] sm:$0xff] %vm467, %v441
      %479 = vst.msk [vmem:[%s206 + $0x58] sm:$0xff] %vm467, %v442
      %480 = vst.msk [vmem:[%s206 + $0x60] sm:$0xff] %vm467, %v443
      %481 = vst.msk [vmem:[%s206 + $0x68] sm:$0xff] %vm467, %v444
      %482 = vst.msk [vmem:[%s206 + $0x70] sm:$0xff] %vm467, %v445
      %483 = vst.msk [vmem:[%s206 + $0x78] sm:$0xff] %vm467, %v446
      %484 = vst.msk [vmem:[%s206 + $0x80] sm:$0xff] %vm467, %v447
      %485 = vst.msk [vmem:[%s206 + $0x88] sm:$0xff] %vm467, %v448
      %486 = vst.msk [vmem:[%s206 + $0x90] sm:$0xff] %vm467, %v449
      %487 = vst.msk [vmem:[%s206 + $0x98] sm:$0xff] %vm467, %v450
      %488 = vst.msk [vmem:[%s206 + $0xa0] sm:$0xff] %vm467, %v451
      %489 = vst.msk [vmem:[%s206 + $0xa8] sm:$0xff] %vm467, %v452
      %490 = vst.msk [vmem:[%s206 + $0xb0] sm:$0xff] %vm467, %v453
      %491 = vst.msk [vmem:[%s206 + $0xb8] sm:$0xff] %vm467, %v454
      %492 = vst.msk [vmem:[%s206 + $0xc0] sm:$0xff] %vm467, %v455
      %493 = vst.msk [vmem:[%s206 + $0xc8] sm:$0xff] %vm467, %v456
      %494 = vst.msk [vmem:[%s206 + $0xd0] sm:$0xff] %vm467, %v457
      %495 = vst.msk [vmem:[%s206 + $0xd8] sm:$0xff] %vm467, %v458
      %496 = vst.msk [vmem:[%s206 + $0xe0] sm:$0xff] %vm467, %v459
      %497 = vst.msk [vmem:[%s206 + $0xe8] sm:$0xff] %vm467, %v460
      %498 = vst.msk [vmem:[%s206 + $0xf0] sm:$0xff] %vm467, %v461
      %499 = vst.msk [vmem:[%s206 + $0xf8] sm:$0xff] %vm467, %v462
      %500 = vst.msk [vmem:[%s206 + $0x100] sm:$0xff] %vm467, %v463
      %501 = vst.msk [vmem:[%s206 + $0x108] sm:$0xff] %vm467, %v464
      %502 = vst.msk [vmem:[%s206 + $0x110] sm:$0xff] %vm467, %v465
      %503 = vst.msk [vmem:[%s206 + $0x118] sm:$0xff] %vm467, %v466
      %p504 = scmp.lt.s32.totalorder %s18, 1
      %s505 = scalar_select %p504, %s18, 1
      %p506 = scmp.lt.s32.totalorder %s19, 0
      %s507 = scalar_select %p506, %s19, 0
      %s508 = smul.addr %s507, 36
      %s509 = smul.addr %s505, 36
      %s510 = sadd.s32 %s508, %s509
      %s511 = smul.addr %s510, 8
      %s512 = scalar_lea.vmem %s3, %s511
      // Predicated region
      $region33: #{conv_bn_relu.3} parent=31 // pred_check
        %p513 = pneg %p116
      $region34: #{conv_bn_relu.3} parent=31 // pred_check_branch
        %515 = sbr.rel (%p513) target = $region36
      $region35: #{conv_bn_relu.3} parent=31 // pred_region
        _
      $region36: #{conv_bn_relu.3} parent=31 // pred_fallthru
        _
    $region32: #{conv_bn_relu.3} parent=5 // pred_fallthru
      _
    %p516 = scmp.le.s32.totalorder 2, %s9
    // Predicated region
    $region37: #{conv_bn_relu.3} parent=5 // pred_check
      %p517 = pneg %p516
    $region38: #{conv_bn_relu.3} parent=5 // pred_check_branch
      %519 = sbr.rel (%p517) target = $region40
    $region39: #{conv_bn_relu.3} parent=5 // pred_region
      %s520 = ssub.s32 %s9, 2
      // Predicated region
      $region41: #{conv_bn_relu.3} parent=39 // pred_check
        %p521 = pneg %p122
      $region42: #{conv_bn_relu.3} parent=39 // pred_check_branch
        %523 = sbr.rel (%p521) target = $region44
      $region43: #{conv_bn_relu.3} parent=39 // pred_region
        %p524 = scmp.lt.s32.totalorder %s20, 1
        %s525 = scalar_select %p524, %s20, 1
        %p526 = scmp.lt.s32.totalorder %s21, 0
        %s527 = scalar_select %p526, %s21, 0
        %s528 = smul.addr %s527, 36
        %s529 = smul.addr %s525, 36
        %s530 = sadd.s32 %s528, %s529
        %s531 = smul.addr %s530, 8
        %s532 = scalar_lea.vmem %s3, %s531
      $region44: #{conv_bn_relu.3} parent=39 // pred_fallthru
        _
    $region40: #{conv_bn_relu.3} parent=5 // pred_fallthru
      _
  $region6: #{conv_bn_relu.3} parent=0 // loop_footer
    %s13 = sadd.s32 1, %s9
  $region7: #{conv_bn_relu.3} parent=0 // loop_footer_branch
    %8 = sbr.rel target = $region3
  $region8: #{conv_bn_relu.3} parent=0 // loop_exit
    _

// kernel: conv_bn_relu.2
$region0: #{conv_bn_relu.2}
  #allocation0 [shape = 'u32[]', space=smem, size = 0x4, offset = 0x4, fixed_abs, tag = 'smem constant byte address 0x4 - core index']
  #allocation1 [shape = 'u32[72,128]{1,0:T(1,128)}', space=vmem, size = 0x9000, scoped, tag = 'internal scratch']
  %s0 = inlined_call_operand.vmem [shape: bf16[2,1,328,4], index: 0, kind: input, shape index: {}]
  %s1 = inlined_call_operand.vmem [shape: bf16[36,8], index: 1, kind: input, shape index: {}]
  %s2 = inlined_call_operand.vmem [shape: bf16[2,1,288,8], index: 2, kind: output, shape index: {0}]
  %s3 = inlined_call_operand.vmem [shape: f32[2,1,2,8], index: 3, kind: output, shape index: {1}]
  %4 = xla_tuple %s2, %s3
  %s5 = sld [smem:[#allocation0]]
  $region49: #{conv_bn_relu.2} parent=0
    _
  %s7 = ssub.s32 1, %s5
  %s8 = scalar_select 0, %s7, %s5
  loop: start=0, step=1, limit=4
  $region2: #{conv_bn_relu.2} parent=0 // loop_pre_header
    _
  $region3: #{conv_bn_relu.2} parent=0 // loop_header
    %s10 = sphi 0, %s14
    %p11 = scmp.ge.s32.totalorder %s10, 4
    %s17 = sphi 0, %s29
    %s18 = sphi 0, %s25
    %s19 = sphi 0, %s17
    %s20 = sphi 0, %s18
    %s21 = sphi 0, %s19
    %s22 = sphi 0, %s20
    %s34 = sphi 0, %s36
    %s37 = sphi 0, %s34
    %s38 = sphi 0, %s37
    %s54 = sphi 0, %s38
    %s58 = sphi 0, %s58
    %s60 = sphi 0, %s58
    %s61 = sphi 0, %s60
    %s75 = sphi 0, %s61
    %s83 = sphi 0, %s85
    %s86 = sphi 0, %s83
    %s87 = sphi 0, %s86
    %s103 = sphi 0, %s87
    %s111 = sphi 0, %s113
    %s114 = sphi 0, %s111
    %s115 = sphi 0, %s114
    %s131 = sphi 0, %s115
  $region4: #{conv_bn_relu.2} parent=0 // loop_header_branch
    %13 = sbr.rel (%p11) target = $region8
  $region5: #{conv_bn_relu.2} parent=0 // loop_body
    %s15 = ssub.s32 %s10, 1
    %s16 = ssub.s32 %s10, 2
    %s23 = sadd.s32 1, %s18
    %p24 = scmp.ge.s32.totalorder %s23, 1
    %s25 = scalar_select %p24, 0, %s23
    %s26 = sadd.s32 1, %s17
    %s27 = scalar_select %p24, %s26, %s17
    %p28 = scmp.ge.s32.totalorder %s27, 2
    %s29 = scalar_select %p28, 0, %s27
    %s30 = ssub.s32 %s17, %s29
    %s31 = ssub.s32 %s18, %s25
    %s32 = sor.u32 %s30, %s31
    %p33 = scmp.eq.s32.totalorder %s32, 0
    %s35 = sadd.s32 %s34, 1
    %s36 = scalar_select %p33, %s34, %s35
    %p39 = pneg %p33
    %p40 = scmp.eq.s32.totalorder %s10, 1
    %p41 = por %p39, %p40
    %p42 = scmp.ne.s32.totalorder %s34, %s37
    %p43 = scmp.eq.s32.totalorder %s10, 0
    %p44 = por %p42, %p43
    %p45 = scmp.ne.s32.totalorder %s34, %s37
    %p46 = scmp.eq.s32.totalorder %s15, 1
    %p47 = por %p45, %p46
    %p48 = scmp.ne.s32.totalorder %s37, %s38
    %p49 = scmp.eq.s32.totalorder %s15, 0
    %p50 = por %p48, %p49
    %p51 = scmp.ne.s32.totalorder %s37, %s38
    %p52 = scmp.eq.s32.totalorder %s16, 1
    %p53 = por %p51, %p52
    %p55 = scmp.ne.s32.totalorder %s38, %s54
    %p56 = scmp.eq.s32.totalorder %s16, 0
    %p57 = por %p55, %p56
    %s59 = sadd.s32 %s58, 1
    %p62 = scmp.eq.s32.totalorder %s10, 1
    %p63 = scmp.ne.s32.totalorder %s58, %s60
    %p64 = scmp.eq.s32.totalorder %s10, 0
    %p65 = por %p63, %p64
    %p66 = scmp.ne.s32.totalorder %s58, %s60
    %p67 = scmp.eq.s32.totalorder %s15, 1
    %p68 = por %p66, %p67
    %p69 = scmp.ne.s32.totalorder %s60, %s61
    %p70 = scmp.eq.s32.totalorder %s15, 0
    %p71 = por %p69, %p70
    %p72 = scmp.ne.s32.totalorder %s60, %s61
    %p73 = scmp.eq.s32.totalorder %s16, 1
    %p74 = por %p72, %p73
    %p76 = scmp.ne.s32.totalorder %s61, %s75
    %p77 = scmp.eq.s32.totalorder %s16, 0
    %p78 = por %p76, %p77
    %s79 = ssub.s32 %s17, %s29
    %s80 = ssub.s32 %s18, %s25
    %s81 = sor.u32 %s79, %s80
    %p82 = scmp.eq.s32.totalorder %s81, 0
    %s84 = sadd.s32 %s83, 1
    %s85 = scalar_select %p82, %s83, %s84
    %p88 = pneg %p82
    %p89 = scmp.eq.s32.totalorder %s10, 1
    %p90 = por %p88, %p89
    %p91 = scmp.ne.s32.totalorder %s83, %s86
    %p92 = scmp.eq.s32.totalorder %s10, 0
    %p93 = por %p91, %p92
    %p94 = scmp.ne.s32.totalorder %s83, %s86
    %p95 = scmp.eq.s32.totalorder %s15, 1
    %p96 = por %p94, %p95
    %p97 = scmp.ne.s32.totalorder %s86, %s87
    %p98 = scmp.eq.s32.totalorder %s15, 0
    %p99 = por %p97, %p98
    %p100 = scmp.ne.s32.totalorder %s86, %s87
    %p101 = scmp.eq.s32.totalorder %s16, 1
    %p102 = por %p100, %p101
    %p104 = scmp.ne.s32.totalorder %s87, %s103
    %p105 = scmp.eq.s32.totalorder %s16, 0
    %p106 = por %p104, %p105
    %s107 = ssub.s32 %s17, %s29
    %s108 = ssub.s32 %s18, %s25
    %s109 = sor.u32 %s107, %s108
    %p110 = scmp.eq.s32.totalorder %s109, 0
    %s112 = sadd.s32 %s111, 1
    %s113 = scalar_select %p110, %s111, %s112
    %p116 = pneg %p110
    %p117 = scmp.eq.s32.totalorder %s10, 1
    %p118 = por %p116, %p117
    %p119 = scmp.ne.s32.totalorder %s111, %s114
    %p120 = scmp.eq.s32.totalorder %s10, 0
    %p121 = por %p119, %p120
    %p122 = scmp.ne.s32.totalorder %s111, %s114
    %p123 = scmp.eq.s32.totalorder %s15, 1
    %p124 = por %p122, %p123
    %p125 = scmp.ne.s32.totalorder %s114, %s115
    %p126 = scmp.eq.s32.totalorder %s15, 0
    %p127 = por %p125, %p126
    %p128 = scmp.ne.s32.totalorder %s114, %s115
    %p129 = scmp.eq.s32.totalorder %s16, 1
    %p130 = por %p128, %p129
    %p132 = scmp.ne.s32.totalorder %s115, %s131
    %p133 = scmp.eq.s32.totalorder %s16, 0
    %p134 = por %p132, %p133
    %p135 = scmp.le.s32.totalorder 1, %s10
    %p136 = scmp.lt.s32.totalorder %s10, 3
    %p137 = pnand %p135, %p136
    %p138 = pneg %p137
    // Predicated region
    $region9: #{conv_bn_relu.2} parent=5 // pred_check
      _
    $region10: #{conv_bn_relu.2} parent=5 // pred_check_branch
      %140 = sbr.rel (%p137) target = $region12
    $region11: #{conv_bn_relu.2} parent=5 // pred_region
      %s141 = ssub.s32 %s10, 1
      // Predicated region
      $region13: #{conv_bn_relu.2} parent=11 // pred_check
        %p142 = pneg %p71
      $region14: #{conv_bn_relu.2} parent=11 // pred_check_branch
        %144 = sbr.rel (%p142) target = $region16
      $region15: #{conv_bn_relu.2} parent=11 // pred_region
        _
      $region16: #{conv_bn_relu.2} parent=11 // pred_fallthru
        _
    $region12: #{conv_bn_relu.2} parent=5 // pred_fallthru
      _
    %p145 = scmp.lt.s32.totalorder %s10, 2
    // Predicated region
    $region17: #{conv_bn_relu.2} parent=5 // pred_check
      %p146 = pneg %p145
    $region18: #{conv_bn_relu.2} parent=5 // pred_check_branch
      %148 = sbr.rel (%p146) target = $region20
    $region19: #{conv_bn_relu.2} parent=5 // pred_region
      // Predicated region
      $region21: #{conv_bn_relu.2} parent=19 // pred_check
        %p149 = pneg %p44
      $region22: #{conv_bn_relu.2} parent=19 // pred_check_branch
        %151 = sbr.rel (%p149) target = $region24
      $region23: #{conv_bn_relu.2} parent=19 // pred_region
        %p152 = scmp.lt.s32.totalorder %s17, 1
        %s153 = scalar_select %p152, %s17, 1
        %p154 = scmp.lt.s32.totalorder %s18, 0
        %s155 = scalar_select %p154, %s18, 0
        %s156 = smul.addr %s155, 41
        %s157 = smul.addr %s153, 41
        %s158 = sadd.s32 %s156, %s157
        %s159 = smul.addr %s158, 4
        %s160 = scalar_lea.vmem %s0, %s159
      $region24: #{conv_bn_relu.2} parent=19 // pred_fallthru
        _
    $region20: #{conv_bn_relu.2} parent=5 // pred_fallthru
      _
    %p161 = scmp.le.s32.totalorder 1, %s10
    %p162 = scmp.lt.s32.totalorder %s10, 3
    %p163 = pnand %p161, %p162
    %p164 = pneg %p163
    // Predicated region
    $region25: #{conv_bn_relu.2} parent=5 // pred_check
      _
    $region26: #{conv_bn_relu.2} parent=5 // pred_check_branch
      %166 = sbr.rel (%p163) target = $region28
    $region27: #{conv_bn_relu.2} parent=5 // pred_region
      %s167 = ssub.s32 %s10, 1
      %p168 = scmp.lt.s32.totalorder %s19, 1
      %s169 = scalar_select %p168, %s19, 1
      %p170 = scmp.lt.s32.totalorder %s20, 0
      %s171 = scalar_select %p170, %s20, 0
      %s172 = smul.addr %s171, 41
      %s173 = smul.addr %s169, 41
      %s174 = sadd.s32 %s172, %s173
      %s175 = smul.addr %s174, 4
      %s176 = scalar_lea.vmem %s0, %s175
      %p177 = pneg %p50
      %p178 = pneg %p47
      %p179 = pneg %p71
      %p180 = pneg %p68
      %p181 = pneg %p99
      %p182 = pneg %p96
      %p183 = scmp.lt.s32.totalorder %s19, 1
      %s184 = scalar_select %p183, %s19, 1
      %p185 = scmp.lt.s32.totalorder %s20, 0
      %s186 = scalar_select %p185, %s20, 0
      %s187 = smul.addr %s186, 36
      %s188 = smul.addr %s184, 36
      %s189 = sadd.s32 %s187, %s188
      %s190 = smul.addr %s189, 4
      %s191 = scalar_lea.vmem %s2, %s190
      %p192 = pneg %p127
      %p193 = pneg %p124
      %p194 = scmp.lt.s32.totalorder %s19, 1
      %s195 = scalar_select %p194, %s19, 1
      %p196 = scmp.lt.s32.totalorder %s20, 0
      %s197 = scalar_select %p196, %s20, 0
      %s198 = sadd.s32 %s197, %s195
      %s199 = smul.addr %s198, 2
      %s200 = scalar_lea.vmem %s3, %s199
      %p201 = scmp.lt.s32.totalorder %s19, 1
      %s202 = scalar_select %p201, %s19, 1
      %p203 = scmp.lt.s32.totalorder %s20, 0
      %s204 = scalar_select %p203, %s20, 0
      %s205 = smul.addr %s204, 41
      %s206 = smul.addr %s202, 41
      %s207 = sadd.s32 %s205, %s206
      %s208 = smul.addr %s207, 4
      %s209 = scalar_lea.vmem %s0, %s208
      %p210 = scmp.lt.s32.totalorder %s19, 1
      %s211 = scalar_select %p210, %s19, 1
      %p212 = scmp.lt.s32.totalorder %s20, 0
      %s213 = scalar_select %p212, %s20, 0
      %s214 = smul.addr %s213, 36
      %s215 = smul.addr %s211, 36
      %s216 = sadd.s32 %s214, %s215
      %s217 = smul.addr %s216, 4
      %s218 = scalar_lea.vmem %s2, %s217
      %p219 = scmp.lt.s32.totalorder %s19, 1
      %s220 = scalar_select %p219, %s19, 1
      %p221 = scmp.lt.s32.totalorder %s20, 0
      %s222 = scalar_select %p221, %s20, 0
      %s223 = sadd.s32 %s222, %s220
      %s224 = smul.addr %s223, 2
      %s225 = scalar_lea.vmem %s3, %s224
      %v227 = vld [vmem:[%s209] sm:$0xf]
      %v228 = vld [vmem:[%s209 + $0x4] sm:$0xf]
      %v229 = vld [vmem:[%s209 + $0x8] sm:$0xf]
      %v230 = vld [vmem:[%s209 + $0xc] sm:$0xf]
      %v231 = vld [vmem:[%s209 + $0x10] sm:$0xf]
      %v232 = vld [vmem:[%s209 + $0x14] sm:$0xf]
      %v233 = vld [vmem:[%s209 + $0x18] sm:$0xf]
      %v234 = vld [vmem:[%s209 + $0x1c] sm:$0xf]
      %v235 = vld [vmem:[%s209 + $0x20] sm:$0xf]
      %v236 = vld [vmem:[%s209 + $0x24] sm:$0xf]
      %v237 = vld [vmem:[%s209 + $0x28] sm:$0xf]
      %v238 = vld [vmem:[%s209 + $0x2c] sm:$0xf]
      %v239 = vld [vmem:[%s209 + $0x30] sm:$0xf]
      %v240 = vld [vmem:[%s209 + $0x34] sm:$0xf]
      %v241 = vld [vmem:[%s209 + $0x38] sm:$0xf]
      %v242 = vld [vmem:[%s209 + $0x3c] sm:$0xf]
      %v243 = vld [vmem:[%s209 + $0x40] sm:$0xf]
      %v244 = vld [vmem:[%s209 + $0x44] sm:$0xf]
      %v245 = vld [vmem:[%s209 + $0x48] sm:$0xf]
      %v246 = vld [vmem:[%s209 + $0x4c] sm:$0xf]
      %v247 = vld [vmem:[%s209 + $0x50] sm:$0xf]
      %v248 = vld [vmem:[%s209 + $0x54] sm:$0xf]
      %v249 = vld [vmem:[%s209 + $0x58] sm:$0xf]
      %v250 = vld [vmem:[%s209 + $0x5c] sm:$0xf]
      %v251 = vld [vmem:[%s209 + $0x60] sm:$0xf]
      %v252 = vld [vmem:[%s209 + $0x64] sm:$0xf]
      %v253 = vld [vmem:[%s209 + $0x68] sm:$0xf]
      %v254 = vld [vmem:[%s209 + $0x6c] sm:$0xf]
      %v255 = vld [vmem:[%s209 + $0x70] sm:$0xf]
      %v256 = vld [vmem:[%s209 + $0x74] sm:$0xf]
      %v257 = vld [vmem:[%s209 + $0x78] sm:$0xf]
      %v258 = vld [vmem:[%s209 + $0x7c] sm:$0xf]
      %v259 = vld [vmem:[%s209 + $0x80] sm:$0xf]
      %v260 = vld [vmem:[%s209 + $0x84] sm:$0xf]
      %v261 = vld [vmem:[%s209 + $0x88] sm:$0xf]
      %v262 = vld [vmem:[%s209 + $0x8c] sm:$0xf]
      %v263 = vld [vmem:[%s209 + $0x90] sm:$0x1]
      %v264 = vld [vmem:[%s209] sm:$0xe]
      %v265 = vld [vmem:[%s209 + $0x8] sm:$0xe]
      %v266 = vld [vmem:[%s209 + $0x90] sm:$0xf]
      %v267 = vld [vmem:[%s209 + $0x94] sm:$0xf]
      %v268 = vld [vmem:[%s209 + $0x98] sm:$0x1]
      %v269 = vld [vmem:[%s209 + $0x98] sm:$0x3]
      %v270 = vld [vmem:[%s209 + $0x8] sm:$0xc]
      %v271 = vld [vmem:[%s209 + $0x10] sm:$0xc]
      %v272 = vld [vmem:[%s209 + $0x98] sm:$0xf]
      %v273 = vld [vmem:[%s209 + $0x9c] sm:$0xf]
      %v274 = vld [vmem:[%s209 + $0xa0] sm:$0x3]
      %v275 = vld [vmem:[%s209 + $0xa0] sm:$0x7]
      %v276 = vld [vmem:[%s209 + $0x10] sm:$0x8]
      %v313 = vunpack.c.l.b16 %v227
      %v314 = vunpack.c.l.b16 %v228
      %v315 = vunpack.c.l.b16 %v229
      %v316 = vunpack.c.l.b16 %v230
      %v317 = vunpack.c.l.b16 %v231
      %v318 = vunpack.c.l.b16 %v232
      %v319 = vunpack.c.l.b16 %v233
      %v320 = vunpack.c.l.b16 %v234
      %v321 = vunpack.c.l.b16 %v235
      %v322 = vunpack.c.l.b16 %v236
      %v323 = vunpack.c.l.b16 %v237
      %v324 = vunpack.c.l.b16 %v238
      %v325 = vunpack.c.l.b16 %v239
      %v326 = vunpack.c.l.b16 %v240
      %v327 = vunpack.c.l.b16 %v241
      %v328 = vunpack.c.l.b16 %v242
      %v329 = vunpack.c.l.b16 %v243
      %v330 = vunpack.c.l.b16 %v244
      %v331 = vunpack.c.l.b16 %v245
      %v332 = vunpack.c.l.b16 %v246
      %v333 = vunpack.c.l.b16 %v247
      %v334 = vunpack.c.l.b16 %v248
      %v335 = vunpack.c.l.b16 %v249
      %v336 = vunpack.c.l.b16 %v250
      %v337 = vunpack.c.l.b16 %v251
      %v338 = vunpack.c.l.b16 %v252
      %v339 = vunpack.c.l.b16 %v253
      %v340 = vunpack.c.l.b16 %v254
      %v341 = vunpack.c.l.b16 %v255
      %v342 = vunpack.c.l.b16 %v256
      %v343 = vunpack.c.l.b16 %v257
      %v344 = vunpack.c.l.b16 %v258
      %v345 = vunpack.c.l.b16 %v259
      %v346 = vunpack.c.l.b16 %v260
      %v347 = vunpack.c.l.b16 %v261
      %v348 = vunpack.c.l.b16 %v262
      %v349 = vpack.c.b16 %v314, %v313
      %v350 = vpack.c.b16 %v316, %v315
      %v351 = vpack.c.b16 %v318, %v317
      %v352 = vpack.c.b16 %v320, %v319
      %v353 = vpack.c.b16 %v322, %v321
      %v354 = vpack.c.b16 %v324, %v323
      %v355 = vpack.c.b16 %v326, %v325
      %v356 = vpack.c.b16 %v328, %v327
      %v357 = vpack.c.b16 %v330, %v329
      %v358 = vpack.c.b16 %v332, %v331
      %v359 = vpack.c.b16 %v334, %v333
      %v360 = vpack.c.b16 %v336, %v335
      %v361 = vpack.c.b16 %v338, %v337
      %v362 = vpack.c.b16 %v340, %v339
      %v363 = vpack.c.b16 %v342, %v341
      %v364 = vpack.c.b16 %v344, %v343
      %v365 = vpack.c.b16 %v346, %v345
      %v366 = vpack.c.b16 %v348, %v347
      %v368 = vunpack.c.l.b16 %v263
      %v369 = vpack.c.b16 %v368, %v368
      %vm370 = vsmask.f32 7424
      %v372 = vshrl.u32 %v349, 16
      %v374 = vshll.u32 %v349, 16
      %v376 = vrot.slane %v374, 1
      %v377 = vor.u32 %v372, %v376
      %v379 = vshll.u32 %v350, 16
      %v381 = vrot.slane %v379, 1
      %v382 = vsel %vm370, %v377, %v381
      %v383 = vshrl.u32 %v350, 16
      %v385 = vor.u32 %v383, %v381
      %v387 = vshll.u32 %v351, 16
      %v389 = vrot.slane %v387, 1
      %v390 = vsel %vm370, %v385, %v389
      %v391 = vshrl.u32 %v351, 16
      %v393 = vor.u32 %v391, %v389
      %v395 = vshll.u32 %v352, 16
      %v397 = vrot.slane %v395, 1
      %v398 = vsel %vm370, %v393, %v397
      %v399 = vshrl.u32 %v352, 16
      %v401 = vor.u32 %v399, %v397
      %v403 = vshll.u32 %v353, 16
      %v405 = vrot.slane %v403, 1
      %v406 = vsel %vm370, %v401, %v405
      %v407 = vshrl.u32 %v353, 16
      %v409 = vor.u32 %v407, %v405
      %v411 = vshll.u32 %v354, 16
      %v413 = vrot.slane %v411, 1
      %v414 = vsel %vm370, %v409, %v413
      %v415 = vshrl.u32 %v354, 16
      %v417 = vor.u32 %v415, %v413
      %v419 = vshll.u32 %v355, 16
      %v421 = vrot.slane %v419, 1
      %v422 = vsel %vm370, %v417, %v421
      %v423 = vshrl.u32 %v355, 16
      %v425 = vor.u32 %v423, %v421
      %v427 = vshll.u32 %v356, 16
      %v429 = vrot.slane %v427, 1
      %v430 = vsel %vm370, %v425, %v429
      %v431 = vshrl.u32 %v356, 16
      %v433 = vor.u32 %v431, %v429
      %v435 = vshll.u32 %v357, 16
      %v437 = vrot.slane %v435, 1
      %v438 = vsel %vm370, %v433, %v437
      %v439 = vshrl.u32 %v357, 16
      %v441 = vor.u32 %v439, %v437
      %v443 = vshll.u32 %v358, 16
      %v445 = vrot.slane %v443, 1
      %v446 = vsel %vm370, %v441, %v445
      %v447 = vshrl.u32 %v358, 16
      %v449 = vor.u32 %v447, %v445
      %v451 = vshll.u32 %v359, 16
      %v453 = vrot.slane %v451, 1
      %v454 = vsel %vm370, %v449, %v453
      %v455 = vshrl.u32 %v359, 16
      %v457 = vor.u32 %v455, %v453
      %v459 = vshll.u32 %v360, 16
      %v461 = vrot.slane %v459, 1
      %v462 = vsel %vm370, %v457, %v461
      %v463 = vshrl.u32 %v360, 16
      %v465 = vor.u32 %v463, %v461
      %v467 = vshll.u32 %v361, 16
      %v469 = vrot.slane %v467, 1
      %v470 = vsel %vm370, %v465, %v469
      %v471 = vshrl.u32 %v361, 16
      %v473 = vor.u32 %v471, %v469
      %v475 = vshll.u32 %v362, 16
      %v477 = vrot.slane %v475, 1
      %v478 = vsel %vm370, %v473, %v477
      %v479 = vshrl.u32 %v362, 16
      %v481 = vor.u32 %v479, %v477
      %v483 = vshll.u32 %v363, 16
      %v485 = vrot.slane %v483, 1
      %v486 = vsel %vm370, %v481, %v485
      %v487 = vshrl.u32 %v363, 16
      %v489 = vor.u32 %v487, %v485
      %v491 = vshll.u32 %v364, 16
      %v493 = vrot.slane %v491, 1
      %v494 = vsel %vm370, %v489, %v493
      %v495 = vshrl.u32 %v364, 16
      %v497 = vor.u32 %v495, %v493
      %v499 = vshll.u32 %v365, 16
      %v501 = vrot.slane %v499, 1
      %v502 = vsel %vm370, %v497, %v501
      %v503 = vshrl.u32 %v365, 16
      %v505 = vor.u32 %v503, %v501
      %v507 = vshll.u32 %v366, 16
      %v509 = vrot.slane %v507, 1
      %v510 = vsel %vm370, %v505, %v509
      %v511 = vshrl.u32 %v366, 16
      %v513 = vor.u32 %v511, %v509
      %v515 = vshll.u32 %v369, 16
      %v517 = vrot.slane %v515, 1
      %v518 = vsel %vm370, %v513, %v517
      %519 = vrot.lane.b32.xlu0 %v382, 4
      %v520 = vpop.permute.xlu0 %519
      %521 = vrot.lane.b32.xlu0 %v390, 4
      %v522 = vpop.permute.xlu0 %521
      %523 = vrot.lane.b32.xlu0 %v398, 4
      %v524 = vpop.permute.xlu0 %523
      %525 = vrot.lane.b32.xlu0 %v406, 4
      %v526 = vpop.permute.xlu0 %525
      %527 = vrot.lane.b32.xlu0 %v414, 4
      %v528 = vpop.permute.xlu0 %527
      %529 = vrot.lane.b32.xlu0 %v422, 4
      %v530 = vpop.permute.xlu0 %529
      %531 = vrot.lane.b32.xlu0 %v430, 4
      %v532 = vpop.permute.xlu0 %531
      %533 = vrot.lane.b32.xlu0 %v438, 4
      %v534 = vpop.permute.xlu0 %533
      %535 = vrot.lane.b32.xlu0 %v446, 4
      %v536 = vpop.permute.xlu0 %535
      %537 = vrot.lane.b32.xlu0 %v454, 4
      %v538 = vpop.permute.xlu0 %537
      %539 = vrot.lane.b32.xlu0 %v462, 4
      %v540 = vpop.permute.xlu0 %539
      %541 = vrot.lane.b32.xlu0 %v470, 4
      %v542 = vpop.permute.xlu0 %541
      %543 = vrot.lane.b32.xlu0 %v478, 4
      %v544 = vpop.permute.xlu0 %543
      %545 = vrot.lane.b32.xlu0 %v486, 4
      %v546 = vpop.permute.xlu0 %545
      %547 = vrot.lane.b32.xlu0 %v494, 4
      %v548 = vpop.permute.xlu0 %547
      %549 = vrot.lane.b32.xlu0 %v502, 4
      %v550 = vpop.permute.xlu0 %549
      %551 = vrot.lane.b32.xlu0 %v510, 4
      %v552 = vpop.permute.xlu0 %551
      %553 = vrot.lane.b32.xlu0 %v518, 4
      %v554 = vpop.permute.xlu0 %553
      %v556 = vunpack.c.l.b16 %v264
      %v557 = vpack.c.b16 %v314, %v556
      %vm558 = vcmask 1046528
      %v559 = vrot.slane %v557, 1
      %v560 = vrot.slane %v350, 1
      %v561 = vsel %vm558, %v559, %v560
      %v562 = vrot.slane %v351, 1
      %v563 = vsel %vm558, %v560, %v562
      %v564 = vrot.slane %v352, 1
      %v565 = vsel %vm558, %v562, %v564
      %v566 = vrot.slane %v353, 1
      %v567 = vsel %vm558, %v564, %v566
      %v568 = vrot.slane %v354, 1
      %v569 = vsel %vm558, %v566, %v568
      %v570 = vrot.slane %v355, 1
      %v571 = vsel %vm558, %v568, %v570
      %v572 = vrot.slane %v356, 1
      %v573 = vsel %vm558, %v570, %v572
      %v574 = vrot.slane %v357, 1
      %v575 = vsel %vm558, %v572, %v574
      %v576 = vrot.slane %v358, 1
      %v577 = vsel %vm558, %v574, %v576
      %v578 = vrot.slane %v359, 1
      %v579 = vsel %vm558, %v576, %v578
      %v580 = vrot.slane %v360, 1
      %v581 = vsel %vm558, %v578, %v580
      %v582 = vrot.slane %v361, 1
      %v583 = vsel %vm558, %v580, %v582
      %v584 = vrot.slane %v362, 1
      %v585 = vsel %vm558, %v582, %v584
      %v586 = vrot.slane %v363, 1
      %v587 = vsel %vm558, %v584, %v586
      %v588 = vrot.slane %v364, 1
      %v589 = vsel %vm558, %v586, %v588
      %v590 = vrot.slane %v365, 1
      %v591 = vsel %vm558, %v588, %v590
      %v592 = vrot.slane %v366, 1
      %v593 = vsel %vm558, %v590, %v592
      %v594 = vrot.slane %v369, 1
      %v595 = vsel %vm558, %v592, %v594
      %596 = vrot.lane.b32.xlu0 %v561, 8
      %v597 = vpop.permute.xlu0 %596
      %598 = vrot.lane.b32.xlu0 %v563, 8
      %v599 = vpop.permute.xlu0 %598
      %600 = vrot.lane.b32.xlu0 %v565, 8
      %v601 = vpop.permute.xlu0 %600
      %602 = vrot.lane.b32.xlu0 %v567, 8
      %v603 = vpop.permute.xlu0 %602
      %604 = vrot.lane.b32.xlu0 %v569, 8
      %v605 = vpop.permute.xlu0 %604
      %606 = vrot.lane.b32.xlu0 %v571, 8
      %v607 = vpop.permute.xlu0 %606
      %608 = vrot.lane.b32.xlu0 %v573, 8
      %v609 = vpop.permute.xlu0 %608
      %610 = vrot.lane.b32.xlu0 %v575, 8
      %v611 = vpop.permute.xlu0 %610
      %612 = vrot.lane.b32.xlu0 %v577, 8
      %v613 = vpop.permute.xlu0 %612
      %614 = vrot.lane.b32.xlu0 %v579, 8
      %v615 = vpop.permute.xlu0 %614
      %616 = vrot.lane.b32.xlu0 %v581, 8
      %v617 = vpop.permute.xlu0 %616
      %618 = vrot.lane.b32.xlu0 %v583, 8
      %v619 = vpop.permute.xlu0 %618
      %620 = vrot.lane.b32.xlu0 %v585, 8
      %v621 = vpop.permute.xlu0 %620
      %622 = vrot.lane.b32.xlu0 %v587, 8
      %v623 = vpop.permute.xlu0 %622
      %624 = vrot.lane.b32.xlu0 %v589, 8
      %v625 = vpop.permute.xlu0 %624
      %626 = vrot.lane.b32.xlu0 %v591, 8
      %v627 = vpop.permute.xlu0 %626
      %628 = vrot.lane.b32.xlu0 %v593, 8
      %v629 = vpop.permute.xlu0 %628
      %630 = vrot.lane.b32.xlu0 %v595, 8
      %v631 = vpop.permute.xlu0 %630
      %v636 = vunpack.c.l.b16 %v265
      %v637 = vunpack.c.l.b16 %v266
      %v638 = vunpack.c.l.b16 %v267
      %v639 = vunpack.c.l.b16 %v268
      %v640 = vpack.c.b16 %v316, %v636
      %v641 = vpack.c.b16 %v638, %v637
      %v642 = vpack.c.b16 %v639, %v639
      %v643 = vrot.slane %v640, 1
      %v644 = vsel %vm558, %v643, %v562
      %v645 = vrot.slane %v641, 1
      %v646 = vsel %vm558, %v592, %v645
      %v647 = vrot.slane %v642, 1
      %v648 = vsel %vm558, %v645, %v647
      %649 = vrot.lane.b32.xlu0 %v644, 12
      %v650 = vpop.permute.xlu0 %649
      %651 = vrot.lane.b32.xlu0 %v565, 12
      %v652 = vpop.permute.xlu0 %651
      %653 = vrot.lane.b32.xlu0 %v567, 12
      %v654 = vpop.permute.xlu0 %653
      %655 = vrot.lane.b32.xlu0 %v569, 12
      %v656 = vpop.permute.xlu0 %655
      %657 = vrot.lane.b32.xlu0 %v571, 12
      %v658 = vpop.permute.xlu0 %657
      %659 = vrot.lane.b32.xlu0 %v573, 12
      %v660 = vpop.permute.xlu0 %659
      %661 = vrot.lane.b32.xlu0 %v575, 12
      %v662 = vpop.permute.xlu0 %661
      %663 = vrot.lane.b32.xlu0 %v577, 12
      %v664 = vpop.permute.xlu0 %663
      %665 = vrot.lane.b32.xlu0 %v579, 12
      %v666 = vpop.permute.xlu0 %665
      %667 = vrot.lane.b32.xlu0 %v581, 12
      %v668 = vpop.permute.xlu0 %667
      %669 = vrot.lane.b32.xlu0 %v583, 12
      %v670 = vpop.permute.xlu0 %669
      %671 = vrot.lane.b32.xlu0 %v585, 12
      %v672 = vpop.permute.xlu0 %671
      %673 = vrot.lane.b32.xlu0 %v587, 12
      %v674 = vpop.permute.xlu0 %673
      %675 = vrot.lane.b32.xlu0 %v589, 12
      %v676 = vpop.permute.xlu0 %675
      %677 = vrot.lane.b32.xlu0 %v591, 12
      %v678 = vpop.permute.xlu0 %677
      %679 = vrot.lane.b32.xlu0 %v593, 12
      %v680 = vpop.permute.xlu0 %679
      %681 = vrot.lane.b32.xlu0 %v646, 12
      %v682 = vpop.permute.xlu0 %681
      %683 = vrot.lane.b32.xlu0 %v648, 12
      %v684 = vpop.permute.xlu0 %683
      %v686 = vunpack.c.l.b16 %v269
      %v687 = vpack.c.b16 %v686, %v686
      %vm688 = vsmask.f32 6400
      %v690 = vshrl.u32 %v640, 16
      %v692 = vrot.slane %v690, 1
      %v693 = vshll.u32 %v640, 16
      %v695 = vrot.slane %v693, 2
      %v696 = vor.u32 %v692, %v695
      %v697 = vrot.slane %v391, 1
      %v698 = vrot.slane %v387, 2
      %v699 = vor.u32 %v697, %v698
      %v700 = vsel %vm688, %v696, %v699
      %v701 = vrot.slane %v399, 1
      %v702 = vrot.slane %v395, 2
      %v703 = vor.u32 %v701, %v702
      %v704 = vsel %vm688, %v699, %v703
      %v705 = vrot.slane %v407, 1
      %v706 = vrot.slane %v403, 2
      %v707 = vor.u32 %v705, %v706
      %v708 = vsel %vm688, %v703, %v707
      %v709 = vrot.slane %v415, 1
      %v710 = vrot.slane %v411, 2
      %v711 = vor.u32 %v709, %v710
      %v712 = vsel %vm688, %v707, %v711
      %v713 = vrot.slane %v423, 1
      %v714 = vrot.slane %v419, 2
      %v715 = vor.u32 %v713, %v714
      %v716 = vsel %vm688, %v711, %v715
      %v717 = vrot.slane %v431, 1
      %v718 = vrot.slane %v427, 2
      %v719 = vor.u32 %v717, %v718
      %v720 = vsel %vm688, %v715, %v719
      %v721 = vrot.slane %v439, 1
      %v722 = vrot.slane %v435, 2
      %v723 = vor.u32 %v721, %v722
      %v724 = vsel %vm688, %v719, %v723
      %v725 = vrot.slane %v447, 1
      %v726 = vrot.slane %v443, 2
      %v727 = vor.u32 %v725, %v726
      %v728 = vsel %vm688, %v723, %v727
      %v729 = vrot.slane %v455, 1
      %v730 = vrot.slane %v451, 2
      %v731 = vor.u32 %v729, %v730
      %v732 = vsel %vm688, %v727, %v731
      %v733 = vrot.slane %v463, 1
      %v734 = vrot.slane %v459, 2
      %v735 = vor.u32 %v733, %v734
      %v736 = vsel %vm688, %v731, %v735
      %v737 = vrot.slane %v471, 1
      %v738 = vrot.slane %v467, 2
      %v739 = vor.u32 %v737, %v738
      %v740 = vsel %vm688, %v735, %v739
      %v741 = vrot.slane %v479, 1
      %v742 = vrot.slane %v475, 2
      %v743 = vor.u32 %v741, %v742
      %v744 = vsel %vm688, %v739, %v743
      %v745 = vrot.slane %v487, 1
      %v746 = vrot.slane %v483, 2
      %v747 = vor.u32 %v745, %v746
      %v748 = vsel %vm688, %v743, %v747
      %v749 = vrot.slane %v495, 1
      %v750 = vrot.slane %v491, 2
      %v751 = vor.u32 %v749, %v750
      %v752 = vsel %vm688, %v747, %v751
      %v753 = vrot.slane %v503, 1
      %v754 = vrot.slane %v499, 2
      %v755 = vor.u32 %v753, %v754
      %v756 = vsel %vm688, %v751, %v755
      %v757 = vrot.slane %v511, 1
      %v758 = vrot.slane %v507, 2
      %v759 = vor.u32 %v757, %v758
      %v760 = vsel %vm688, %v755, %v759
      %v762 = vshrl.u32 %v641, 16
      %v764 = vrot.slane %v762, 1
      %v765 = vshll.u32 %v641, 16
      %v767 = vrot.slane %v765, 2
      %v768 = vor.u32 %v764, %v767
      %v769 = vsel %vm688, %v759, %v768
      %v771 = vshrl.u32 %v687, 16
      %v773 = vrot.slane %v771, 1
      %v774 = vshll.u32 %v687, 16
      %v776 = vrot.slane %v774, 2
      %v777 = vor.u32 %v773, %v776
      %v778 = vsel %vm688, %v768, %v777
      %779 = vrot.lane.b32.xlu0 %v700, 16
      %v780 = vpop.permute.xlu0 %779
      %781 = vrot.lane.b32.xlu0 %v704, 16
      %v782 = vpop.permute.xlu0 %781
      %783 = vrot.lane.b32.xlu0 %v708, 16
      %v784 = vpop.permute.xlu0 %783
      %785 = vrot.lane.b32.xlu0 %v712, 16
      %v786 = vpop.permute.xlu0 %785
      %787 = vrot.lane.b32.xlu0 %v716, 16
      %v788 = vpop.permute.xlu0 %787
      %789 = vrot.lane.b32.xlu0 %v720, 16
      %v790 = vpop.permute.xlu0 %789
      %791 = vrot.lane.b32.xlu0 %v724, 16
      %v792 = vpop.permute.xlu0 %791
      %793 = vrot.lane.b32.xlu0 %v728, 16
      %v794 = vpop.permute.xlu0 %793
      %795 = vrot.lane.b32.xlu0 %v732, 16
      %v796 = vpop.permute.xlu0 %795
      %797 = vrot.lane.b32.xlu0 %v736, 16
      %v798 = vpop.permute.xlu0 %797
      %799 = vrot.lane.b32.xlu0 %v740, 16
      %v800 = vpop.permute.xlu0 %799
      %801 = vrot.lane.b32.xlu0 %v744, 16
      %v802 = vpop.permute.xlu0 %801
      %803 = vrot.lane.b32.xlu0 %v748, 16
      %v804 = vpop.permute.xlu0 %803
      %805 = vrot.lane.b32.xlu0 %v752, 16
      %v806 = vpop.permute.xlu0 %805
      %807 = vrot.lane.b32.xlu0 %v756, 16
      %v808 = vpop.permute.xlu0 %807
      %809 = vrot.lane.b32.xlu0 %v760, 16
      %v810 = vpop.permute.xlu0 %809
      %811 = vrot.lane.b32.xlu0 %v769, 16
      %v812 = vpop.permute.xlu0 %811
      %813 = vrot.lane.b32.xlu0 %v778, 16
      %v814 = vpop.permute.xlu0 %813
      %v816 = vunpack.c.l.b16 %v270
      %v817 = vpack.c.b16 %v316, %v816
      %vm818 = vcmask 1045504
      %v819 = vrot.slane %v817, 2
      %v820 = vrot.slane %v351, 2
      %v821 = vsel %vm818, %v819, %v820
      %v822 = vrot.slane %v352, 2
      %v823 = vsel %vm818, %v820, %v822
      %v824 = vrot.slane %v353, 2
      %v825 = vsel %vm818, %v822, %v824
      %v826 = vrot.slane %v354, 2
      %v827 = vsel %vm818, %v824, %v826
      %v828 = vrot.slane %v355, 2
      %v829 = vsel %vm818, %v826, %v828
      %v830 = vrot.slane %v356, 2
      %v831 = vsel %vm818, %v828, %v830
      %v832 = vrot.slane %v357, 2
      %v833 = vsel %vm818, %v830, %v832
      %v834 = vrot.slane %v358, 2
      %v835 = vsel %vm818, %v832, %v834
      %v836 = vrot.slane %v359, 2
      %v837 = vsel %vm818, %v834, %v836
      %v838 = vrot.slane %v360, 2
      %v839 = vsel %vm818, %v836, %v838
      %v840 = vrot.slane %v361, 2
      %v841 = vsel %vm818, %v838, %v840
      %v842 = vrot.slane %v362, 2
      %v843 = vsel %vm818, %v840, %v842
      %v844 = vrot.slane %v363, 2
      %v845 = vsel %vm818, %v842, %v844
      %v846 = vrot.slane %v364, 2
      %v847 = vsel %vm818, %v844, %v846
      %v848 = vrot.slane %v365, 2
      %v849 = vsel %vm818, %v846, %v848
      %v850 = vrot.slane %v366, 2
      %v851 = vsel %vm818, %v848, %v850
      %v852 = vrot.slane %v641, 2
      %v853 = vsel %vm818, %v850, %v852
      %v854 = vrot.slane %v687, 2
      %v855 = vsel %vm818, %v852, %v854
      %856 = vrot.lane.b32.xlu0 %v821, 20
      %v857 = vpop.permute.xlu0 %856
      %858 = vrot.lane.b32.xlu0 %v823, 20
      %v859 = vpop.permute.xlu0 %858
      %860 = vrot.lane.b32.xlu0 %v825, 20
      %v861 = vpop.permute.xlu0 %860
      %862 = vrot.lane.b32.xlu0 %v827, 20
      %v863 = vpop.permute.xlu0 %862
      %864 = vrot.lane.b32.xlu0 %v829, 20
      %v865 = vpop.permute.xlu0 %864
      %866 = vrot.lane.b32.xlu0 %v831, 20
      %v867 = vpop.permute.xlu0 %866
      %868 = vrot.lane.b32.xlu0 %v833, 20
      %v869 = vpop.permute.xlu0 %868
      %870 = vrot.lane.b32.xlu0 %v835, 20
      %v871 = vpop.permute.xlu0 %870
      %872 = vrot.lane.b32.xlu0 %v837, 20
      %v873 = vpop.permute.xlu0 %872
      %874 = vrot.lane.b32.xlu0 %v839, 20
      %v875 = vpop.permute.xlu0 %874
      %876 = vrot.lane.b32.xlu0 %v841, 20
      %v877 = vpop.permute.xlu0 %876
      %878 = vrot.lane.b32.xlu0 %v843, 20
      %v879 = vpop.permute.xlu0 %878
      %880 = vrot.lane.b32.xlu0 %v845, 20
      %v881 = vpop.permute.xlu0 %880
      %882 = vrot.lane.b32.xlu0 %v847, 20
      %v883 = vpop.permute.xlu0 %882
      %884 = vrot.lane.b32.xlu0 %v849, 20
      %v885 = vpop.permute.xlu0 %884
      %886 = vrot.lane.b32.xlu0 %v851, 20
      %v887 = vpop.permute.xlu0 %886
      %888 = vrot.lane.b32.xlu0 %v853, 20
      %v889 = vpop.permute.xlu0 %888
      %890 = vrot.lane.b32.xlu0 %v855, 20
      %v891 = vpop.permute.xlu0 %890
      %v896 = vunpack.c.l.b16 %v271
      %v897 = vunpack.c.l.b16 %v272
      %v898 = vunpack.c.l.b16 %v273
      %v899 = vunpack.c.l.b16 %v274
      %v900 = vpack.c.b16 %v318, %v896
      %v901 = vpack.c.b16 %v898, %v897
      %v902 = vpack.c.b16 %v899, %v899
      %v903 = vrot.slane %v900, 2
      %v904 = vsel %vm818, %v903, %v822
      %v905 = vrot.slane %v901, 2
      %v906 = vsel %vm818, %v852, %v905
      %v907 = vrot.slane %v902, 2
      %v908 = vsel %vm818, %v905, %v907
      %909 = vrot.lane.b32.xlu0 %v904, 24
      %v910 = vpop.permute.xlu0 %909
      %911 = vrot.lane.b32.xlu0 %v825, 24
      %v912 = vpop.permute.xlu0 %911
      %913 = vrot.lane.b32.xlu0 %v827, 24
      %v914 = vpop.permute.xlu0 %913
      %915 = vrot.lane.b32.xlu0 %v829, 24
      %v916 = vpop.permute.xlu0 %915
      %917 = vrot.lane.b32.xlu0 %v831, 24
      %v918 = vpop.permute.xlu0 %917
      %919 = vrot.lane.b32.xlu0 %v833, 24
      %v920 = vpop.permute.xlu0 %919
      %921 = vrot.lane.b32.xlu0 %v835, 24
      %v922 = vpop.permute.xlu0 %921
      %923 = vrot.lane.b32.xlu0 %v837, 24
      %v924 = vpop.permute.xlu0 %923
      %925 = vrot.lane.b32.xlu0 %v839, 24
      %v926 = vpop.permute.xlu0 %925
      %927 = vrot.lane.b32.xlu0 %v841, 24
      %v928 = vpop.permute.xlu0 %927
      %929 = vrot.lane.b32.xlu0 %v843, 24
      %v930 = vpop.permute.xlu0 %929
      %931 = vrot.lane.b32.xlu0 %v845, 24
      %v932 = vpop.permute.xlu0 %931
      %933 = vrot.lane.b32.xlu0 %v847, 24
      %v934 = vpop.permute.xlu0 %933
      %935 = vrot.lane.b32.xlu0 %v849, 24
      %v936 = vpop.permute.xlu0 %935
      %937 = vrot.lane.b32.xlu0 %v851, 24
      %v938 = vpop.permute.xlu0 %937
      %939 = vrot.lane.b32.xlu0 %v853, 24
      %v940 = vpop.permute.xlu0 %939
      %941 = vrot.lane.b32.xlu0 %v906, 24
      %v942 = vpop.permute.xlu0 %941
      %943 = vrot.lane.b32.xlu0 %v908, 24
      %v944 = vpop.permute.xlu0 %943
      %v946 = vunpack.c.l.b16 %v275
      %v947 = vpack.c.b16 %v946, %v946
      %vm948 = vsmask.f32 5376
      %v950 = vshrl.u32 %v900, 16
      %v952 = vrot.slane %v950, 2
      %v953 = vshll.u32 %v900, 16
      %v955 = vrot.slane %v953, 3
      %v956 = vor.u32 %v952, %v955
      %v957 = vrot.slane %v399, 2
      %v958 = vrot.slane %v395, 3
      %v959 = vor.u32 %v957, %v958
      %v960 = vsel %vm948, %v956, %v959
      %v961 = vrot.slane %v407, 2
      %v962 = vrot.slane %v403, 3
      %v963 = vor.u32 %v961, %v962
      %v964 = vsel %vm948, %v959, %v963
      %v965 = vrot.slane %v415, 2
      %v966 = vrot.slane %v411, 3
      %v967 = vor.u32 %v965, %v966
      %v968 = vsel %vm948, %v963, %v967
      %v969 = vrot.slane %v423, 2
      %v970 = vrot.slane %v419, 3
      %v971 = vor.u32 %v969, %v970
      %v972 = vsel %vm948, %v967, %v971
      %v973 = vrot.slane %v431, 2
      %v974 = vrot.slane %v427, 3
      %v975 = vor.u32 %v973, %v974
      %v976 = vsel %vm948, %v971, %v975
      %v977 = vrot.slane %v439, 2
      %v978 = vrot.slane %v435, 3
      %v979 = vor.u32 %v977, %v978
      %v980 = vsel %vm948, %v975, %v979
      %v981 = vrot.slane %v447, 2
      %v982 = vrot.slane %v443, 3
      %v983 = vor.u32 %v981, %v982
      %v984 = vsel %vm948, %v979, %v983
      %v985 = vrot.slane %v455, 2
      %v986 = vrot.slane %v451, 3
      %v987 = vor.u32 %v985, %v986
      %v988 = vsel %vm948, %v983, %v987
      %v989 = vrot.slane %v463, 2
      %v990 = vrot.slane %v459, 3
      %v991 = vor.u32 %v989, %v990
      %v992 = vsel %vm948, %v987, %v991
      %v993 = vrot.slane %v471, 2
      %v994 = vrot.slane %v467, 3
      %v995 = vor.u32 %v993, %v994
      %v996 = vsel %vm948, %v991, %v995
      %v997 = vrot.slane %v479, 2
      %v998 = vrot.slane %v475, 3
      %v999 = vor.u32 %v997, %v998
      %v1000 = vsel %vm948, %v995, %v999
      %v1001 = vrot.slane %v487, 2
      %v1002 = vrot.slane %v483, 3
      %v1003 = vor.u32 %v1001, %v1002
      %v1004 = vsel %vm948, %v999, %v1003
      %v1005 = vrot.slane %v495, 2
      %v1006 = vrot.slane %v491, 3
      %v1007 = vor.u32 %v1005, %v1006
      %v1008 = vsel %vm948, %v1003, %v1007
      %v1009 = vrot.slane %v503, 2
      %v1010 = vrot.slane %v499, 3
      %v1011 = vor.u32 %v1009, %v1010
      %v1012 = vsel %vm948, %v1007, %v1011
      %v1013 = vrot.slane %v511, 2
      %v1014 = vrot.slane %v507, 3
      %v1015 = vor.u32 %v1013, %v1014
      %v1016 = vsel %vm948, %v1011, %v1015
      %v1017 = vrot.slane %v762, 2
      %v1018 = vrot.slane %v765, 3
      %v1019 = vor.u32 %v1017, %v1018
      %v1020 = vsel %vm948, %v1015, %v1019
      %v1022 = vshrl.u32 %v901, 16
      %v1024 = vrot.slane %v1022, 2
      %v1025 = vshll.u32 %v901, 16
      %v1027 = vrot.slane %v1025, 3
      %v1028 = vor.u32 %v1024, %v1027
      %v1029 = vsel %vm948, %v1019, %v1028
      %v1031 = vshrl.u32 %v947, 16
      %v1033 = vrot.slane %v1031, 2
      %v1034 = vshll.u32 %v947, 16
      %v1036 = vrot.slane %v1034, 3
      %v1037 = vor.u32 %v1033, %v1036
      %v1038 = vsel %vm948, %v1028, %v1037
      %1039 = vrot.lane.b32.xlu0 %v960, 28
      %v1040 = vpop.permute.xlu0 %1039
      %1041 = vrot.lane.b32.xlu0 %v964, 28
      %v1042 = vpop.permute.xlu0 %1041
      %1043 = vrot.lane.b32.xlu0 %v968, 28
      %v1044 = vpop.permute.xlu0 %1043
      %1045 = vrot.lane.b32.xlu0 %v972, 28
      %v1046 = vpop.permute.xlu0 %1045
      %1047 = vrot.lane.b32.xlu0 %v976, 28
      %v1048 = vpop.permute.xlu0 %1047
      %1049 = vrot.lane.b32.xlu0 %v980, 28
      %v1050 = vpop.permute.xlu0 %1049
      %1051 = vrot.lane.b32.xlu0 %v984, 28
      %v1052 = vpop.permute.xlu0 %1051
      %1053 = vrot.lane.b32.xlu0 %v988, 28
      %v1054 = vpop.permute.xlu0 %1053
      %1055 = vrot.lane.b32.xlu0 %v992, 28
      %v1056 = vpop.permute.xlu0 %1055
      %1057 = vrot.lane.b32.xlu0 %v996, 28
      %v1058 = vpop.permute.xlu0 %1057
      %1059 = vrot.lane.b32.xlu0 %v1000, 28
      %v1060 = vpop.permute.xlu0 %1059
      %1061 = vrot.lane.b32.xlu0 %v1004, 28
      %v1062 = vpop.permute.xlu0 %1061
      %1063 = vrot.lane.b32.xlu0 %v1008, 28
      %v1064 = vpop.permute.xlu0 %1063
      %1065 = vrot.lane.b32.xlu0 %v1012, 28
      %v1066 = vpop.permute.xlu0 %1065
      %1067 = vrot.lane.b32.xlu0 %v1016, 28
      %v1068 = vpop.permute.xlu0 %1067
      %1069 = vrot.lane.b32.xlu0 %v1020, 28
      %v1070 = vpop.permute.xlu0 %1069
      %1071 = vrot.lane.b32.xlu0 %v1029, 28
      %v1072 = vpop.permute.xlu0 %1071
      %1073 = vrot.lane.b32.xlu0 %v1038, 28
      %v1074 = vpop.permute.xlu0 %1073
      %v1076 = vunpack.c.l.b16 %v276
      %v1077 = vpack.c.b16 %v318, %v1076
      %vm1078 = vcmask 1044480
      %v1079 = vrot.slane %v1077, 3
      %v1080 = vrot.slane %v352, 3
      %v1081 = vsel %vm1078, %v1079, %v1080
      %v1082 = vrot.slane %v353, 3
      %v1083 = vsel %vm1078, %v1080, %v1082
      %v1084 = vrot.slane %v354, 3
      %v1085 = vsel %vm1078, %v1082, %v1084
      %v1086 = vrot.slane %v355, 3
      %v1087 = vsel %vm1078, %v1084, %v1086
      %v1088 = vrot.slane %v356, 3
      %v1089 = vsel %vm1078, %v1086, %v1088
      %v1090 = vrot.slane %v357, 3
      %v1091 = vsel %vm1078, %v1088, %v1090
      %v1092 = vrot.slane %v358, 3
      %v1093 = vsel %vm1078, %v1090, %v1092
      %v1094 = vrot.slane %v359, 3
      %v1095 = vsel %vm1078, %v1092, %v1094
      %v1096 = vrot.slane %v360, 3
      %v1097 = vsel %vm1078, %v1094, %v1096
      %v1098 = vrot.slane %v361, 3
      %v1099 = vsel %vm1078, %v1096, %v1098
      %v1100 = vrot.slane %v362, 3
      %v1101 = vsel %vm1078, %v1098, %v1100
      %v1102 = vrot.slane %v363, 3
      %v1103 = vsel %vm1078, %v1100, %v1102
      %v1104 = vrot.slane %v364, 3
      %v1105 = vsel %vm1078, %v1102, %v1104
      %v1106 = vrot.slane %v365, 3
      %v1107 = vsel %vm1078, %v1104, %v1106
      %v1108 = vrot.slane %v366, 3
      %v1109 = vsel %vm1078, %v1106, %v1108
      %v1110 = vrot.slane %v641, 3
      %v1111 = vsel %vm1078, %v1108, %v1110
      %v1112 = vrot.slane %v901, 3
      %v1113 = vsel %vm1078, %v1110, %v1112
      %v1114 = vrot.slane %v947, 3
      %v1115 = vsel %vm1078, %v1112, %v1114
      %1116 = vrot.lane.b32.xlu0 %v1081, 32
      %v1117 = vpop.permute.xlu0 %1116
      %1118 = vrot.lane.b32.xlu0 %v1083, 32
      %v1119 = vpop.permute.xlu0 %1118
      %1120 = vrot.lane.b32.xlu0 %v1085, 32
      %v1121 = vpop.permute.xlu0 %1120
      %1122 = vrot.lane.b32.xlu0 %v1087, 32
      %v1123 = vpop.permute.xlu0 %1122
      %1124 = vrot.lane.b32.xlu0 %v1089, 32
      %v1125 = vpop.permute.xlu0 %1124
      %1126 = vrot.lane.b32.xlu0 %v1091, 32
      %v1127 = vpop.permute.xlu0 %1126
      %1128 = vrot.lane.b32.xlu0 %v1093, 32
      %v1129 = vpop.permute.xlu0 %1128
      %1130 = vrot.lane.b32.xlu0 %v1095, 32
      %v1131 = vpop.permute.xlu0 %1130
      %1132 = vrot.lane.b32.xlu0 %v1097, 32
      %v1133 = vpop.permute.xlu0 %1132
      %1134 = vrot.lane.b32.xlu0 %v1099, 32
      %v1135 = vpop.permute.xlu0 %1134
      %1136 = vrot.lane.b32.xlu0 %v1101, 32
      %v1137 = vpop.permute.xlu0 %1136
      %1138 = vrot.lane.b32.xlu0 %v1103, 32
      %v1139 = vpop.permute.xlu0 %1138
      %1140 = vrot.lane.b32.xlu0 %v1105, 32
      %v1141 = vpop.permute.xlu0 %1140
      %1142 = vrot.lane.b32.xlu0 %v1107, 32
      %v1143 = vpop.permute.xlu0 %1142
      %1144 = vrot.lane.b32.xlu0 %v1109, 32
      %v1145 = vpop.permute.xlu0 %1144
      %1146 = vrot.lane.b32.xlu0 %v1111, 32
      %v1147 = vpop.permute.xlu0 %1146
      %1148 = vrot.lane.b32.xlu0 %v1113, 32
      %v1149 = vpop.permute.xlu0 %1148
      %1150 = vrot.lane.b32.xlu0 %v1115, 32
      %v1151 = vpop.permute.xlu0 %1150
      %vm1152 = vcmask 31744
      %v1154 = vsel %vm1152, %v349, %v520
      %v1156 = vsel %vm1152, %v350, %v522
      %v1158 = vsel %vm1152, %v351, %v524
      %v1160 = vsel %vm1152, %v352, %v526
      %v1162 = vsel %vm1152, %v353, %v528
      %v1164 = vsel %vm1152, %v354, %v530
      %v1166 = vsel %vm1152, %v355, %v532
      %v1168 = vsel %vm1152, %v356, %v534
      %v1170 = vsel %vm1152, %v357, %v536
      %v1172 = vsel %vm1152, %v358, %v538
      %v1174 = vsel %vm1152, %v359, %v540
      %v1176 = vsel %vm1152, %v360, %v542
      %v1178 = vsel %vm1152, %v361, %v544
      %v1180 = vsel %vm1152, %v362, %v546
      %v1182 = vsel %vm1152, %v363, %v548
      %v1184 = vsel %vm1152, %v364, %v550
      %v1186 = vsel %vm1152, %v365, %v552
      %v1188 = vsel %vm1152, %v366, %v554
      %vm1189 = vcmask 64512
      %v1191 = vsel %vm1189, %v1154, %v597
      %v1193 = vsel %vm1189, %v1156, %v599
      %v1195 = vsel %vm1189, %v1158, %v601
      %v1197 = vsel %vm1189, %v1160, %v603
      %v1199 = vsel %vm1189, %v1162, %v605
      %v1201 = vsel %vm1189, %v1164, %v607
      %v1203 = vsel %vm1189, %v1166, %v609
      %v1205 = vsel %vm1189, %v1168, %v611
      %v1207 = vsel %vm1189, %v1170, %v613
      %v1209 = vsel %vm1189, %v1172, %v615
      %v1211 = vsel %vm1189, %v1174, %v617
      %v1213 = vsel %vm1189, %v1176, %v619
      %v1215 = vsel %vm1189, %v1178, %v621
      %v1217 = vsel %vm1189, %v1180, %v623
      %v1219 = vsel %vm1189, %v1182, %v625
      %v1221 = vsel %vm1189, %v1184, %v627
      %v1223 = vsel %vm1189, %v1186, %v629
      %v1225 = vsel %vm1189, %v1188, %v631
      %vm1226 = vcmask 97280
      %v1228 = vsel %vm1226, %v1191, %v650
      %v1230 = vsel %vm1226, %v1193, %v652
      %v1232 = vsel %vm1226, %v1195, %v654
      %v1234 = vsel %vm1226, %v1197, %v656
      %v1236 = vsel %vm1226, %v1199, %v658
      %v1238 = vsel %vm1226, %v1201, %v660
      %v1240 = vsel %vm1226, %v1203, %v662
      %v1242 = vsel %vm1226, %v1205, %v664
      %v1244 = vsel %vm1226, %v1207, %v666
      %v1246 = vsel %vm1226, %v1209, %v668
      %v1248 = vsel %vm1226, %v1211, %v670
      %v1250 = vsel %vm1226, %v1213, %v672
      %v1252 = vsel %vm1226, %v1215, %v674
      %v1254 = vsel %vm1226, %v1217, %v676
      %v1256 = vsel %vm1226, %v1219, %v678
      %v1258 = vsel %vm1226, %v1221, %v680
      %v1260 = vsel %vm1226, %v1223, %v682
      %v1262 = vsel %vm1226, %v1225, %v684
      %vm1263 = vcmask 130048
      %v1265 = vsel %vm1263, %v1228, %v780
      %v1267 = vsel %vm1263, %v1230, %v782
      %v1269 = vsel %vm1263, %v1232, %v784
      %v1271 = vsel %vm1263, %v1234, %v786
      %v1273 = vsel %vm1263, %v1236, %v788
      %v1275 = vsel %vm1263, %v1238, %v790
      %v1277 = vsel %vm1263, %v1240, %v792
      %v1279 = vsel %vm1263, %v1242, %v794
      %v1281 = vsel %vm1263, %v1244, %v796
      %v1283 = vsel %vm1263, %v1246, %v798
      %v1285 = vsel %vm1263, %v1248, %v800
      %v1287 = vsel %vm1263, %v1250, %v802
      %v1289 = vsel %vm1263, %v1252, %v804
      %v1291 = vsel %vm1263, %v1254, %v806
      %v1293 = vsel %vm1263, %v1256, %v808
      %v1295 = vsel %vm1263, %v1258, %v810
      %v1297 = vsel %vm1263, %v1260, %v812
      %v1299 = vsel %vm1263, %v1262, %v814
      %vm1300 = vcmask 162816
      %v1302 = vsel %vm1300, %v1265, %v857
      %v1304 = vsel %vm1300, %v1267, %v859
      %v1306 = vsel %vm1300, %v1269, %v861
      %v1308 = vsel %vm1300, %v1271, %v863
      %v1310 = vsel %vm1300, %v1273, %v865
      %v1312 = vsel %vm1300, %v1275, %v867
      %v1314 = vsel %vm1300, %v1277, %v869
      %v1316 = vsel %vm1300, %v1279, %v871
      %v1318 = vsel %vm1300, %v1281, %v873
      %v1320 = vsel %vm1300, %v1283, %v875
      %v1322 = vsel %vm1300, %v1285, %v877
      %v1324 = vsel %vm1300, %v1287, %v879
      %v1326 = vsel %vm1300, %v1289, %v881
      %v1328 = vsel %vm1300, %v1291, %v883
      %v1330 = vsel %vm1300, %v1293, %v885
      %v1332 = vsel %vm1300, %v1295, %v887
      %v1334 = vsel %vm1300, %v1297, %v889
      %v1336 = vsel %vm1300, %v1299, %v891
      %vm1337 = vcmask 195584
      %v1339 = vsel %vm1337, %v1302, %v910
      %v1341 = vsel %vm1337, %v1304, %v912
      %v1343 = vsel %vm1337, %v1306, %v914
      %v1345 = vsel %vm1337, %v1308, %v916
      %v1347 = vsel %vm1337, %v1310, %v918
      %v1349 = vsel %vm1337, %v1312, %v920
      %v1351 = vsel %vm1337, %v1314, %v922
      %v1353 = vsel %vm1337, %v1316, %v924
      %v1355 = vsel %vm1337, %v1318, %v926
      %v1357 = vsel %vm1337, %v1320, %v928
      %v1359 = vsel %vm1337, %v1322, %v930
      %v1361 = vsel %vm1337, %v1324, %v932
      %v1363 = vsel %vm1337, %v1326, %v934
      %v1365 = vsel %vm1337, %v1328, %v936
      %v1367 = vsel %vm1337, %v1330, %v938
      %v1369 = vsel %vm1337, %v1332, %v940
      %v1371 = vsel %vm1337, %v1334, %v942
      %v1373 = vsel %vm1337, %v1336, %v944
      %vm1374 = vcmask 228352
      %v1376 = vsel %vm1374, %v1339, %v1040
      %v1378 = vsel %vm1374, %v1341, %v1042
      %v1380 = vsel %vm1374, %v1343, %v1044
      %v1382 = vsel %vm1374, %v1345, %v1046
      %v1384 = vsel %vm1374, %v1347, %v1048
      %v1386 = vsel %vm1374, %v1349, %v1050
      %v1388 = vsel %vm1374, %v1351, %v1052
      %v1390 = vsel %vm1374, %v1353, %v1054
      %v1392 = vsel %vm1374, %v1355, %v1056
      %v1394 = vsel %vm1374, %v1357, %v1058
      %v1396 = vsel %vm1374, %v1359, %v1060
      %v1398 = vsel %vm1374, %v1361, %v1062
      %v1400 = vsel %vm1374, %v1363, %v1064
      %v1402 = vsel %vm1374, %v1365, %v1066
      %v1404 = vsel %vm1374, %v1367, %v1068
      %v1406 = vsel %vm1374, %v1369, %v1070
      %v1408 = vsel %vm1374, %v1371, %v1072
      %v1410 = vsel %vm1374, %v1373, %v1074
      %vm1411 = vcmask 261120
      %v1413 = vsel %vm1411, %v1376, %v1117
      %v1415 = vsel %vm1411, %v1378, %v1119
      %v1417 = vsel %vm1411, %v1380, %v1121
      %v1419 = vsel %vm1411, %v1382, %v1123
      %v1421 = vsel %vm1411, %v1384, %v1125
      %v1423 = vsel %vm1411, %v1386, %v1127
      %v1425 = vsel %vm1411, %v1388, %v1129
      %v1427 = vsel %vm1411, %v1390, %v1131
      %v1429 = vsel %vm1411, %v1392, %v1133
      %v1431 = vsel %vm1411, %v1394, %v1135
      %v1433 = vsel %vm1411, %v1396, %v1137
      %v1435 = vsel %vm1411, %v1398, %v1139
      %v1437 = vsel %vm1411, %v1400, %v1141
      %v1439 = vsel %vm1411, %v1402, %v1143
      %v1441 = vsel %vm1411, %v1404, %v1145
      %v1443 = vsel %vm1411, %v1406, %v1147
      %v1445 = vsel %vm1411, %v1408, %v1149
      %v1447 = vsel %vm1411, %v1410, %v1151
      %v1448 = vld [vmem:[%s1] sm:$0xf]
      %v1449 = vld [vmem:[%s1 + $0x4] sm:$0xf]
      %v1450 = vld [vmem:[%s1 + $0x8] sm:$0xf]
      %v1451 = vld [vmem:[%s1 + $0xc] sm:$0xf]
      %v1452 = vld [vmem:[%s1 + $0x10] sm:$0x3]
      %v1458 = vunpack.c.l.b16 %v1448
      %v1459 = vunpack.c.l.b16 %v1449
      %v1460 = vunpack.c.l.b16 %v1450
      %v1461 = vunpack.c.l.b16 %v1451
      %v1462 = vunpack.c.l.b16 %v1452
      %v1463 = vpack.c.b16 %v1459, %v1458
      %v1464 = vpack.c.b16 %v1461, %v1460
      %v1465 = vpack.c.b16 %v1462, %v1462
      %vm1468 = vcmask 293888
      %v1469 = vsel %vm1468, %v1413, 0
      %v1471 = vsel %vm1468, %v1415, 0
      %v1473 = vsel %vm1468, %v1417, 0
      %v1475 = vsel %vm1468, %v1419, 0
      %v1477 = vsel %vm1468, %v1421, 0
      %v1479 = vsel %vm1468, %v1423, 0
      %v1481 = vsel %vm1468, %v1425, 0
      %v1483 = vsel %vm1468, %v1427, 0
      %v1485 = vsel %vm1468, %v1429, 0
      %v1487 = vsel %vm1468, %v1431, 0
      %v1489 = vsel %vm1468, %v1433, 0
      %v1491 = vsel %vm1468, %v1435, 0
      %v1493 = vsel %vm1468, %v1437, 0
      %v1495 = vsel %vm1468, %v1439, 0
      %v1497 = vsel %vm1468, %v1441, 0
      %v1499 = vsel %vm1468, %v1443, 0
      %v1501 = vsel %vm1468, %v1445, 0
      %v1503 = vsel %vm1468, %v1447, 0
      %vm1505 = vcmask 1041408
      %v1507 = vsel %vm1505, %v1465, 0
      %1509 = vmatpush.bf16.msra.mxu0 0
      %1510 = vmatpush.bf16.msra.mxu0 0
      %1511 = vmatpush.bf16.msra.mxu0 0
      %1512 = vmatpush.bf16.msra.mxu0 0
      %1513 = vmatpush.bf16.msra.mxu0 0
      %1514 = vmatpush.bf16.msra.mxu0 %v1507
      %1515 = vmatpush.bf16.msra.mxu0 %v1464
      %1516 = vmatpush.bf16.msra.mxu0 %v1463
      %1517 = vmatmul.bf16.gmra.mxu0 %v1469
      %v1518 = vpop.f32.mrf.mxu0
      %v1519 = vadd.f32 0.0, %v1518
      %v1520 = vpop.f32.mrf.mxu0
      %v1521 = vadd.f32 0.0, %v1520
      %1522 = vmatmul.bf16.gmra.mxu0 %v1471
      %v1523 = vpop.f32.mrf.mxu0
      %v1524 = vadd.f32 0.0, %v1523
      %v1525 = vpop.f32.mrf.mxu0
      %v1526 = vadd.f32 0.0, %v1525
      %1527 = vmatmul.bf16.gmra.mxu0 %v1473
      %v1528 = vpop.f32.mrf.mxu0
      %v1529 = vadd.f32 0.0, %v1528
      %v1530 = vpop.f32.mrf.mxu0
      %v1531 = vadd.f32 0.0, %v1530
      %1532 = vmatmul.bf16.gmra.mxu0 %v1475
      %v1533 = vpop.f32.mrf.mxu0
      %v1534 = vadd.f32 0.0, %v1533
      %v1535 = vpop.f32.mrf.mxu0
      %v1536 = vadd.f32 0.0, %v1535
      %1537 = vmatmul.bf16.gmra.mxu0 %v1477
      %v1538 = vpop.f32.mrf.mxu0
      %v1539 = vadd.f32 0.0, %v1538
      %v1540 = vpop.f32.mrf.mxu0
      %v1541 = vadd.f32 0.0, %v1540
      %1542 = vmatmul.bf16.gmra.mxu0 %v1479
      %v1543 = vpop.f32.mrf.mxu0
      %v1544 = vadd.f32 0.0, %v1543
      %v1545 = vpop.f32.mrf.mxu0
      %v1546 = vadd.f32 0.0, %v1545
      %1547 = vmatmul.bf16.gmra.mxu0 %v1481
      %v1548 = vpop.f32.mrf.mxu0
      %v1549 = vadd.f32 0.0, %v1548
      %v1550 = vpop.f32.mrf.mxu0
      %v1551 = vadd.f32 0.0, %v1550
      %1552 = vmatmul.bf16.gmra.mxu0 %v1483
      %v1553 = vpop.f32.mrf.mxu0
      %v1554 = vadd.f32 0.0, %v1553
      %v1555 = vpop.f32.mrf.mxu0
      %v1556 = vadd.f32 0.0, %v1555
      %1557 = vmatmul.bf16.gmra.mxu0 %v1485
      %v1558 = vpop.f32.mrf.mxu0
      %v1559 = vadd.f32 0.0, %v1558
      %v1560 = vpop.f32.mrf.mxu0
      %v1561 = vadd.f32 0.0, %v1560
      %1562 = vmatmul.bf16.gmra.mxu0 %v1487
      %v1563 = vpop.f32.mrf.mxu0
      %v1564 = vadd.f32 0.0, %v1563
      %v1565 = vpop.f32.mrf.mxu0
      %v1566 = vadd.f32 0.0, %v1565
      %1567 = vmatmul.bf16.gmra.mxu0 %v1489
      %v1568 = vpop.f32.mrf.mxu0
      %v1569 = vadd.f32 0.0, %v1568
      %v1570 = vpop.f32.mrf.mxu0
      %v1571 = vadd.f32 0.0, %v1570
      %1572 = vmatmul.bf16.gmra.mxu0 %v1491
      %v1573 = vpop.f32.mrf.mxu0
      %v1574 = vadd.f32 0.0, %v1573
      %v1575 = vpop.f32.mrf.mxu0
      %v1576 = vadd.f32 0.0, %v1575
      %1577 = vmatmul.bf16.gmra.mxu0 %v1493
      %v1578 = vpop.f32.mrf.mxu0
      %v1579 = vadd.f32 0.0, %v1578
      %v1580 = vpop.f32.mrf.mxu0
      %v1581 = vadd.f32 0.0, %v1580
      %1582 = vmatmul.bf16.gmra.mxu0 %v1495
      %v1583 = vpop.f32.mrf.mxu0
      %v1584 = vadd.f32 0.0, %v1583
      %v1585 = vpop.f32.mrf.mxu0
      %v1586 = vadd.f32 0.0, %v1585
      %1587 = vmatmul.bf16.gmra.mxu0 %v1497
      %v1588 = vpop.f32.mrf.mxu0
      %v1589 = vadd.f32 0.0, %v1588
      %v1590 = vpop.f32.mrf.mxu0
      %v1591 = vadd.f32 0.0, %v1590
      %1592 = vmatmul.bf16.gmra.mxu0 %v1499
      %v1593 = vpop.f32.mrf.mxu0
      %v1594 = vadd.f32 0.0, %v1593
      %v1595 = vpop.f32.mrf.mxu0
      %v1596 = vadd.f32 0.0, %v1595
      %1597 = vmatmul.bf16.gmra.mxu0 %v1501
      %v1598 = vpop.f32.mrf.mxu0
      %v1599 = vadd.f32 0.0, %v1598
      %v1600 = vpop.f32.mrf.mxu0
      %v1601 = vadd.f32 0.0, %v1600
      %1602 = vmatmul.bf16.gmra.mxu0 %v1503
      %v1603 = vpop.f32.mrf.mxu0
      %v1604 = vadd.f32 0.0, %v1603
      %v1605 = vpop.f32.mrf.mxu0
      %v1606 = vadd.f32 0.0, %v1605
      %1607 = vdwg.mxu0
      %v1608 = vpack.c.bf16 %v1519, %v1519
      %v1609 = vpack.c.bf16 %v1521, %v1521
      %v1610 = vpack.c.bf16 %v1524, %v1524
      %v1611 = vpack.c.bf16 %v1526, %v1526
      %v1612 = vpack.c.bf16 %v1529, %v1529
      %v1613 = vpack.c.bf16 %v1531, %v1531
      %v1614 = vpack.c.bf16 %v1534, %v1534
      %v1615 = vpack.c.bf16 %v1536, %v1536
      %v1616 = vpack.c.bf16 %v1539, %v1539
      %v1617 = vpack.c.bf16 %v1541, %v1541
      %v1618 = vpack.c.bf16 %v1544, %v1544
      %v1619 = vpack.c.bf16 %v1546, %v1546
      %v1620 = vpack.c.bf16 %v1549, %v1549
      %v1621 = vpack.c.bf16 %v1551, %v1551
      %v1622 = vpack.c.bf16 %v1554, %v1554
      %v1623 = vpack.c.bf16 %v1556, %v1556
      %v1624 = vpack.c.bf16 %v1559, %v1559
      %v1625 = vpack.c.bf16 %v1561, %v1561
      %v1626 = vpack.c.bf16 %v1564, %v1564
      %v1627 = vpack.c.bf16 %v1566, %v1566
      %v1628 = vpack.c.bf16 %v1569, %v1569
      %v1629 = vpack.c.bf16 %v1571, %v1571
      %v1630 = vpack.c.bf16 %v1574, %v1574
      %v1631 = vpack.c.bf16 %v1576, %v1576
      %v1632 = vpack.c.bf16 %v1579, %v1579
      %v1633 = vpack.c.bf16 %v1581, %v1581
      %v1634 = vpack.c.bf16 %v1584, %v1584
      %v1635 = vpack.c.bf16 %v1586, %v1586
      %v1636 = vpack.c.bf16 %v1589, %v1589
      %v1637 = vpack.c.bf16 %v1591, %v1591
      %v1638 = vpack.c.bf16 %v1594, %v1594
      %v1639 = vpack.c.bf16 %v1596, %v1596
      %v1640 = vpack.c.bf16 %v1599, %v1599
      %v1641 = vpack.c.bf16 %v1601, %v1601
      %v1642 = vpack.c.bf16 %v1604, %v1604
      %v1643 = vpack.c.bf16 %v1606, %v1606
      %vm1644 = vcmask 60416
      %1645 = vst.msk [vmem:[%s218] sm:$0xf] %vm1644, %v1608
      %1646 = vst.msk [vmem:[%s218 + $0x4] sm:$0xf] %vm1644, %v1609
      %1647 = vst.msk [vmem:[%s218 + $0x8] sm:$0xf] %vm1644, %v1610
      %1648 = vst.msk [vmem:[%s218 + $0xc] sm:$0xf] %vm1644, %v1611
      %1649 = vst.msk [vmem:[%s218 + $0x10] sm:$0xf] %vm1644, %v1612
      %1650 = vst.msk [vmem:[%s218 + $0x14] sm:$0xf] %vm1644, %v1613
      %1651 = vst.msk [vmem:[%s218 + $0x18] sm:$0xf] %vm1644, %v1614
      %1652 = vst.msk [vmem:[%s218 + $0x1c] sm:$0xf] %vm1644, %v1615
      %1653 = vst.msk [vmem:[%s218 + $0x20] sm:$0xf] %vm1644, %v1616
      %1654 = vst.msk [vmem:[%s218 + $0x24] sm:$0xf] %vm1644, %v1617
      %1655 = vst.msk [vmem:[%s218 + $0x28] sm:$0xf] %vm1644, %v1618
      %1656 = vst.msk [vmem:[%s218 + $0x2c] sm:$0xf] %vm1644, %v1619
      %1657 = vst.msk [vmem:[%s218 + $0x30] sm:$0xf] %vm1644, %v1620
      %1658 = vst.msk [vmem:[%s218 + $0x34] sm:$0xf] %vm1644, %v1621
      %1659 = vst.msk [vmem:[%s218 + $0x38] sm:$0xf] %vm1644, %v1622
      %1660 = vst.msk [vmem:[%s218 + $0x3c] sm:$0xf] %vm1644, %v1623
      %1661 = vst.msk [vmem:[%s218 + $0x40] sm:$0xf] %vm1644, %v1624
      %1662 = vst.msk [vmem:[%s218 + $0x44] sm:$0xf] %vm1644, %v1625
      %1663 = vst.msk [vmem:[%s218 + $0x48] sm:$0xf] %vm1644, %v1626
      %1664 = vst.msk [vmem:[%s218 + $0x4c] sm:$0xf] %vm1644, %v1627
      %1665 = vst.msk [vmem:[%s218 + $0x50] sm:$0xf] %vm1644, %v1628
      %1666 = vst.msk [vmem:[%s218 + $0x54] sm:$0xf] %vm1644, %v1629
      %1667 = vst.msk [vmem:[%s218 + $0x58] sm:$0xf] %vm1644, %v1630
      %1668 = vst.msk [vmem:[%s218 + $0x5c] sm:$0xf] %vm1644, %v1631
      %1669 = vst.msk [vmem:[%s218 + $0x60] sm:$0xf] %vm1644, %v1632
      %1670 = vst.msk [vmem:[%s218 + $0x64] sm:$0xf] %vm1644, %v1633
      %1671 = vst.msk [vmem:[%s218 + $0x68] sm:$0xf] %vm1644, %v1634
      %1672 = vst.msk [vmem:[%s218 + $0x6c] sm:$0xf] %vm1644, %v1635
      %1673 = vst.msk [vmem:[%s218 + $0x70] sm:$0xf] %vm1644, %v1636
      %1674 = vst.msk [vmem:[%s218 + $0x74] sm:$0xf] %vm1644, %v1637
      %1675 = vst.msk [vmem:[%s218 + $0x78] sm:$0xf] %vm1644, %v1638
      %1676 = vst.msk [vmem:[%s218 + $0x7c] sm:$0xf] %vm1644, %v1639
      %1677 = vst.msk [vmem:[%s218 + $0x80] sm:$0xf] %vm1644, %v1640
      %1678 = vst.msk [vmem:[%s218 + $0x84] sm:$0xf] %vm1644, %v1641
      %1679 = vst.msk [vmem:[%s218 + $0x88] sm:$0xf] %vm1644, %v1642
      %1680 = vst.msk [vmem:[%s218 + $0x8c] sm:$0xf] %vm1644, %v1643
      %v1681 = vlaneseq
      %v1682 = vshrl.u32 %v1681, 7
      %v1683 = vadd.s32 %v1682, 8
      %v1684 = vadd.s32 %v1682, 16
      %v1685 = vadd.s32 %v1682, 24
      %v1686 = vadd.s32 %v1682, 32
      %v1687 = vadd.s32 %v1682, 40
      %v1688 = vadd.s32 %v1682, 48
      %v1689 = vadd.s32 %v1682, 56
      %v1690 = vadd.s32 %v1682, 64
      %v1691 = vadd.s32 %v1682, 72
      %v1692 = vadd.s32 %v1682, 80
      %v1693 = vadd.s32 %v1682, 88
      %v1694 = vadd.s32 %v1682, 96
      %v1695 = vadd.s32 %v1682, 104
      %v1696 = vadd.s32 %v1682, 112
      %v1697 = vadd.s32 %v1682, 120
      %v1698 = vadd.s32 %v1682, 128
      %v1699 = vadd.s32 %v1682, 136
      %v1700 = vadd.s32 %v1682, 144
      %v1701 = vadd.s32 %v1682, 152
      %v1702 = vadd.s32 %v1682, 160
      %v1703 = vadd.s32 %v1682, 168
      %v1704 = vadd.s32 %v1682, 176
      %v1705 = vadd.s32 %v1682, 184
      %v1706 = vadd.s32 %v1682, 192
      %v1707 = vadd.s32 %v1682, 200
      %v1708 = vadd.s32 %v1682, 208
      %v1709 = vadd.s32 %v1682, 216
      %v1710 = vadd.s32 %v1682, 224
      %v1711 = vadd.s32 %v1682, 232
      %v1712 = vadd.s32 %v1682, 240
      %v1713 = vadd.s32 %v1682, 248
      %v1714 = vadd.s32 %v1682, 256
      %v1715 = vadd.s32 %v1682, 264
      %v1716 = vadd.s32 %v1682, 272
      %v1717 = vadd.s32 %v1682, 280
      %vm1718 = vcmp.lt.s32.totalorder %v1682, 0
      %v1719 = vsub.s32 0, %v1682
      %v1720 = vsel %vm1718, %v1719, %v1682
      %v1721 = vand.u32 %v1720, 65535
      %v1722 = vshrl.u32 %v1720, 16
      %v1724 = vmul.u32 %v1721, 14564
      %v1725 = vmul.u32 %v1721, 58254
      %v1726 = vmul.u32 %v1722, 14564
      %v1727 = vmul.u32 %v1722, 58254
      %v1728 = vshll.u32 %v1725, 16
      %v1729 = vshrl.u32 %v1725, 16
      %v1730 = vshll.u32 %v1726, 16
      %v1731 = vshrl.u32 %v1726, 16
      %vm1732 = vc.u32 %v1724, %v1728
      %v1733 = vsel %vm1732, 1, 0
      %v1734 = vadd.s32 %v1724, %v1728
      %v1735 = vadd.s32 %v1727, %v1733
      %vm1736 = vc.u32 %v1734, %v1730
      %v1737 = vsel %vm1736, 1, 0
      %v1738 = vadd.s32 %v1734, %v1730
      %v1739 = vadd.s32 %v1735, %v1737
      %v1740 = vadd.s32 %v1739, %v1729
      %v1741 = vadd.s32 %v1740, %v1731
      %v1742 = vshrl.u32 %v1741, 4
      %v1743 = vmul.u32 %v1742, 18
      %v1744 = vsub.s32 %v1720, %v1743
      %v1745 = vsub.s32 0, %v1744
      %v1746 = vsel %vm1718, %v1745, %v1744
      %vm1747 = vcmp.lt.s32.totalorder %v1683, 0
      %v1748 = vsub.s32 0, %v1683
      %v1749 = vsel %vm1747, %v1748, %v1683
      %v1750 = vand.u32 %v1749, 65535
      %v1751 = vshrl.u32 %v1749, 16
      %v1753 = vmul.u32 %v1750, 14564
      %v1754 = vmul.u32 %v1750, 58254
      %v1755 = vmul.u32 %v1751, 14564
      %v1756 = vmul.u32 %v1751, 58254
      %v1757 = vshll.u32 %v1754, 16
      %v1758 = vshrl.u32 %v1754, 16
      %v1759 = vshll.u32 %v1755, 16
      %v1760 = vshrl.u32 %v1755, 16
      %vm1761 = vc.u32 %v1753, %v1757
      %v1762 = vsel %vm1761, 1, 0
      %v1763 = vadd.s32 %v1753, %v1757
      %v1764 = vadd.s32 %v1756, %v1762
      %vm1765 = vc.u32 %v1763, %v1759
      %v1766 = vsel %vm1765, 1, 0
      %v1767 = vadd.s32 %v1763, %v1759
      %v1768 = vadd.s32 %v1764, %v1766
      %v1769 = vadd.s32 %v1768, %v1758
      %v1770 = vadd.s32 %v1769, %v1760
      %v1771 = vshrl.u32 %v1770, 4
      %v1772 = vmul.u32 %v1771, 18
      %v1773 = vsub.s32 %v1749, %v1772
      %v1774 = vsub.s32 0, %v1773
      %v1775 = vsel %vm1747, %v1774, %v1773
      %vm1776 = vcmp.lt.s32.totalorder %v1684, 0
      %v1777 = vsub.s32 0, %v1684
      %v1778 = vsel %vm1776, %v1777, %v1684
      %v1779 = vand.u32 %v1778, 65535
      %v1780 = vshrl.u32 %v1778, 16
      %v1782 = vmul.u32 %v1779, 14564
      %v1783 = vmul.u32 %v1779, 58254
      %v1784 = vmul.u32 %v1780, 14564
      %v1785 = vmul.u32 %v1780, 58254
      %v1786 = vshll.u32 %v1783, 16
      %v1787 = vshrl.u32 %v1783, 16
      %v1788 = vshll.u32 %v1784, 16
      %v1789 = vshrl.u32 %v1784, 16
      %vm1790 = vc.u32 %v1782, %v1786
      %v1791 = vsel %vm1790, 1, 0
      %v1792 = vadd.s32 %v1782, %v1786
      %v1793 = vadd.s32 %v1785, %v1791
      %vm1794 = vc.u32 %v1792, %v1788
      %v1795 = vsel %vm1794, 1, 0
      %v1796 = vadd.s32 %v1792, %v1788
      %v1797 = vadd.s32 %v1793, %v1795
      %v1798 = vadd.s32 %v1797, %v1787
      %v1799 = vadd.s32 %v1798, %v1789
      %v1800 = vshrl.u32 %v1799, 4
      %v1801 = vmul.u32 %v1800, 18
      %v1802 = vsub.s32 %v1778, %v1801
      %v1803 = vsub.s32 0, %v1802
      %v1804 = vsel %vm1776, %v1803, %v1802
      %vm1805 = vcmp.lt.s32.totalorder %v1685, 0
      %v1806 = vsub.s32 0, %v1685
      %v1807 = vsel %vm1805, %v1806, %v1685
      %v1808 = vand.u32 %v1807, 65535
      %v1809 = vshrl.u32 %v1807, 16
      %v1811 = vmul.u32 %v1808, 14564
      %v1812 = vmul.u32 %v1808, 58254
      %v1813 = vmul.u32 %v1809, 14564
      %v1814 = vmul.u32 %v1809, 58254
      %v1815 = vshll.u32 %v1812, 16
      %v1816 = vshrl.u32 %v1812, 16
      %v1817 = vshll.u32 %v1813, 16
      %v1818 = vshrl.u32 %v1813, 16
      %vm1819 = vc.u32 %v1811, %v1815
      %v1820 = vsel %vm1819, 1, 0
      %v1821 = vadd.s32 %v1811, %v1815
      %v1822 = vadd.s32 %v1814, %v1820
      %vm1823 = vc.u32 %v1821, %v1817
      %v1824 = vsel %vm1823, 1, 0
      %v1825 = vadd.s32 %v1821, %v1817
      %v1826 = vadd.s32 %v1822, %v1824
      %v1827 = vadd.s32 %v1826, %v1816
      %v1828 = vadd.s32 %v1827, %v1818
      %v1829 = vshrl.u32 %v1828, 4
      %v1830 = vmul.u32 %v1829, 18
      %v1831 = vsub.s32 %v1807, %v1830
      %v1832 = vsub.s32 0, %v1831
      %v1833 = vsel %vm1805, %v1832, %v1831
      %vm1834 = vcmp.lt.s32.totalorder %v1686, 0
      %v1835 = vsub.s32 0, %v1686
      %v1836 = vsel %vm1834, %v1835, %v1686
      %v1837 = vand.u32 %v1836, 65535
      %v1838 = vshrl.u32 %v1836, 16
      %v1840 = vmul.u32 %v1837, 14564
      %v1841 = vmul.u32 %v1837, 58254
      %v1842 = vmul.u32 %v1838, 14564
      %v1843 = vmul.u32 %v1838, 58254
      %v1844 = vshll.u32 %v1841, 16
      %v1845 = vshrl.u32 %v1841, 16
      %v1846 = vshll.u32 %v1842, 16
      %v1847 = vshrl.u32 %v1842, 16
      %vm1848 = vc.u32 %v1840, %v1844
      %v1849 = vsel %vm1848, 1, 0
      %v1850 = vadd.s32 %v1840, %v1844
      %v1851 = vadd.s32 %v1843, %v1849
      %vm1852 = vc.u32 %v1850, %v1846
      %v1853 = vsel %vm1852, 1, 0
      %v1854 = vadd.s32 %v1850, %v1846
      %v1855 = vadd.s32 %v1851, %v1853
      %v1856 = vadd.s32 %v1855, %v1845
      %v1857 = vadd.s32 %v1856, %v1847
      %v1858 = vshrl.u32 %v1857, 4
      %v1859 = vmul.u32 %v1858, 18
      %v1860 = vsub.s32 %v1836, %v1859
      %v1861 = vsub.s32 0, %v1860
      %v1862 = vsel %vm1834, %v1861, %v1860
      %vm1863 = vcmp.lt.s32.totalorder %v1687, 0
      %v1864 = vsub.s32 0, %v1687
      %v1865 = vsel %vm1863, %v1864, %v1687
      %v1866 = vand.u32 %v1865, 65535
      %v1867 = vshrl.u32 %v1865, 16
      %v1869 = vmul.u32 %v1866, 14564
      %v1870 = vmul.u32 %v1866, 58254
      %v1871 = vmul.u32 %v1867, 14564
      %v1872 = vmul.u32 %v1867, 58254
      %v1873 = vshll.u32 %v1870, 16
      %v1874 = vshrl.u32 %v1870, 16
      %v1875 = vshll.u32 %v1871, 16
      %v1876 = vshrl.u32 %v1871, 16
      %vm1877 = vc.u32 %v1869, %v1873
      %v1878 = vsel %vm1877, 1, 0
      %v1879 = vadd.s32 %v1869, %v1873
      %v1880 = vadd.s32 %v1872, %v1878
      %vm1881 = vc.u32 %v1879, %v1875
      %v1882 = vsel %vm1881, 1, 0
      %v1883 = vadd.s32 %v1879, %v1875
      %v1884 = vadd.s32 %v1880, %v1882
      %v1885 = vadd.s32 %v1884, %v1874
      %v1886 = vadd.s32 %v1885, %v1876
      %v1887 = vshrl.u32 %v1886, 4
      %v1888 = vmul.u32 %v1887, 18
      %v1889 = vsub.s32 %v1865, %v1888
      %v1890 = vsub.s32 0, %v1889
      %v1891 = vsel %vm1863, %v1890, %v1889
      %vm1892 = vcmp.lt.s32.totalorder %v1688, 0
      %v1893 = vsub.s32 0, %v1688
      %v1894 = vsel %vm1892, %v1893, %v1688
      %v1895 = vand.u32 %v1894, 65535
      %v1896 = vshrl.u32 %v1894, 16
      %v1898 = vmul.u32 %v1895, 14564
      %v1899 = vmul.u32 %v1895, 58254
      %v1900 = vmul.u32 %v1896, 14564
      %v1901 = vmul.u32 %v1896, 58254
      %v1902 = vshll.u32 %v1899, 16
      %v1903 = vshrl.u32 %v1899, 16
      %v1904 = vshll.u32 %v1900, 16
      %v1905 = vshrl.u32 %v1900, 16
      %vm1906 = vc.u32 %v1898, %v1902
      %v1907 = vsel %vm1906, 1, 0
      %v1908 = vadd.s32 %v1898, %v1902
      %v1909 = vadd.s32 %v1901, %v1907
      %vm1910 = vc.u32 %v1908, %v1904
      %v1911 = vsel %vm1910, 1, 0
      %v1912 = vadd.s32 %v1908, %v1904
      %v1913 = vadd.s32 %v1909, %v1911
      %v1914 = vadd.s32 %v1913, %v1903
      %v1915 = vadd.s32 %v1914, %v1905
      %v1916 = vshrl.u32 %v1915, 4
      %v1917 = vmul.u32 %v1916, 18
      %v1918 = vsub.s32 %v1894, %v1917
      %v1919 = vsub.s32 0, %v1918
      %v1920 = vsel %vm1892, %v1919, %v1918
      %vm1921 = vcmp.lt.s32.totalorder %v1689, 0
      %v1922 = vsub.s32 0, %v1689
      %v1923 = vsel %vm1921, %v1922, %v1689
      %v1924 = vand.u32 %v1923, 65535
      %v1925 = vshrl.u32 %v1923, 16
      %v1927 = vmul.u32 %v1924, 14564
      %v1928 = vmul.u32 %v1924, 58254
      %v1929 = vmul.u32 %v1925, 14564
      %v1930 = vmul.u32 %v1925, 58254
      %v1931 = vshll.u32 %v1928, 16
      %v1932 = vshrl.u32 %v1928, 16
      %v1933 = vshll.u32 %v1929, 16
      %v1934 = vshrl.u32 %v1929, 16
      %vm1935 = vc.u32 %v1927, %v1931
      %v1936 = vsel %vm1935, 1, 0
      %v1937 = vadd.s32 %v1927, %v1931
      %v1938 = vadd.s32 %v1930, %v1936
      %vm1939 = vc.u32 %v1937, %v1933
      %v1940 = vsel %vm1939, 1, 0
      %v1941 = vadd.s32 %v1937, %v1933
      %v1942 = vadd.s32 %v1938, %v1940
      %v1943 = vadd.s32 %v1942, %v1932
      %v1944 = vadd.s32 %v1943, %v1934
      %v1945 = vshrl.u32 %v1944, 4
      %v1946 = vmul.u32 %v1945, 18
      %v1947 = vsub.s32 %v1923, %v1946
      %v1948 = vsub.s32 0, %v1947
      %v1949 = vsel %vm1921, %v1948, %v1947
      %vm1950 = vcmp.lt.s32.totalorder %v1690, 0
      %v1951 = vsub.s32 0, %v1690
      %v1952 = vsel %vm1950, %v1951, %v1690
      %v1953 = vand.u32 %v1952, 65535
      %v1954 = vshrl.u32 %v1952, 16
      %v1956 = vmul.u32 %v1953, 14564
      %v1957 = vmul.u32 %v1953, 58254
      %v1958 = vmul.u32 %v1954, 14564
      %v1959 = vmul.u32 %v1954, 58254
      %v1960 = vshll.u32 %v1957, 16
      %v1961 = vshrl.u32 %v1957, 16
      %v1962 = vshll.u32 %v1958, 16
      %v1963 = vshrl.u32 %v1958, 16
      %vm1964 = vc.u32 %v1956, %v1960
      %v1965 = vsel %vm1964, 1, 0
      %v1966 = vadd.s32 %v1956, %v1960
      %v1967 = vadd.s32 %v1959, %v1965
      %vm1968 = vc.u32 %v1966, %v1962
      %v1969 = vsel %vm1968, 1, 0
      %v1970 = vadd.s32 %v1966, %v1962
      %v1971 = vadd.s32 %v1967, %v1969
      %v1972 = vadd.s32 %v1971, %v1961
      %v1973 = vadd.s32 %v1972, %v1963
      %v1974 = vshrl.u32 %v1973, 4
      %v1975 = vmul.u32 %v1974, 18
      %v1976 = vsub.s32 %v1952, %v1975
      %v1977 = vsub.s32 0, %v1976
      %v1978 = vsel %vm1950, %v1977, %v1976
      %vm1979 = vcmp.lt.s32.totalorder %v1691, 0
      %v1980 = vsub.s32 0, %v1691
      %v1981 = vsel %vm1979, %v1980, %v1691
      %v1982 = vand.u32 %v1981, 65535
      %v1983 = vshrl.u32 %v1981, 16
      %v1985 = vmul.u32 %v1982, 14564
      %v1986 = vmul.u32 %v1982, 58254
      %v1987 = vmul.u32 %v1983, 14564
      %v1988 = vmul.u32 %v1983, 58254
      %v1989 = vshll.u32 %v1986, 16
      %v1990 = vshrl.u32 %v1986, 16
      %v1991 = vshll.u32 %v1987, 16
      %v1992 = vshrl.u32 %v1987, 16
      %vm1993 = vc.u32 %v1985, %v1989
      %v1994 = vsel %vm1993, 1, 0
      %v1995 = vadd.s32 %v1985, %v1989
      %v1996 = vadd.s32 %v1988, %v1994
      %vm1997 = vc.u32 %v1995, %v1991
      %v1998 = vsel %vm1997, 1, 0
      %v1999 = vadd.s32 %v1995, %v1991
      %v2000 = vadd.s32 %v1996, %v1998
      %v2001 = vadd.s32 %v2000, %v1990
      %v2002 = vadd.s32 %v2001, %v1992
      %v2003 = vshrl.u32 %v2002, 4
      %v2004 = vmul.u32 %v2003, 18
      %v2005 = vsub.s32 %v1981, %v2004
      %v2006 = vsub.s32 0, %v2005
      %v2007 = vsel %vm1979, %v2006, %v2005
      %vm2008 = vcmp.lt.s32.totalorder %v1692, 0
      %v2009 = vsub.s32 0, %v1692
      %v2010 = vsel %vm2008, %v2009, %v1692
      %v2011 = vand.u32 %v2010, 65535
      %v2012 = vshrl.u32 %v2010, 16
      %v2014 = vmul.u32 %v2011, 14564
      %v2015 = vmul.u32 %v2011, 58254
      %v2016 = vmul.u32 %v2012, 14564
      %v2017 = vmul.u32 %v2012, 58254
      %v2018 = vshll.u32 %v2015, 16
      %v2019 = vshrl.u32 %v2015, 16
      %v2020 = vshll.u32 %v2016, 16
      %v2021 = vshrl.u32 %v2016, 16
      %vm2022 = vc.u32 %v2014, %v2018
      %v2023 = vsel %vm2022, 1, 0
      %v2024 = vadd.s32 %v2014, %v2018
      %v2025 = vadd.s32 %v2017, %v2023
      %vm2026 = vc.u32 %v2024, %v2020
      %v2027 = vsel %vm2026, 1, 0
      %v2028 = vadd.s32 %v2024, %v2020
      %v2029 = vadd.s32 %v2025, %v2027
      %v2030 = vadd.s32 %v2029, %v2019
      %v2031 = vadd.s32 %v2030, %v2021
      %v2032 = vshrl.u32 %v2031, 4
      %v2033 = vmul.u32 %v2032, 18
      %v2034 = vsub.s32 %v2010, %v2033
      %v2035 = vsub.s32 0, %v2034
      %v2036 = vsel %vm2008, %v2035, %v2034
      %vm2037 = vcmp.lt.s32.totalorder %v1693, 0
      %v2038 = vsub.s32 0, %v1693
      %v2039 = vsel %vm2037, %v2038, %v1693
      %v2040 = vand.u32 %v2039, 65535
      %v2041 = vshrl.u32 %v2039, 16
      %v2043 = vmul.u32 %v2040, 14564
      %v2044 = vmul.u32 %v2040, 58254
      %v2045 = vmul.u32 %v2041, 14564
      %v2046 = vmul.u32 %v2041, 58254
      %v2047 = vshll.u32 %v2044, 16
      %v2048 = vshrl.u32 %v2044, 16
      %v2049 = vshll.u32 %v2045, 16
      %v2050 = vshrl.u32 %v2045, 16
      %vm2051 = vc.u32 %v2043, %v2047
      %v2052 = vsel %vm2051, 1, 0
      %v2053 = vadd.s32 %v2043, %v2047
      %v2054 = vadd.s32 %v2046, %v2052
      %vm2055 = vc.u32 %v2053, %v2049
      %v2056 = vsel %vm2055, 1, 0
      %v2057 = vadd.s32 %v2053, %v2049
      %v2058 = vadd.s32 %v2054, %v2056
      %v2059 = vadd.s32 %v2058, %v2048
      %v2060 = vadd.s32 %v2059, %v2050
      %v2061 = vshrl.u32 %v2060, 4
      %v2062 = vmul.u32 %v2061, 18
      %v2063 = vsub.s32 %v2039, %v2062
      %v2064 = vsub.s32 0, %v2063
      %v2065 = vsel %vm2037, %v2064, %v2063
      %vm2066 = vcmp.lt.s32.totalorder %v1694, 0
      %v2067 = vsub.s32 0, %v1694
      %v2068 = vsel %vm2066, %v2067, %v1694
      %v2069 = vand.u32 %v2068, 65535
      %v2070 = vshrl.u32 %v2068, 16
      %v2072 = vmul.u32 %v2069, 14564
      %v2073 = vmul.u32 %v2069, 58254
      %v2074 = vmul.u32 %v2070, 14564
      %v2075 = vmul.u32 %v2070, 58254
      %v2076 = vshll.u32 %v2073, 16
      %v2077 = vshrl.u32 %v2073, 16
      %v2078 = vshll.u32 %v2074, 16
      %v2079 = vshrl.u32 %v2074, 16
      %vm2080 = vc.u32 %v2072, %v2076
      %v2081 = vsel %vm2080, 1, 0
      %v2082 = vadd.s32 %v2072, %v2076
      %v2083 = vadd.s32 %v2075, %v2081
      %vm2084 = vc.u32 %v2082, %v2078
      %v2085 = vsel %vm2084, 1, 0
      %v2086 = vadd.s32 %v2082, %v2078
      %v2087 = vadd.s32 %v2083, %v2085
      %v2088 = vadd.s32 %v2087, %v2077
      %v2089 = vadd.s32 %v2088, %v2079
      %v2090 = vshrl.u32 %v2089, 4
      %v2091 = vmul.u32 %v2090, 18
      %v2092 = vsub.s32 %v2068, %v2091
      %v2093 = vsub.s32 0, %v2092
      %v2094 = vsel %vm2066, %v2093, %v2092
      %vm2095 = vcmp.lt.s32.totalorder %v1695, 0
      %v2096 = vsub.s32 0, %v1695
      %v2097 = vsel %vm2095, %v2096, %v1695
      %v2098 = vand.u32 %v2097, 65535
      %v2099 = vshrl.u32 %v2097, 16
      %v2101 = vmul.u32 %v2098, 14564
      %v2102 = vmul.u32 %v2098, 58254
      %v2103 = vmul.u32 %v2099, 14564
      %v2104 = vmul.u32 %v2099, 58254
      %v2105 = vshll.u32 %v2102, 16
      %v2106 = vshrl.u32 %v2102, 16
      %v2107 = vshll.u32 %v2103, 16
      %v2108 = vshrl.u32 %v2103, 16
      %vm2109 = vc.u32 %v2101, %v2105
      %v2110 = vsel %vm2109, 1, 0
      %v2111 = vadd.s32 %v2101, %v2105
      %v2112 = vadd.s32 %v2104, %v2110
      %vm2113 = vc.u32 %v2111, %v2107
      %v2114 = vsel %vm2113, 1, 0
      %v2115 = vadd.s32 %v2111, %v2107
      %v2116 = vadd.s32 %v2112, %v2114
      %v2117 = vadd.s32 %v2116, %v2106
      %v2118 = vadd.s32 %v2117, %v2108
      %v2119 = vshrl.u32 %v2118, 4
      %v2120 = vmul.u32 %v2119, 18
      %v2121 = vsub.s32 %v2097, %v2120
      %v2122 = vsub.s32 0, %v2121
      %v2123 = vsel %vm2095, %v2122, %v2121
      %vm2124 = vcmp.lt.s32.totalorder %v1696, 0
      %v2125 = vsub.s32 0, %v1696
      %v2126 = vsel %vm2124, %v2125, %v1696
      %v2127 = vand.u32 %v2126, 65535
      %v2128 = vshrl.u32 %v2126, 16
      %v2130 = vmul.u32 %v2127, 14564
      %v2131 = vmul.u32 %v2127, 58254
      %v2132 = vmul.u32 %v2128, 14564
      %v2133 = vmul.u32 %v2128, 58254
      %v2134 = vshll.u32 %v2131, 16
      %v2135 = vshrl.u32 %v2131, 16
      %v2136 = vshll.u32 %v2132, 16
      %v2137 = vshrl.u32 %v2132, 16
      %vm2138 = vc.u32 %v2130, %v2134
      %v2139 = vsel %vm2138, 1, 0
      %v2140 = vadd.s32 %v2130, %v2134
      %v2141 = vadd.s32 %v2133, %v2139
      %vm2142 = vc.u32 %v2140, %v2136
      %v2143 = vsel %vm2142, 1, 0
      %v2144 = vadd.s32 %v2140, %v2136
      %v2145 = vadd.s32 %v2141, %v2143
      %v2146 = vadd.s32 %v2145, %v2135
      %v2147 = vadd.s32 %v2146, %v2137
      %v2148 = vshrl.u32 %v2147, 4
      %v2149 = vmul.u32 %v2148, 18
      %v2150 = vsub.s32 %v2126, %v2149
      %v2151 = vsub.s32 0, %v2150
      %v2152 = vsel %vm2124, %v2151, %v2150
      %vm2153 = vcmp.lt.s32.totalorder %v1697, 0
      %v2154 = vsub.s32 0, %v1697
      %v2155 = vsel %vm2153, %v2154, %v1697
      %v2156 = vand.u32 %v2155, 65535
      %v2157 = vshrl.u32 %v2155, 16
      %v2159 = vmul.u32 %v2156, 14564
      %v2160 = vmul.u32 %v2156, 58254
      %v2161 = vmul.u32 %v2157, 14564
      %v2162 = vmul.u32 %v2157, 58254
      %v2163 = vshll.u32 %v2160, 16
      %v2164 = vshrl.u32 %v2160, 16
      %v2165 = vshll.u32 %v2161, 16
      %v2166 = vshrl.u32 %v2161, 16
      %vm2167 = vc.u32 %v2159, %v2163
      %v2168 = vsel %vm2167, 1, 0
      %v2169 = vadd.s32 %v2159, %v2163
      %v2170 = vadd.s32 %v2162, %v2168
      %vm2171 = vc.u32 %v2169, %v2165
      %v2172 = vsel %vm2171, 1, 0
      %v2173 = vadd.s32 %v2169, %v2165
      %v2174 = vadd.s32 %v2170, %v2172
      %v2175 = vadd.s32 %v2174, %v2164
      %v2176 = vadd.s32 %v2175, %v2166
      %v2177 = vshrl.u32 %v2176, 4
      %v2178 = vmul.u32 %v2177, 18
      %v2179 = vsub.s32 %v2155, %v2178
      %v2180 = vsub.s32 0, %v2179
      %v2181 = vsel %vm2153, %v2180, %v2179
      %vm2182 = vcmp.lt.s32.totalorder %v1698, 0
      %v2183 = vsub.s32 0, %v1698
      %v2184 = vsel %vm2182, %v2183, %v1698
      %v2185 = vand.u32 %v2184, 65535
      %v2186 = vshrl.u32 %v2184, 16
      %v2188 = vmul.u32 %v2185, 14564
      %v2189 = vmul.u32 %v2185, 58254
      %v2190 = vmul.u32 %v2186, 14564
      %v2191 = vmul.u32 %v2186, 58254
      %v2192 = vshll.u32 %v2189, 16
      %v2193 = vshrl.u32 %v2189, 16
      %v2194 = vshll.u32 %v2190, 16
      %v2195 = vshrl.u32 %v2190, 16
      %vm2196 = vc.u32 %v2188, %v2192
      %v2197 = vsel %vm2196, 1, 0
      %v2198 = vadd.s32 %v2188, %v2192
      %v2199 = vadd.s32 %v2191, %v2197
      %vm2200 = vc.u32 %v2198, %v2194
      %v2201 = vsel %vm2200, 1, 0
      %v2202 = vadd.s32 %v2198, %v2194
      %v2203 = vadd.s32 %v2199, %v2201
      %v2204 = vadd.s32 %v2203, %v2193
      %v2205 = vadd.s32 %v2204, %v2195
      %v2206 = vshrl.u32 %v2205, 4
      %v2207 = vmul.u32 %v2206, 18
      %v2208 = vsub.s32 %v2184, %v2207
      %v2209 = vsub.s32 0, %v2208
      %v2210 = vsel %vm2182, %v2209, %v2208
      %vm2211 = vcmp.lt.s32.totalorder %v1699, 0
      %v2212 = vsub.s32 0, %v1699
      %v2213 = vsel %vm2211, %v2212, %v1699
      %v2214 = vand.u32 %v2213, 65535
      %v2215 = vshrl.u32 %v2213, 16
      %v2217 = vmul.u32 %v2214, 14564
      %v2218 = vmul.u32 %v2214, 58254
      %v2219 = vmul.u32 %v2215, 14564
      %v2220 = vmul.u32 %v2215, 58254
      %v2221 = vshll.u32 %v2218, 16
      %v2222 = vshrl.u32 %v2218, 16
      %v2223 = vshll.u32 %v2219, 16
      %v2224 = vshrl.u32 %v2219, 16
      %vm2225 = vc.u32 %v2217, %v2221
      %v2226 = vsel %vm2225, 1, 0
      %v2227 = vadd.s32 %v2217, %v2221
      %v2228 = vadd.s32 %v2220, %v2226
      %vm2229 = vc.u32 %v2227, %v2223
      %v2230 = vsel %vm2229, 1, 0
      %v2231 = vadd.s32 %v2227, %v2223
      %v2232 = vadd.s32 %v2228, %v2230
      %v2233 = vadd.s32 %v2232, %v2222
      %v2234 = vadd.s32 %v2233, %v2224
      %v2235 = vshrl.u32 %v2234, 4
      %v2236 = vmul.u32 %v2235, 18
      %v2237 = vsub.s32 %v2213, %v2236
      %v2238 = vsub.s32 0, %v2237
      %v2239 = vsel %vm2211, %v2238, %v2237
      %vm2240 = vcmp.lt.s32.totalorder %v1700, 0
      %v2241 = vsub.s32 0, %v1700
      %v2242 = vsel %vm2240, %v2241, %v1700
      %v2243 = vand.u32 %v2242, 65535
      %v2244 = vshrl.u32 %v2242, 16
      %v2246 = vmul.u32 %v2243, 14564
      %v2247 = vmul.u32 %v2243, 58254
      %v2248 = vmul.u32 %v2244, 14564
      %v2249 = vmul.u32 %v2244, 58254
      %v2250 = vshll.u32 %v2247, 16
      %v2251 = vshrl.u32 %v2247, 16
      %v2252 = vshll.u32 %v2248, 16
      %v2253 = vshrl.u32 %v2248, 16
      %vm2254 = vc.u32 %v2246, %v2250
      %v2255 = vsel %vm2254, 1, 0
      %v2256 = vadd.s32 %v2246, %v2250
      %v2257 = vadd.s32 %v2249, %v2255
      %vm2258 = vc.u32 %v2256, %v2252
      %v2259 = vsel %vm2258, 1, 0
      %v2260 = vadd.s32 %v2256, %v2252
      %v2261 = vadd.s32 %v2257, %v2259
      %v2262 = vadd.s32 %v2261, %v2251
      %v2263 = vadd.s32 %v2262, %v2253
      %v2264 = vshrl.u32 %v2263, 4
      %v2265 = vmul.u32 %v2264, 18
      %v2266 = vsub.s32 %v2242, %v2265
      %v2267 = vsub.s32 0, %v2266
      %v2268 = vsel %vm2240, %v2267, %v2266
      %vm2269 = vcmp.lt.s32.totalorder %v1701, 0
      %v2270 = vsub.s32 0, %v1701
      %v2271 = vsel %vm2269, %v2270, %v1701
      %v2272 = vand.u32 %v2271, 65535
      %v2273 = vshrl.u32 %v2271, 16
      %v2275 = vmul.u32 %v2272, 14564
      %v2276 = vmul.u32 %v2272, 58254
      %v2277 = vmul.u32 %v2273, 14564
      %v2278 = vmul.u32 %v2273, 58254
      %v2279 = vshll.u32 %v2276, 16
      %v2280 = vshrl.u32 %v2276, 16
      %v2281 = vshll.u32 %v2277, 16
      %v2282 = vshrl.u32 %v2277, 16
      %vm2283 = vc.u32 %v2275, %v2279
      %v2284 = vsel %vm2283, 1, 0
      %v2285 = vadd.s32 %v2275, %v2279
      %v2286 = vadd.s32 %v2278, %v2284
      %vm2287 = vc.u32 %v2285, %v2281
      %v2288 = vsel %vm2287, 1, 0
      %v2289 = vadd.s32 %v2285, %v2281
      %v2290 = vadd.s32 %v2286, %v2288
      %v2291 = vadd.s32 %v2290, %v2280
      %v2292 = vadd.s32 %v2291, %v2282
      %v2293 = vshrl.u32 %v2292, 4
      %v2294 = vmul.u32 %v2293, 18
      %v2295 = vsub.s32 %v2271, %v2294
      %v2296 = vsub.s32 0, %v2295
      %v2297 = vsel %vm2269, %v2296, %v2295
      %vm2298 = vcmp.lt.s32.totalorder %v1702, 0
      %v2299 = vsub.s32 0, %v1702
      %v2300 = vsel %vm2298, %v2299, %v1702
      %v2301 = vand.u32 %v2300, 65535
      %v2302 = vshrl.u32 %v2300, 16
      %v2304 = vmul.u32 %v2301, 14564
      %v2305 = vmul.u32 %v2301, 58254
      %v2306 = vmul.u32 %v2302, 14564
      %v2307 = vmul.u32 %v2302, 58254
      %v2308 = vshll.u32 %v2305, 16
      %v2309 = vshrl.u32 %v2305, 16
      %v2310 = vshll.u32 %v2306, 16
      %v2311 = vshrl.u32 %v2306, 16
      %vm2312 = vc.u32 %v2304, %v2308
      %v2313 = vsel %vm2312, 1, 0
      %v2314 = vadd.s32 %v2304, %v2308
      %v2315 = vadd.s32 %v2307, %v2313
      %vm2316 = vc.u32 %v2314, %v2310
      %v2317 = vsel %vm2316, 1, 0
      %v2318 = vadd.s32 %v2314, %v2310
      %v2319 = vadd.s32 %v2315, %v2317
      %v2320 = vadd.s32 %v2319, %v2309
      %v2321 = vadd.s32 %v2320, %v2311
      %v2322 = vshrl.u32 %v2321, 4
      %v2323 = vmul.u32 %v2322, 18
      %v2324 = vsub.s32 %v2300, %v2323
      %v2325 = vsub.s32 0, %v2324
      %v2326 = vsel %vm2298, %v2325, %v2324
      %vm2327 = vcmp.lt.s32.totalorder %v1703, 0
      %v2328 = vsub.s32 0, %v1703
      %v2329 = vsel %vm2327, %v2328, %v1703
      %v2330 = vand.u32 %v2329, 65535
      %v2331 = vshrl.u32 %v2329, 16
      %v2333 = vmul.u32 %v2330, 14564
      %v2334 = vmul.u32 %v2330, 58254
      %v2335 = vmul.u32 %v2331, 14564
      %v2336 = vmul.u32 %v2331, 58254
      %v2337 = vshll.u32 %v2334, 16
      %v2338 = vshrl.u32 %v2334, 16
      %v2339 = vshll.u32 %v2335, 16
      %v2340 = vshrl.u32 %v2335, 16
      %vm2341 = vc.u32 %v2333, %v2337
      %v2342 = vsel %vm2341, 1, 0
      %v2343 = vadd.s32 %v2333, %v2337
      %v2344 = vadd.s32 %v2336, %v2342
      %vm2345 = vc.u32 %v2343, %v2339
      %v2346 = vsel %vm2345, 1, 0
      %v2347 = vadd.s32 %v2343, %v2339
      %v2348 = vadd.s32 %v2344, %v2346
      %v2349 = vadd.s32 %v2348, %v2338
      %v2350 = vadd.s32 %v2349, %v2340
      %v2351 = vshrl.u32 %v2350, 4
      %v2352 = vmul.u32 %v2351, 18
      %v2353 = vsub.s32 %v2329, %v2352
      %v2354 = vsub.s32 0, %v2353
      %v2355 = vsel %vm2327, %v2354, %v2353
      %vm2356 = vcmp.lt.s32.totalorder %v1704, 0
      %v2357 = vsub.s32 0, %v1704
      %v2358 = vsel %vm2356, %v2357, %v1704
      %v2359 = vand.u32 %v2358, 65535
      %v2360 = vshrl.u32 %v2358, 16
      %v2362 = vmul.u32 %v2359, 14564
      %v2363 = vmul.u32 %v2359, 58254
      %v2364 = vmul.u32 %v2360, 14564
      %v2365 = vmul.u32 %v2360, 58254
      %v2366 = vshll.u32 %v2363, 16
      %v2367 = vshrl.u32 %v2363, 16
      %v2368 = vshll.u32 %v2364, 16
      %v2369 = vshrl.u32 %v2364, 16
      %vm2370 = vc.u32 %v2362, %v2366
      %v2371 = vsel %vm2370, 1, 0
      %v2372 = vadd.s32 %v2362, %v2366
      %v2373 = vadd.s32 %v2365, %v2371
      %vm2374 = vc.u32 %v2372, %v2368
      %v2375 = vsel %vm2374, 1, 0
      %v2376 = vadd.s32 %v2372, %v2368
      %v2377 = vadd.s32 %v2373, %v2375
      %v2378 = vadd.s32 %v2377, %v2367
      %v2379 = vadd.s32 %v2378, %v2369
      %v2380 = vshrl.u32 %v2379, 4
      %v2381 = vmul.u32 %v2380, 18
      %v2382 = vsub.s32 %v2358, %v2381
      %v2383 = vsub.s32 0, %v2382
      %v2384 = vsel %vm2356, %v2383, %v2382
      %vm2385 = vcmp.lt.s32.totalorder %v1705, 0
      %v2386 = vsub.s32 0, %v1705
      %v2387 = vsel %vm2385, %v2386, %v1705
      %v2388 = vand.u32 %v2387, 65535
      %v2389 = vshrl.u32 %v2387, 16
      %v2391 = vmul.u32 %v2388, 14564
      %v2392 = vmul.u32 %v2388, 58254
      %v2393 = vmul.u32 %v2389, 14564
      %v2394 = vmul.u32 %v2389, 58254
      %v2395 = vshll.u32 %v2392, 16
      %v2396 = vshrl.u32 %v2392, 16
      %v2397 = vshll.u32 %v2393, 16
      %v2398 = vshrl.u32 %v2393, 16
      %vm2399 = vc.u32 %v2391, %v2395
      %v2400 = vsel %vm2399, 1, 0
      %v2401 = vadd.s32 %v2391, %v2395
      %v2402 = vadd.s32 %v2394, %v2400
      %vm2403 = vc.u32 %v2401, %v2397
      %v2404 = vsel %vm2403, 1, 0
      %v2405 = vadd.s32 %v2401, %v2397
      %v2406 = vadd.s32 %v2402, %v2404
      %v2407 = vadd.s32 %v2406, %v2396
      %v2408 = vadd.s32 %v2407, %v2398
      %v2409 = vshrl.u32 %v2408, 4
      %v2410 = vmul.u32 %v2409, 18
      %v2411 = vsub.s32 %v2387, %v2410
      %v2412 = vsub.s32 0, %v2411
      %v2413 = vsel %vm2385, %v2412, %v2411
      %vm2414 = vcmp.lt.s32.totalorder %v1706, 0
      %v2415 = vsub.s32 0, %v1706
      %v2416 = vsel %vm2414, %v2415, %v1706
      %v2417 = vand.u32 %v2416, 65535
      %v2418 = vshrl.u32 %v2416, 16
      %v2420 = vmul.u32 %v2417, 14564
      %v2421 = vmul.u32 %v2417, 58254
      %v2422 = vmul.u32 %v2418, 14564
      %v2423 = vmul.u32 %v2418, 58254
      %v2424 = vshll.u32 %v2421, 16
      %v2425 = vshrl.u32 %v2421, 16
      %v2426 = vshll.u32 %v2422, 16
      %v2427 = vshrl.u32 %v2422, 16
      %vm2428 = vc.u32 %v2420, %v2424
      %v2429 = vsel %vm2428, 1, 0
      %v2430 = vadd.s32 %v2420, %v2424
      %v2431 = vadd.s32 %v2423, %v2429
      %vm2432 = vc.u32 %v2430, %v2426
      %v2433 = vsel %vm2432, 1, 0
      %v2434 = vadd.s32 %v2430, %v2426
      %v2435 = vadd.s32 %v2431, %v2433
      %v2436 = vadd.s32 %v2435, %v2425
      %v2437 = vadd.s32 %v2436, %v2427
      %v2438 = vshrl.u32 %v2437, 4
      %v2439 = vmul.u32 %v2438, 18
      %v2440 = vsub.s32 %v2416, %v2439
      %v2441 = vsub.s32 0, %v2440
      %v2442 = vsel %vm2414, %v2441, %v2440
      %vm2443 = vcmp.lt.s32.totalorder %v1707, 0
      %v2444 = vsub.s32 0, %v1707
      %v2445 = vsel %vm2443, %v2444, %v1707
      %v2446 = vand.u32 %v2445, 65535
      %v2447 = vshrl.u32 %v2445, 16
      %v2449 = vmul.u32 %v2446, 14564
      %v2450 = vmul.u32 %v2446, 58254
      %v2451 = vmul.u32 %v2447, 14564
      %v2452 = vmul.u32 %v2447, 58254
      %v2453 = vshll.u32 %v2450, 16
      %v2454 = vshrl.u32 %v2450, 16
      %v2455 = vshll.u32 %v2451, 16
      %v2456 = vshrl.u32 %v2451, 16
      %vm2457 = vc.u32 %v2449, %v2453
      %v2458 = vsel %vm2457, 1, 0
      %v2459 = vadd.s32 %v2449, %v2453
      %v2460 = vadd.s32 %v2452, %v2458
      %vm2461 = vc.u32 %v2459, %v2455
      %v2462 = vsel %vm2461, 1, 0
      %v2463 = vadd.s32 %v2459, %v2455
      %v2464 = vadd.s32 %v2460, %v2462
      %v2465 = vadd.s32 %v2464, %v2454
      %v2466 = vadd.s32 %v2465, %v2456
      %v2467 = vshrl.u32 %v2466, 4
      %v2468 = vmul.u32 %v2467, 18
      %v2469 = vsub.s32 %v2445, %v2468
      %v2470 = vsub.s32 0, %v2469
      %v2471 = vsel %vm2443, %v2470, %v2469
      %vm2472 = vcmp.lt.s32.totalorder %v1708, 0
      %v2473 = vsub.s32 0, %v1708
      %v2474 = vsel %vm2472, %v2473, %v1708
      %v2475 = vand.u32 %v2474, 65535
      %v2476 = vshrl.u32 %v2474, 16
      %v2478 = vmul.u32 %v2475, 14564
      %v2479 = vmul.u32 %v2475, 58254
      %v2480 = vmul.u32 %v2476, 14564
      %v2481 = vmul.u32 %v2476, 58254
      %v2482 = vshll.u32 %v2479, 16
      %v2483 = vshrl.u32 %v2479, 16
      %v2484 = vshll.u32 %v2480, 16
      %v2485 = vshrl.u32 %v2480, 16
      %vm2486 = vc.u32 %v2478, %v2482
      %v2487 = vsel %vm2486, 1, 0
      %v2488 = vadd.s32 %v2478, %v2482
      %v2489 = vadd.s32 %v2481, %v2487
      %vm2490 = vc.u32 %v2488, %v2484
      %v2491 = vsel %vm2490, 1, 0
      %v2492 = vadd.s32 %v2488, %v2484
      %v2493 = vadd.s32 %v2489, %v2491
      %v2494 = vadd.s32 %v2493, %v2483
      %v2495 = vadd.s32 %v2494, %v2485
      %v2496 = vshrl.u32 %v2495, 4
      %v2497 = vmul.u32 %v2496, 18
      %v2498 = vsub.s32 %v2474, %v2497
      %v2499 = vsub.s32 0, %v2498
      %v2500 = vsel %vm2472, %v2499, %v2498
      %vm2501 = vcmp.lt.s32.totalorder %v1709, 0
      %v2502 = vsub.s32 0, %v1709
      %v2503 = vsel %vm2501, %v2502, %v1709
      %v2504 = vand.u32 %v2503, 65535
      %v2505 = vshrl.u32 %v2503, 16
      %v2507 = vmul.u32 %v2504, 14564
      %v2508 = vmul.u32 %v2504, 58254
      %v2509 = vmul.u32 %v2505, 14564
      %v2510 = vmul.u32 %v2505, 58254
      %v2511 = vshll.u32 %v2508, 16
      %v2512 = vshrl.u32 %v2508, 16
      %v2513 = vshll.u32 %v2509, 16
      %v2514 = vshrl.u32 %v2509, 16
      %vm2515 = vc.u32 %v2507, %v2511
      %v2516 = vsel %vm2515, 1, 0
      %v2517 = vadd.s32 %v2507, %v2511
      %v2518 = vadd.s32 %v2510, %v2516
      %vm2519 = vc.u32 %v2517, %v2513
      %v2520 = vsel %vm2519, 1, 0
      %v2521 = vadd.s32 %v2517, %v2513
      %v2522 = vadd.s32 %v2518, %v2520
      %v2523 = vadd.s32 %v2522, %v2512
      %v2524 = vadd.s32 %v2523, %v2514
      %v2525 = vshrl.u32 %v2524, 4
      %v2526 = vmul.u32 %v2525, 18
      %v2527 = vsub.s32 %v2503, %v2526
      %v2528 = vsub.s32 0, %v2527
      %v2529 = vsel %vm2501, %v2528, %v2527
      %vm2530 = vcmp.lt.s32.totalorder %v1710, 0
      %v2531 = vsub.s32 0, %v1710
      %v2532 = vsel %vm2530, %v2531, %v1710
      %v2533 = vand.u32 %v2532, 65535
      %v2534 = vshrl.u32 %v2532, 16
      %v2536 = vmul.u32 %v2533, 14564
      %v2537 = vmul.u32 %v2533, 58254
      %v2538 = vmul.u32 %v2534, 14564
      %v2539 = vmul.u32 %v2534, 58254
      %v2540 = vshll.u32 %v2537, 16
      %v2541 = vshrl.u32 %v2537, 16
      %v2542 = vshll.u32 %v2538, 16
      %v2543 = vshrl.u32 %v2538, 16
      %vm2544 = vc.u32 %v2536, %v2540
      %v2545 = vsel %vm2544, 1, 0
      %v2546 = vadd.s32 %v2536, %v2540
      %v2547 = vadd.s32 %v2539, %v2545
      %vm2548 = vc.u32 %v2546, %v2542
      %v2549 = vsel %vm2548, 1, 0
      %v2550 = vadd.s32 %v2546, %v2542
      %v2551 = vadd.s32 %v2547, %v2549
      %v2552 = vadd.s32 %v2551, %v2541
      %v2553 = vadd.s32 %v2552, %v2543
      %v2554 = vshrl.u32 %v2553, 4
      %v2555 = vmul.u32 %v2554, 18
      %v2556 = vsub.s32 %v2532, %v2555
      %v2557 = vsub.s32 0, %v2556
      %v2558 = vsel %vm2530, %v2557, %v2556
      %vm2559 = vcmp.lt.s32.totalorder %v1711, 0
      %v2560 = vsub.s32 0, %v1711
      %v2561 = vsel %vm2559, %v2560, %v1711
      %v2562 = vand.u32 %v2561, 65535
      %v2563 = vshrl.u32 %v2561, 16
      %v2565 = vmul.u32 %v2562, 14564
      %v2566 = vmul.u32 %v2562, 58254
      %v2567 = vmul.u32 %v2563, 14564
      %v2568 = vmul.u32 %v2563, 58254
      %v2569 = vshll.u32 %v2566, 16
      %v2570 = vshrl.u32 %v2566, 16
      %v2571 = vshll.u32 %v2567, 16
      %v2572 = vshrl.u32 %v2567, 16
      %vm2573 = vc.u32 %v2565, %v2569
      %v2574 = vsel %vm2573, 1, 0
      %v2575 = vadd.s32 %v2565, %v2569
      %v2576 = vadd.s32 %v2568, %v2574
      %vm2577 = vc.u32 %v2575, %v2571
      %v2578 = vsel %vm2577, 1, 0
      %v2579 = vadd.s32 %v2575, %v2571
      %v2580 = vadd.s32 %v2576, %v2578
      %v2581 = vadd.s32 %v2580, %v2570
      %v2582 = vadd.s32 %v2581, %v2572
      %v2583 = vshrl.u32 %v2582, 4
      %v2584 = vmul.u32 %v2583, 18
      %v2585 = vsub.s32 %v2561, %v2584
      %v2586 = vsub.s32 0, %v2585
      %v2587 = vsel %vm2559, %v2586, %v2585
      %vm2588 = vcmp.lt.s32.totalorder %v1712, 0
      %v2589 = vsub.s32 0, %v1712
      %v2590 = vsel %vm2588, %v2589, %v1712
      %v2591 = vand.u32 %v2590, 65535
      %v2592 = vshrl.u32 %v2590, 16
      %v2594 = vmul.u32 %v2591, 14564
      %v2595 = vmul.u32 %v2591, 58254
      %v2596 = vmul.u32 %v2592, 14564
      %v2597 = vmul.u32 %v2592, 58254
      %v2598 = vshll.u32 %v2595, 16
      %v2599 = vshrl.u32 %v2595, 16
      %v2600 = vshll.u32 %v2596, 16
      %v2601 = vshrl.u32 %v2596, 16
      %vm2602 = vc.u32 %v2594, %v2598
      %v2603 = vsel %vm2602, 1, 0
      %v2604 = vadd.s32 %v2594, %v2598
      %v2605 = vadd.s32 %v2597, %v2603
      %vm2606 = vc.u32 %v2604, %v2600
      %v2607 = vsel %vm2606, 1, 0
      %v2608 = vadd.s32 %v2604, %v2600
      %v2609 = vadd.s32 %v2605, %v2607
      %v2610 = vadd.s32 %v2609, %v2599
      %v2611 = vadd.s32 %v2610, %v2601
      %v2612 = vshrl.u32 %v2611, 4
      %v2613 = vmul.u32 %v2612, 18
      %v2614 = vsub.s32 %v2590, %v2613
      %v2615 = vsub.s32 0, %v2614
      %v2616 = vsel %vm2588, %v2615, %v2614
      %vm2617 = vcmp.lt.s32.totalorder %v1713, 0
      %v2618 = vsub.s32 0, %v1713
      %v2619 = vsel %vm2617, %v2618, %v1713
      %v2620 = vand.u32 %v2619, 65535
      %v2621 = vshrl.u32 %v2619, 16
      %v2623 = vmul.u32 %v2620, 14564
      %v2624 = vmul.u32 %v2620, 58254
      %v2625 = vmul.u32 %v2621, 14564
      %v2626 = vmul.u32 %v2621, 58254
      %v2627 = vshll.u32 %v2624, 16
      %v2628 = vshrl.u32 %v2624, 16
      %v2629 = vshll.u32 %v2625, 16
      %v2630 = vshrl.u32 %v2625, 16
      %vm2631 = vc.u32 %v2623, %v2627
      %v2632 = vsel %vm2631, 1, 0
      %v2633 = vadd.s32 %v2623, %v2627
      %v2634 = vadd.s32 %v2626, %v2632
      %vm2635 = vc.u32 %v2633, %v2629
      %v2636 = vsel %vm2635, 1, 0
      %v2637 = vadd.s32 %v2633, %v2629
      %v2638 = vadd.s32 %v2634, %v2636
      %v2639 = vadd.s32 %v2638, %v2628
      %v2640 = vadd.s32 %v2639, %v2630
      %v2641 = vshrl.u32 %v2640, 4
      %v2642 = vmul.u32 %v2641, 18
      %v2643 = vsub.s32 %v2619, %v2642
      %v2644 = vsub.s32 0, %v2643
      %v2645 = vsel %vm2617, %v2644, %v2643
      %vm2646 = vcmp.lt.s32.totalorder %v1714, 0
      %v2647 = vsub.s32 0, %v1714
      %v2648 = vsel %vm2646, %v2647, %v1714
      %v2649 = vand.u32 %v2648, 65535
      %v2650 = vshrl.u32 %v2648, 16
      %v2652 = vmul.u32 %v2649, 14564
      %v2653 = vmul.u32 %v2649, 58254
      %v2654 = vmul.u32 %v2650, 14564
      %v2655 = vmul.u32 %v2650, 58254
      %v2656 = vshll.u32 %v2653, 16
      %v2657 = vshrl.u32 %v2653, 16
      %v2658 = vshll.u32 %v2654, 16
      %v2659 = vshrl.u32 %v2654, 16
      %vm2660 = vc.u32 %v2652, %v2656
      %v2661 = vsel %vm2660, 1, 0
      %v2662 = vadd.s32 %v2652, %v2656
      %v2663 = vadd.s32 %v2655, %v2661
      %vm2664 = vc.u32 %v2662, %v2658
      %v2665 = vsel %vm2664, 1, 0
      %v2666 = vadd.s32 %v2662, %v2658
      %v2667 = vadd.s32 %v2663, %v2665
      %v2668 = vadd.s32 %v2667, %v2657
      %v2669 = vadd.s32 %v2668, %v2659
      %v2670 = vshrl.u32 %v2669, 4
      %v2671 = vmul.u32 %v2670, 18
      %v2672 = vsub.s32 %v2648, %v2671
      %v2673 = vsub.s32 0, %v2672
      %v2674 = vsel %vm2646, %v2673, %v2672
      %vm2675 = vcmp.lt.s32.totalorder %v1715, 0
      %v2676 = vsub.s32 0, %v1715
      %v2677 = vsel %vm2675, %v2676, %v1715
      %v2678 = vand.u32 %v2677, 65535
      %v2679 = vshrl.u32 %v2677, 16
      %v2681 = vmul.u32 %v2678, 14564
      %v2682 = vmul.u32 %v2678, 58254
      %v2683 = vmul.u32 %v2679, 14564
      %v2684 = vmul.u32 %v2679, 58254
      %v2685 = vshll.u32 %v2682, 16
      %v2686 = vshrl.u32 %v2682, 16
      %v2687 = vshll.u32 %v2683, 16
      %v2688 = vshrl.u32 %v2683, 16
      %vm2689 = vc.u32 %v2681, %v2685
      %v2690 = vsel %vm2689, 1, 0
      %v2691 = vadd.s32 %v2681, %v2685
      %v2692 = vadd.s32 %v2684, %v2690
      %vm2693 = vc.u32 %v2691, %v2687
      %v2694 = vsel %vm2693, 1, 0
      %v2695 = vadd.s32 %v2691, %v2687
      %v2696 = vadd.s32 %v2692, %v2694
      %v2697 = vadd.s32 %v2696, %v2686
      %v2698 = vadd.s32 %v2697, %v2688
      %v2699 = vshrl.u32 %v2698, 4
      %v2700 = vmul.u32 %v2699, 18
      %v2701 = vsub.s32 %v2677, %v2700
      %v2702 = vsub.s32 0, %v2701
      %v2703 = vsel %vm2675, %v2702, %v2701
      %vm2704 = vcmp.lt.s32.totalorder %v1716, 0
      %v2705 = vsub.s32 0, %v1716
      %v2706 = vsel %vm2704, %v2705, %v1716
      %v2707 = vand.u32 %v2706, 65535
      %v2708 = vshrl.u32 %v2706, 16
      %v2710 = vmul.u32 %v2707, 14564
      %v2711 = vmul.u32 %v2707, 58254
      %v2712 = vmul.u32 %v2708, 14564
      %v2713 = vmul.u32 %v2708, 58254
      %v2714 = vshll.u32 %v2711, 16
      %v2715 = vshrl.u32 %v2711, 16
      %v2716 = vshll.u32 %v2712, 16
      %v2717 = vshrl.u32 %v2712, 16
      %vm2718 = vc.u32 %v2710, %v2714
      %v2719 = vsel %vm2718, 1, 0
      %v2720 = vadd.s32 %v2710, %v2714
      %v2721 = vadd.s32 %v2713, %v2719
      %vm2722 = vc.u32 %v2720, %v2716
      %v2723 = vsel %vm2722, 1, 0
      %v2724 = vadd.s32 %v2720, %v2716
      %v2725 = vadd.s32 %v2721, %v2723
      %v2726 = vadd.s32 %v2725, %v2715
      %v2727 = vadd.s32 %v2726, %v2717
      %v2728 = vshrl.u32 %v2727, 4
      %v2729 = vmul.u32 %v2728, 18
      %v2730 = vsub.s32 %v2706, %v2729
      %v2731 = vsub.s32 0, %v2730
      %v2732 = vsel %vm2704, %v2731, %v2730
      %vm2733 = vcmp.lt.s32.totalorder %v1717, 0
      %v2734 = vsub.s32 0, %v1717
      %v2735 = vsel %vm2733, %v2734, %v1717
      %v2736 = vand.u32 %v2735, 65535
      %v2737 = vshrl.u32 %v2735, 16
      %v2739 = vmul.u32 %v2736, 14564
      %v2740 = vmul.u32 %v2736, 58254
      %v2741 = vmul.u32 %v2737, 14564
      %v2742 = vmul.u32 %v2737, 58254
      %v2743 = vshll.u32 %v2740, 16
      %v2744 = vshrl.u32 %v2740, 16
      %v2745 = vshll.u32 %v2741, 16
      %v2746 = vshrl.u32 %v2741, 16
      %vm2747 = vc.u32 %v2739, %v2743
      %v2748 = vsel %vm2747, 1, 0
      %v2749 = vadd.s32 %v2739, %v2743
      %v2750 = vadd.s32 %v2742, %v2748
      %vm2751 = vc.u32 %v2749, %v2745
      %v2752 = vsel %vm2751, 1, 0
      %v2753 = vadd.s32 %v2749, %v2745
      %v2754 = vadd.s32 %v2750, %v2752
      %v2755 = vadd.s32 %v2754, %v2744
      %v2756 = vadd.s32 %v2755, %v2746
      %v2757 = vshrl.u32 %v2756, 4
      %v2758 = vmul.u32 %v2757, 18
      %v2759 = vsub.s32 %v2735, %v2758
      %v2760 = vsub.s32 0, %v2759
      %v2761 = vsel %vm2733, %v2760, %v2759
      %vm2762 = vcmp.ne.s32.totalorder %v1746, 0
      %vm2763 = vcmp.ne.s32.totalorder %v1775, 0
      %vm2764 = vcmp.ne.s32.totalorder %v1804, 0
      %vm2765 = vcmp.ne.s32.totalorder %v1833, 0
      %vm2766 = vcmp.ne.s32.totalorder %v1862, 0
      %vm2767 = vcmp.ne.s32.totalorder %v1891, 0
      %vm2768 = vcmp.ne.s32.totalorder %v1920, 0
      %vm2769 = vcmp.ne.s32.totalorder %v1949, 0
      %vm2770 = vcmp.ne.s32.totalorder %v1978, 0
      %vm2771 = vcmp.ne.s32.totalorder %v2007, 0
      %vm2772 = vcmp.ne.s32.totalorder %v2036, 0
      %vm2773 = vcmp.ne.s32.totalorder %v2065, 0
      %vm2774 = vcmp.ne.s32.totalorder %v2094, 0
      %vm2775 = vcmp.ne.s32.totalorder %v2123, 0
      %vm2776 = vcmp.ne.s32.totalorder %v2152, 0
      %vm2777 = vcmp.ne.s32.totalorder %v2181, 0
      %vm2778 = vcmp.ne.s32.totalorder %v2210, 0
      %vm2779 = vcmp.ne.s32.totalorder %v2239, 0
      %vm2780 = vcmp.ne.s32.totalorder %v2268, 0
      %vm2781 = vcmp.ne.s32.totalorder %v2297, 0
      %vm2782 = vcmp.ne.s32.totalorder %v2326, 0
      %vm2783 = vcmp.ne.s32.totalorder %v2355, 0
      %vm2784 = vcmp.ne.s32.totalorder %v2384, 0
      %vm2785 = vcmp.ne.s32.totalorder %v2413, 0
      %vm2786 = vcmp.ne.s32.totalorder %v2442, 0
      %vm2787 = vcmp.ne.s32.totalorder %v2471, 0
      %vm2788 = vcmp.ne.s32.totalorder %v2500, 0
      %vm2789 = vcmp.ne.s32.totalorder %v2529, 0
      %vm2790 = vcmp.ne.s32.totalorder %v2558, 0
      %vm2791 = vcmp.ne.s32.totalorder %v2587, 0
      %vm2792 = vcmp.ne.s32.totalorder %v2616, 0
      %vm2793 = vcmp.ne.s32.totalorder %v2645, 0
      %vm2794 = vcmp.ne.s32.totalorder %v2674, 0
      %vm2795 = vcmp.ne.s32.totalorder %v2703, 0
      %vm2796 = vcmp.ne.s32.totalorder %v2732, 0
      %vm2797 = vcmp.ne.s32.totalorder %v2761, 0
      %vm2798 = vcmp.lt.s32.totalorder %v1746, 0
      %vm2799 = vcmp.lt.s32.totalorder %v1775, 0
      %vm2800 = vcmp.lt.s32.totalorder %v1804, 0
      %vm2801 = vcmp.lt.s32.totalorder %v1833, 0
      %vm2802 = vcmp.lt.s32.totalorder %v1862, 0
      %vm2803 = vcmp.lt.s32.totalorder %v1891, 0
      %vm2804 = vcmp.lt.s32.totalorder %v1920, 0
      %vm2805 = vcmp.lt.s32.totalorder %v1949, 0
      %vm2806 = vcmp.lt.s32.totalorder %v1978, 0
      %vm2807 = vcmp.lt.s32.totalorder %v2007, 0
      %vm2808 = vcmp.lt.s32.totalorder %v2036, 0
      %vm2809 = vcmp.lt.s32.totalorder %v2065, 0
      %vm2810 = vcmp.lt.s32.totalorder %v2094, 0
      %vm2811 = vcmp.lt.s32.totalorder %v2123, 0
      %vm2812 = vcmp.lt.s32.totalorder %v2152, 0
      %vm2813 = vcmp.lt.s32.totalorder %v2181, 0
      %vm2814 = vcmp.lt.s32.totalorder %v2210, 0
      %vm2815 = vcmp.lt.s32.totalorder %v2239, 0
      %vm2816 = vcmp.lt.s32.totalorder %v2268, 0
      %vm2817 = vcmp.lt.s32.totalorder %v2297, 0
      %vm2818 = vcmp.lt.s32.totalorder %v2326, 0
      %vm2819 = vcmp.lt.s32.totalorder %v2355, 0
      %vm2820 = vcmp.lt.s32.totalorder %v2384, 0
      %vm2821 = vcmp.lt.s32.totalorder %v2413, 0
      %vm2822 = vcmp.lt.s32.totalorder %v2442, 0
      %vm2823 = vcmp.lt.s32.totalorder %v2471, 0
      %vm2824 = vcmp.lt.s32.totalorder %v2500, 0
      %vm2825 = vcmp.lt.s32.totalorder %v2529, 0
      %vm2826 = vcmp.lt.s32.totalorder %v2558, 0
      %vm2827 = vcmp.lt.s32.totalorder %v2587, 0
      %vm2828 = vcmp.lt.s32.totalorder %v2616, 0
      %vm2829 = vcmp.lt.s32.totalorder %v2645, 0
      %vm2830 = vcmp.lt.s32.totalorder %v2674, 0
      %vm2831 = vcmp.lt.s32.totalorder %v2703, 0
      %vm2832 = vcmp.lt.s32.totalorder %v2732, 0
      %vm2833 = vcmp.lt.s32.totalorder %v2761, 0
      %vm2834 = vmand %vm2798, %vm2762
      %vm2835 = vmand %vm2799, %vm2763
      %vm2836 = vmand %vm2800, %vm2764
      %vm2837 = vmand %vm2801, %vm2765
      %vm2838 = vmand %vm2802, %vm2766
      %vm2839 = vmand %vm2803, %vm2767
      %vm2840 = vmand %vm2804, %vm2768
      %vm2841 = vmand %vm2805, %vm2769
      %vm2842 = vmand %vm2806, %vm2770
      %vm2843 = vmand %vm2807, %vm2771
      %vm2844 = vmand %vm2808, %vm2772
      %vm2845 = vmand %vm2809, %vm2773
      %vm2846 = vmand %vm2810, %vm2774
      %vm2847 = vmand %vm2811, %vm2775
      %vm2848 = vmand %vm2812, %vm2776
      %vm2849 = vmand %vm2813, %vm2777
      %vm2850 = vmand %vm2814, %vm2778
      %vm2851 = vmand %vm2815, %vm2779
      %vm2852 = vmand %vm2816, %vm2780
      %vm2853 = vmand %vm2817, %vm2781
      %vm2854 = vmand %vm2818, %vm2782
      %vm2855 = vmand %vm2819, %vm2783
      %vm2856 = vmand %vm2820, %vm2784
      %vm2857 = vmand %vm2821, %vm2785
      %vm2858 = vmand %vm2822, %vm2786
      %vm2859 = vmand %vm2823, %vm2787
      %vm2860 = vmand %vm2824, %vm2788
      %vm2861 = vmand %vm2825, %vm2789
      %vm2862 = vmand %vm2826, %vm2790
      %vm2863 = vmand %vm2827, %vm2791
      %vm2864 = vmand %vm2828, %vm2792
      %vm2865 = vmand %vm2829, %vm2793
      %vm2866 = vmand %vm2830, %vm2794
      %vm2867 = vmand %vm2831, %vm2795
      %vm2868 = vmand %vm2832, %vm2796
      %vm2869 = vmand %vm2833, %vm2797
      %v2870 = vadd.s32 %v1746, 18
      %v2871 = vadd.s32 %v1775, 18
      %v2872 = vadd.s32 %v1804, 18
      %v2873 = vadd.s32 %v1833, 18
      %v2874 = vadd.s32 %v1862, 18
      %v2875 = vadd.s32 %v1891, 18
      %v2876 = vadd.s32 %v1920, 18
      %v2877 = vadd.s32 %v1949, 18
      %v2878 = vadd.s32 %v1978, 18
      %v2879 = vadd.s32 %v2007, 18
      %v2880 = vadd.s32 %v2036, 18
      %v2881 = vadd.s32 %v2065, 18
      %v2882 = vadd.s32 %v2094, 18
      %v2883 = vadd.s32 %v2123, 18
      %v2884 = vadd.s32 %v2152, 18
      %v2885 = vadd.s32 %v2181, 18
      %v2886 = vadd.s32 %v2210, 18
      %v2887 = vadd.s32 %v2239, 18
      %v2888 = vadd.s32 %v2268, 18
      %v2889 = vadd.s32 %v2297, 18
      %v2890 = vadd.s32 %v2326, 18
      %v2891 = vadd.s32 %v2355, 18
      %v2892 = vadd.s32 %v2384, 18
      %v2893 = vadd.s32 %v2413, 18
      %v2894 = vadd.s32 %v2442, 18
      %v2895 = vadd.s32 %v2471, 18
      %v2896 = vadd.s32 %v2500, 18
      %v2897 = vadd.s32 %v2529, 18
      %v2898 = vadd.s32 %v2558, 18
      %v2899 = vadd.s32 %v2587, 18
      %v2900 = vadd.s32 %v2616, 18
      %v2901 = vadd.s32 %v2645, 18
      %v2902 = vadd.s32 %v2674, 18
      %v2903 = vadd.s32 %v2703, 18
      %v2904 = vadd.s32 %v2732, 18
      %v2905 = vadd.s32 %v2761, 18
      %v2906 = vsel %vm2834, %v2870, %v1746
      %v2907 = vsel %vm2835, %v2871, %v1775
      %v2908 = vsel %vm2836, %v2872, %v1804
      %v2909 = vsel %vm2837, %v2873, %v1833
      %v2910 = vsel %vm2838, %v2874, %v1862
      %v2911 = vsel %vm2839, %v2875, %v1891
      %v2912 = vsel %vm2840, %v2876, %v1920
      %v2913 = vsel %vm2841, %v2877, %v1949
      %v2914 = vsel %vm2842, %v2878, %v1978
      %v2915 = vsel %vm2843, %v2879, %v2007
      %v2916 = vsel %vm2844, %v2880, %v2036
      %v2917 = vsel %vm2845, %v2881, %v2065
      %v2918 = vsel %vm2846, %v2882, %v2094
      %v2919 = vsel %vm2847, %v2883, %v2123
      %v2920 = vsel %vm2848, %v2884, %v2152
      %v2921 = vsel %vm2849, %v2885, %v2181
      %v2922 = vsel %vm2850, %v2886, %v2210
      %v2923 = vsel %vm2851, %v2887, %v2239
      %v2924 = vsel %vm2852, %v2888, %v2268
      %v2925 = vsel %vm2853, %v2889, %v2297
      %v2926 = vsel %vm2854, %v2890, %v2326
      %v2927 = vsel %vm2855, %v2891, %v2355
      %v2928 = vsel %vm2856, %v2892, %v2384
      %v2929 = vsel %vm2857, %v2893, %v2413
      %v2930 = vsel %vm2858, %v2894, %v2442
      %v2931 = vsel %vm2859, %v2895, %v2471
      %v2932 = vsel %vm2860, %v2896, %v2500
      %v2933 = vsel %vm2861, %v2897, %v2529
      %v2934 = vsel %vm2862, %v2898, %v2558
      %v2935 = vsel %vm2863, %v2899, %v2587
      %v2936 = vsel %vm2864, %v2900, %v2616
      %v2937 = vsel %vm2865, %v2901, %v2645
      %v2938 = vsel %vm2866, %v2902, %v2674
      %v2939 = vsel %vm2867, %v2903, %v2703
      %v2940 = vsel %vm2868, %v2904, %v2732
      %v2941 = vsel %vm2869, %v2905, %v2761
      %s2942 = smul.u32 %s20, 16
      %s2943 = ssub.s32 16, %s2942
      %s2944 = smul.u32 %s2943, 18
      %vm2945 = vcmp.lt.s32.totalorder %v2906, 16
      %vm2946 = vcmp.lt.s32.totalorder %v2907, 16
      %vm2947 = vcmp.lt.s32.totalorder %v2908, 16
      %vm2948 = vcmp.lt.s32.totalorder %v2909, 16
      %vm2949 = vcmp.lt.s32.totalorder %v2910, 16
      %vm2950 = vcmp.lt.s32.totalorder %v2911, 16
      %vm2951 = vcmp.lt.s32.totalorder %v2912, 16
      %vm2952 = vcmp.lt.s32.totalorder %v2913, 16
      %vm2953 = vcmp.lt.s32.totalorder %v2914, 16
      %vm2954 = vcmp.lt.s32.totalorder %v2915, 16
      %vm2955 = vcmp.lt.s32.totalorder %v2916, 16
      %vm2956 = vcmp.lt.s32.totalorder %v2917, 16
      %vm2957 = vcmp.lt.s32.totalorder %v2918, 16
      %vm2958 = vcmp.lt.s32.totalorder %v2919, 16
      %vm2959 = vcmp.lt.s32.totalorder %v2920, 16
      %vm2960 = vcmp.lt.s32.totalorder %v2921, 16
      %vm2961 = vcmp.lt.s32.totalorder %v2922, 16
      %vm2962 = vcmp.lt.s32.totalorder %v2923, 16
      %vm2963 = vcmp.lt.s32.totalorder %v2924, 16
      %vm2964 = vcmp.lt.s32.totalorder %v2925, 16
      %vm2965 = vcmp.lt.s32.totalorder %v2926, 16
      %vm2966 = vcmp.lt.s32.totalorder %v2927, 16
      %vm2967 = vcmp.lt.s32.totalorder %v2928, 16
      %vm2968 = vcmp.lt.s32.totalorder %v2929, 16
      %vm2969 = vcmp.lt.s32.totalorder %v2930, 16
      %vm2970 = vcmp.lt.s32.totalorder %v2931, 16
      %vm2971 = vcmp.lt.s32.totalorder %v2932, 16
      %vm2972 = vcmp.lt.s32.totalorder %v2933, 16
      %vm2973 = vcmp.lt.s32.totalorder %v2934, 16
      %vm2974 = vcmp.lt.s32.totalorder %v2935, 16
      %vm2975 = vcmp.lt.s32.totalorder %v2936, 16
      %vm2976 = vcmp.lt.s32.totalorder %v2937, 16
      %vm2977 = vcmp.lt.s32.totalorder %v2938, 16
      %vm2978 = vcmp.lt.s32.totalorder %v2939, 16
      %vm2979 = vcmp.lt.s32.totalorder %v2940, 16
      %vm2980 = vcmp.lt.s32.totalorder %v2941, 16
      %v2981 = vstv %s2944
      %vm2982 = vcmp.lt.s32.totalorder %v1682, %v2981
      %vm2983 = vcmp.lt.s32.totalorder %v1683, %v2981
      %vm2984 = vcmp.lt.s32.totalorder %v1684, %v2981
      %vm2985 = vcmp.lt.s32.totalorder %v1685, %v2981
      %vm2986 = vcmp.lt.s32.totalorder %v1686, %v2981
      %vm2987 = vcmp.lt.s32.totalorder %v1687, %v2981
      %vm2988 = vcmp.lt.s32.totalorder %v1688, %v2981
      %vm2989 = vcmp.lt.s32.totalorder %v1689, %v2981
      %vm2990 = vcmp.lt.s32.totalorder %v1690, %v2981
      %vm2991 = vcmp.lt.s32.totalorder %v1691, %v2981
      %vm2992 = vcmp.lt.s32.totalorder %v1692, %v2981
      %vm2993 = vcmp.lt.s32.totalorder %v1693, %v2981
      %vm2994 = vcmp.lt.s32.totalorder %v1694, %v2981
      %vm2995 = vcmp.lt.s32.totalorder %v1695, %v2981
      %vm2996 = vcmp.lt.s32.totalorder %v1696, %v2981
      %vm2997 = vcmp.lt.s32.totalorder %v1697, %v2981
      %vm2998 = vcmp.lt.s32.totalorder %v1698, %v2981
      %vm2999 = vcmp.lt.s32.totalorder %v1699, %v2981
      %vm3000 = vcmp.lt.s32.totalorder %v1700, %v2981
      %vm3001 = vcmp.lt.s32.totalorder %v1701, %v2981
      %vm3002 = vcmp.lt.s32.totalorder %v1702, %v2981
      %vm3003 = vcmp.lt.s32.totalorder %v1703, %v2981
      %vm3004 = vcmp.lt.s32.totalorder %v1704, %v2981
      %vm3005 = vcmp.lt.s32.totalorder %v1705, %v2981
      %vm3006 = vcmp.lt.s32.totalorder %v1706, %v2981
      %vm3007 = vcmp.lt.s32.totalorder %v1707, %v2981
      %vm3008 = vcmp.lt.s32.totalorder %v1708, %v2981
      %vm3009 = vcmp.lt.s32.totalorder %v1709, %v2981
      %vm3010 = vcmp.lt.s32.totalorder %v1710, %v2981
      %vm3011 = vcmp.lt.s32.totalorder %v1711, %v2981
      %vm3012 = vcmp.lt.s32.totalorder %v1712, %v2981
      %vm3013 = vcmp.lt.s32.totalorder %v1713, %v2981
      %vm3014 = vcmp.lt.s32.totalorder %v1714, %v2981
      %vm3015 = vcmp.lt.s32.totalorder %v1715, %v2981
      %vm3016 = vcmp.lt.s32.totalorder %v1716, %v2981
      %vm3017 = vcmp.lt.s32.totalorder %v1717, %v2981
      %vm3018 = vmand %vm2945, %vm2982
      %vm3019 = vmand %vm2946, %vm2983
      %vm3020 = vmand %vm2947, %vm2984
      %vm3021 = vmand %vm2948, %vm2985
      %vm3022 = vmand %vm2949, %vm2986
      %vm3023 = vmand %vm2950, %vm2987
      %vm3024 = vmand %vm2951, %vm2988
      %vm3025 = vmand %vm2952, %vm2989
      %vm3026 = vmand %vm2953, %vm2990
      %vm3027 = vmand %vm2954, %vm2991
      %vm3028 = vmand %vm2955, %vm2992
      %vm3029 = vmand %vm2956, %vm2993
      %vm3030 = vmand %vm2957, %vm2994
      %vm3031 = vmand %vm2958, %vm2995
      %vm3032 = vmand %vm2959, %vm2996
      %vm3033 = vmand %vm2960, %vm2997
      %vm3034 = vmand %vm2961, %vm2998
      %vm3035 = vmand %vm2962, %vm2999
      %vm3036 = vmand %vm2963, %vm3000
      %vm3037 = vmand %vm2964, %vm3001
      %vm3038 = vmand %vm2965, %vm3002
      %vm3039 = vmand %vm2966, %vm3003
      %vm3040 = vmand %vm2967, %vm3004
      %vm3041 = vmand %vm2968, %vm3005
      %vm3042 = vmand %vm2969, %vm3006
      %vm3043 = vmand %vm2970, %vm3007
      %vm3044 = vmand %vm2971, %vm3008
      %vm3045 = vmand %vm2972, %vm3009
      %vm3046 = vmand %vm2973, %vm3010
      %vm3047 = vmand %vm2974, %vm3011
      %vm3048 = vmand %vm2975, %vm3012
      %vm3049 = vmand %vm2976, %vm3013
      %vm3050 = vmand %vm2977, %vm3014
      %vm3051 = vmand %vm2978, %vm3015
      %vm3052 = vmand %vm2979, %vm3016
      %vm3053 = vmand %vm2980, %vm3017
      %v3054 = vsel %vm3018, 1, 0
      %v3055 = vsel %vm3019, 1, 0
      %v3056 = vsel %vm3020, 1, 0
      %v3057 = vsel %vm3021, 1, 0
      %v3058 = vsel %vm3022, 1, 0
      %v3059 = vsel %vm3023, 1, 0
      %v3060 = vsel %vm3024, 1, 0
      %v3061 = vsel %vm3025, 1, 0
      %v3062 = vsel %vm3026, 1, 0
      %v3063 = vsel %vm3027, 1, 0
      %v3064 = vsel %vm3028, 1, 0
      %v3065 = vsel %vm3029, 1, 0
      %v3066 = vsel %vm3030, 1, 0
      %v3067 = vsel %vm3031, 1, 0
      %v3068 = vsel %vm3032, 1, 0
      %v3069 = vsel %vm3033, 1, 0
      %v3070 = vsel %vm3034, 1, 0
      %v3071 = vsel %vm3035, 1, 0
      %v3072 = vsel %vm3036, 1, 0
      %v3073 = vsel %vm3037, 1, 0
      %v3074 = vsel %vm3038, 1, 0
      %v3075 = vsel %vm3039, 1, 0
      %v3076 = vsel %vm3040, 1, 0
      %v3077 = vsel %vm3041, 1, 0
      %v3078 = vsel %vm3042, 1, 0
      %v3079 = vsel %vm3043, 1, 0
      %v3080 = vsel %vm3044, 1, 0
      %v3081 = vsel %vm3045, 1, 0
      %v3082 = vsel %vm3046, 1, 0
      %v3083 = vsel %vm3047, 1, 0
      %v3084 = vsel %vm3048, 1, 0
      %v3085 = vsel %vm3049, 1, 0
      %v3086 = vsel %vm3050, 1, 0
      %v3087 = vsel %vm3051, 1, 0
      %v3088 = vsel %vm3052, 1, 0
      %v3089 = vsel %vm3053, 1, 0
      %v3090 = vcvt.s32.f32 %v3054
      %v3091 = vcvt.s32.f32 %v3055
      %v3092 = vcvt.s32.f32 %v3056
      %v3093 = vcvt.s32.f32 %v3057
      %v3094 = vcvt.s32.f32 %v3058
      %v3095 = vcvt.s32.f32 %v3059
      %v3096 = vcvt.s32.f32 %v3060
      %v3097 = vcvt.s32.f32 %v3061
      %v3098 = vcvt.s32.f32 %v3062
      %v3099 = vcvt.s32.f32 %v3063
      %v3100 = vcvt.s32.f32 %v3064
      %v3101 = vcvt.s32.f32 %v3065
      %v3102 = vcvt.s32.f32 %v3066
      %v3103 = vcvt.s32.f32 %v3067
      %v3104 = vcvt.s32.f32 %v3068
      %v3105 = vcvt.s32.f32 %v3069
      %v3106 = vcvt.s32.f32 %v3070
      %v3107 = vcvt.s32.f32 %v3071
      %v3108 = vcvt.s32.f32 %v3072
      %v3109 = vcvt.s32.f32 %v3073
      %v3110 = vcvt.s32.f32 %v3074
      %v3111 = vcvt.s32.f32 %v3075
      %v3112 = vcvt.s32.f32 %v3076
      %v3113 = vcvt.s32.f32 %v3077
      %v3114 = vcvt.s32.f32 %v3078
      %v3115 = vcvt.s32.f32 %v3079
      %v3116 = vcvt.s32.f32 %v3080
      %v3117 = vcvt.s32.f32 %v3081
      %v3118 = vcvt.s32.f32 %v3082
      %v3119 = vcvt.s32.f32 %v3083
      %v3120 = vcvt.s32.f32 %v3084
      %v3121 = vcvt.s32.f32 %v3085
      %v3122 = vcvt.s32.f32 %v3086
      %v3123 = vcvt.s32.f32 %v3087
      %v3124 = vcvt.s32.f32 %v3088
      %v3125 = vcvt.s32.f32 %v3089
      %v3126 = vmul.f32 %v1519, %v3090
      %v3127 = vmul.f32 %v1521, %v3091
      %v3128 = vmul.f32 %v1524, %v3092
      %v3129 = vmul.f32 %v1526, %v3093
      %v3130 = vmul.f32 %v1529, %v3094
      %v3131 = vmul.f32 %v1531, %v3095
      %v3132 = vmul.f32 %v1534, %v3096
      %v3133 = vmul.f32 %v1536, %v3097
      %v3134 = vmul.f32 %v1539, %v3098
      %v3135 = vmul.f32 %v1541, %v3099
      %v3136 = vmul.f32 %v1544, %v3100
      %v3137 = vmul.f32 %v1546, %v3101
      %v3138 = vmul.f32 %v1549, %v3102
      %v3139 = vmul.f32 %v1551, %v3103
      %v3140 = vmul.f32 %v1554, %v3104
      %v3141 = vmul.f32 %v1556, %v3105
      %v3142 = vmul.f32 %v1559, %v3106
      %v3143 = vmul.f32 %v1561, %v3107
      %v3144 = vmul.f32 %v1564, %v3108
      %v3145 = vmul.f32 %v1566, %v3109
      %v3146 = vmul.f32 %v1569, %v3110
      %v3147 = vmul.f32 %v1571, %v3111
      %v3148 = vmul.f32 %v1574, %v3112
      %v3149 = vmul.f32 %v1576, %v3113
      %v3150 = vmul.f32 %v1579, %v3114
      %v3151 = vmul.f32 %v1581, %v3115
      %v3152 = vmul.f32 %v1584, %v3116
      %v3153 = vmul.f32 %v1586, %v3117
      %v3154 = vmul.f32 %v1589, %v3118
      %v3155 = vmul.f32 %v1591, %v3119
      %v3156 = vmul.f32 %v1594, %v3120
      %v3157 = vmul.f32 %v1596, %v3121
      %v3158 = vmul.f32 %v1599, %v3122
      %v3159 = vmul.f32 %v1601, %v3123
      %v3160 = vmul.f32 %v1604, %v3124
      %v3161 = vmul.f32 %v1606, %v3125
      %v3162 = vsel %vm1189, %v3126, 0.0
      %v3163 = vsel %vm1189, %v3127, 0.0
      %v3164 = vadd.f32 %v3162, %v3163
      %v3165 = vsel %vm1189, %v3128, 0.0
      %v3166 = vadd.f32 %v3164, %v3165
      %v3167 = vsel %vm1189, %v3129, 0.0
      %v3168 = vadd.f32 %v3166, %v3167
      %v3169 = vsel %vm1189, %v3130, 0.0
      %v3170 = vadd.f32 %v3168, %v3169
      %v3171 = vsel %vm1189, %v3131, 0.0
      %v3172 = vadd.f32 %v3170, %v3171
      %v3173 = vsel %vm1189, %v3132, 0.0
      %v3174 = vadd.f32 %v3172, %v3173
      %v3175 = vsel %vm1189, %v3133, 0.0
      %v3176 = vadd.f32 %v3174, %v3175
      %v3177 = vsel %vm1189, %v3134, 0.0
      %v3178 = vadd.f32 %v3176, %v3177
      %v3179 = vsel %vm1189, %v3135, 0.0
      %v3180 = vadd.f32 %v3178, %v3179
      %v3181 = vsel %vm1189, %v3136, 0.0
      %v3182 = vadd.f32 %v3180, %v3181
      %v3183 = vsel %vm1189, %v3137, 0.0
      %v3184 = vadd.f32 %v3182, %v3183
      %v3185 = vsel %vm1189, %v3138, 0.0
      %v3186 = vadd.f32 %v3184, %v3185
      %v3187 = vsel %vm1189, %v3139, 0.0
      %v3188 = vadd.f32 %v3186, %v3187
      %v3189 = vsel %vm1189, %v3140, 0.0
      %v3190 = vadd.f32 %v3188, %v3189
      %v3191 = vsel %vm1189, %v3141, 0.0
      %v3192 = vadd.f32 %v3190, %v3191
      %v3193 = vsel %vm1189, %v3142, 0.0
      %v3194 = vadd.f32 %v3192, %v3193
      %v3195 = vsel %vm1189, %v3143, 0.0
      %v3196 = vadd.f32 %v3194, %v3195
      %v3197 = vsel %vm1189, %v3144, 0.0
      %v3198 = vadd.f32 %v3196, %v3197
      %v3199 = vsel %vm1189, %v3145, 0.0
      %v3200 = vadd.f32 %v3198, %v3199
      %v3201 = vsel %vm1189, %v3146, 0.0
      %v3202 = vadd.f32 %v3200, %v3201
      %v3203 = vsel %vm1189, %v3147, 0.0
      %v3204 = vadd.f32 %v3202, %v3203
      %v3205 = vsel %vm1189, %v3148, 0.0
      %v3206 = vadd.f32 %v3204, %v3205
      %v3207 = vsel %vm1189, %v3149, 0.0
      %v3208 = vadd.f32 %v3206, %v3207
      %v3209 = vsel %vm1189, %v3150, 0.0
      %v3210 = vadd.f32 %v3208, %v3209
      %v3211 = vsel %vm1189, %v3151, 0.0
      %v3212 = vadd.f32 %v3210, %v3211
      %v3213 = vsel %vm1189, %v3152, 0.0
      %v3214 = vadd.f32 %v3212, %v3213
      %v3215 = vsel %vm1189, %v3153, 0.0
      %v3216 = vadd.f32 %v3214, %v3215
      %v3217 = vsel %vm1189, %v3154, 0.0
      %v3218 = vadd.f32 %v3216, %v3217
      %v3219 = vsel %vm1189, %v3155, 0.0
      %v3220 = vadd.f32 %v3218, %v3219
      %v3221 = vsel %vm1189, %v3156, 0.0
      %v3222 = vadd.f32 %v3220, %v3221
      %v3223 = vsel %vm1189, %v3157, 0.0
      %v3224 = vadd.f32 %v3222, %v3223
      %v3225 = vsel %vm1189, %v3158, 0.0
      %v3226 = vadd.f32 %v3224, %v3225
      %v3227 = vsel %vm1189, %v3159, 0.0
      %v3228 = vadd.f32 %v3226, %v3227
      %v3229 = vsel %vm1189, %v3160, 0.0
      %v3230 = vadd.f32 %v3228, %v3229
      %v3231 = vsel %vm1189, %v3161, 0.0
      %v3232 = vadd.f32 %v3230, %v3231
      %v3233 = vrot.slane %v3232, 4
      %v3234 = vadd.f32 %v3232, %v3233
      %v3235 = vrot.slane %v3234, 2
      %v3236 = vadd.f32 %v3234, %v3235
      %v3237 = vrot.slane %v3236, 1
      %v3238 = vadd.f32 %v3236, %v3237
      %v3239 = vmul.f32 %v3126, %v1519
      %v3240 = vmul.f32 %v3127, %v1521
      %v3241 = vmul.f32 %v3128, %v1524
      %v3242 = vmul.f32 %v3129, %v1526
      %v3243 = vmul.f32 %v3130, %v1529
      %v3244 = vmul.f32 %v3131, %v1531
      %v3245 = vmul.f32 %v3132, %v1534
      %v3246 = vmul.f32 %v3133, %v1536
      %v3247 = vmul.f32 %v3134, %v1539
      %v3248 = vmul.f32 %v3135, %v1541
      %v3249 = vmul.f32 %v3136, %v1544
      %v3250 = vmul.f32 %v3137, %v1546
      %v3251 = vmul.f32 %v3138, %v1549
      %v3252 = vmul.f32 %v3139, %v1551
      %v3253 = vmul.f32 %v3140, %v1554
      %v3254 = vmul.f32 %v3141, %v1556
      %v3255 = vmul.f32 %v3142, %v1559
      %v3256 = vmul.f32 %v3143, %v1561
      %v3257 = vmul.f32 %v3144, %v1564
      %v3258 = vmul.f32 %v3145, %v1566
      %v3259 = vmul.f32 %v3146, %v1569
      %v3260 = vmul.f32 %v3147, %v1571
      %v3261 = vmul.f32 %v3148, %v1574
      %v3262 = vmul.f32 %v3149, %v1576
      %v3263 = vmul.f32 %v3150, %v1579
      %v3264 = vmul.f32 %v3151, %v1581
      %v3265 = vmul.f32 %v3152, %v1584
      %v3266 = vmul.f32 %v3153, %v1586
      %v3267 = vmul.f32 %v3154, %v1589
      %v3268 = vmul.f32 %v3155, %v1591
      %v3269 = vmul.f32 %v3156, %v1594
      %v3270 = vmul.f32 %v3157, %v1596
      %v3271 = vmul.f32 %v3158, %v1599
      %v3272 = vmul.f32 %v3159, %v1601
      %v3273 = vmul.f32 %v3160, %v1604
      %v3274 = vmul.f32 %v3161, %v1606
      %v3275 = vsel %vm1189, %v3239, 0.0
      %v3276 = vsel %vm1189, %v3240, 0.0
      %v3277 = vadd.f32 %v3275, %v3276
      %v3278 = vsel %vm1189, %v3241, 0.0
      %v3279 = vadd.f32 %v3277, %v3278
      %v3280 = vsel %vm1189, %v3242, 0.0
      %v3281 = vadd.f32 %v3279, %v3280
      %v3282 = vsel %vm1189, %v3243, 0.0
      %v3283 = vadd.f32 %v3281, %v3282
      %v3284 = vsel %vm1189, %v3244, 0.0
      %v3285 = vadd.f32 %v3283, %v3284
      %v3286 = vsel %vm1189, %v3245, 0.0
      %v3287 = vadd.f32 %v3285, %v3286
      %v3288 = vsel %vm1189, %v3246, 0.0
      %v3289 = vadd.f32 %v3287, %v3288
      %v3290 = vsel %vm1189, %v3247, 0.0
      %v3291 = vadd.f32 %v3289, %v3290
      %v3292 = vsel %vm1189, %v3248, 0.0
      %v3293 = vadd.f32 %v3291, %v3292
      %v3294 = vsel %vm1189, %v3249, 0.0
      %v3295 = vadd.f32 %v3293, %v3294
      %v3296 = vsel %vm1189, %v3250, 0.0
      %v3297 = vadd.f32 %v3295, %v3296
      %v3298 = vsel %vm1189, %v3251, 0.0
      %v3299 = vadd.f32 %v3297, %v3298
      %v3300 = vsel %vm1189, %v3252, 0.0
      %v3301 = vadd.f32 %v3299, %v3300
      %v3302 = vsel %vm1189, %v3253, 0.0
      %v3303 = vadd.f32 %v3301, %v3302
      %v3304 = vsel %vm1189, %v3254, 0.0
      %v3305 = vadd.f32 %v3303, %v3304
      %v3306 = vsel %vm1189, %v3255, 0.0
      %v3307 = vadd.f32 %v3305, %v3306
      %v3308 = vsel %vm1189, %v3256, 0.0
      %v3309 = vadd.f32 %v3307, %v3308
      %v3310 = vsel %vm1189, %v3257, 0.0
      %v3311 = vadd.f32 %v3309, %v3310
      %v3312 = vsel %vm1189, %v3258, 0.0
      %v3313 = vadd.f32 %v3311, %v3312
      %v3314 = vsel %vm1189, %v3259, 0.0
      %v3315 = vadd.f32 %v3313, %v3314
      %v3316 = vsel %vm1189, %v3260, 0.0
      %v3317 = vadd.f32 %v3315, %v3316
      %v3318 = vsel %vm1189, %v3261, 0.0
      %v3319 = vadd.f32 %v3317, %v3318
      %v3320 = vsel %vm1189, %v3262, 0.0
      %v3321 = vadd.f32 %v3319, %v3320
      %v3322 = vsel %vm1189, %v3263, 0.0
      %v3323 = vadd.f32 %v3321, %v3322
      %v3324 = vsel %vm1189, %v3264, 0.0
      %v3325 = vadd.f32 %v3323, %v3324
      %v3326 = vsel %vm1189, %v3265, 0.0
      %v3327 = vadd.f32 %v3325, %v3326
      %v3328 = vsel %vm1189, %v3266, 0.0
      %v3329 = vadd.f32 %v3327, %v3328
      %v3330 = vsel %vm1189, %v3267, 0.0
      %v3331 = vadd.f32 %v3329, %v3330
      %v3332 = vsel %vm1189, %v3268, 0.0
      %v3333 = vadd.f32 %v3331, %v3332
      %v3334 = vsel %vm1189, %v3269, 0.0
      %v3335 = vadd.f32 %v3333, %v3334
      %v3336 = vsel %vm1189, %v3270, 0.0
      %v3337 = vadd.f32 %v3335, %v3336
      %v3338 = vsel %vm1189, %v3271, 0.0
      %v3339 = vadd.f32 %v3337, %v3338
      %v3340 = vsel %vm1189, %v3272, 0.0
      %v3341 = vadd.f32 %v3339, %v3340
      %v3342 = vsel %vm1189, %v3273, 0.0
      %v3343 = vadd.f32 %v3341, %v3342
      %v3344 = vsel %vm1189, %v3274, 0.0
      %v3345 = vadd.f32 %v3343, %v3344
      %v3346 = vrot.slane %v3345, 4
      %v3347 = vadd.f32 %v3345, %v3346
      %v3348 = vrot.slane %v3347, 2
      %v3349 = vadd.f32 %v3347, %v3348
      %v3350 = vrot.slane %v3349, 1
      %v3351 = vadd.f32 %v3349, %v3350
      %vm3352 = vcmask 1040384
      %v3353 = vsel %vm3352, %v3238, %v3351
      %vm3354 = vcmask 58368
      %3355 = vst.msk [vmem:[%s225] sm:$0x3] %vm3354, %v3353
      %p3356 = scmp.lt.s32.totalorder %s19, 1
      %s3357 = scalar_select %p3356, %s19, 1
      %p3358 = scmp.lt.s32.totalorder %s20, 0
      %s3359 = scalar_select %p3358, %s20, 0
      %s3360 = smul.addr %s3359, 36
      %s3361 = smul.addr %s3357, 36
      %s3362 = sadd.s32 %s3360, %s3361
      %s3363 = smul.addr %s3362, 4
      %s3364 = scalar_lea.vmem %s2, %s3363
      %p3365 = scmp.lt.s32.totalorder %s19, 1
      %s3366 = scalar_select %p3365, %s19, 1
      %p3367 = scmp.lt.s32.totalorder %s20, 0
      %s3368 = scalar_select %p3367, %s20, 0
      %s3369 = sadd.s32 %s3368, %s3366
      %s3370 = smul.addr %s3369, 2
      %s3371 = scalar_lea.vmem %s3, %s3370
      // Predicated region
      $region29: #{conv_bn_relu.2} parent=27 // pred_check
        %p3372 = pneg %p96
      $region30: #{conv_bn_relu.2} parent=27 // pred_check_branch
        %3374 = sbr.rel (%p3372) target = $region32
      $region31: #{conv_bn_relu.2} parent=27 // pred_region
        _
      $region32: #{conv_bn_relu.2} parent=27 // pred_fallthru
        _
      // Predicated region
      $region33: #{conv_bn_relu.2} parent=27 // pred_check
        %p3375 = pneg %p124
      $region34: #{conv_bn_relu.2} parent=27 // pred_check_branch
        %3377 = sbr.rel (%p3375) target = $region36
      $region35: #{conv_bn_relu.2} parent=27 // pred_region
        _
      $region36: #{conv_bn_relu.2} parent=27 // pred_fallthru
        _
    $region28: #{conv_bn_relu.2} parent=5 // pred_fallthru
      _
    %p3378 = scmp.le.s32.totalorder 2, %s10
    // Predicated region
    $region37: #{conv_bn_relu.2} parent=5 // pred_check
      %p3379 = pneg %p3378
    $region38: #{conv_bn_relu.2} parent=5 // pred_check_branch
      %3381 = sbr.rel (%p3379) target = $region40
    $region39: #{conv_bn_relu.2} parent=5 // pred_region
      %s3382 = ssub.s32 %s10, 2
      // Predicated region
      $region41: #{conv_bn_relu.2} parent=39 // pred_check
        %p3383 = pneg %p102
      $region42: #{conv_bn_relu.2} parent=39 // pred_check_branch
        %3385 = sbr.rel (%p3383) target = $region44
      $region43: #{conv_bn_relu.2} parent=39 // pred_region
        %p3386 = scmp.lt.s32.totalorder %s21, 1
        %s3387 = scalar_select %p3386, %s21, 1
        %p3388 = scmp.lt.s32.totalorder %s22, 0
        %s3389 = scalar_select %p3388, %s22, 0
        %s3390 = smul.addr %s3389, 36
        %s3391 = smul.addr %s3387, 36
        %s3392 = sadd.s32 %s3390, %s3391
        %s3393 = smul.addr %s3392, 4
        %s3394 = scalar_lea.vmem %s2, %s3393
      $region44: #{conv_bn_relu.2} parent=39 // pred_fallthru
        _
      // Predicated region
      $region45: #{conv_bn_relu.2} parent=39 // pred_check
        %p3395 = pneg %p130
      $region46: #{conv_bn_relu.2} parent=39 // pred_check_branch
        %3397 = sbr.rel (%p3395) target = $region48
      $region47: #{conv_bn_relu.2} parent=39 // pred_region
        %p3398 = scmp.lt.s32.totalorder %s21, 1
        %s3399 = scalar_select %p3398, %s21, 1
        %p3400 = scmp.lt.s32.totalorder %s22, 0
        %s3401 = scalar_select %p3400, %s22, 0
        %s3402 = sadd.s32 %s3401, %s3399
        %s3403 = smul.addr %s3402, 2
        %s3404 = scalar_lea.vmem %s3, %s3403
      $region48: #{conv_bn_relu.2} parent=39 // pred_fallthru
        _
    $region40: #{conv_bn_relu.2} parent=5 // pred_fallthru
      _
  $region6: #{conv_bn_relu.2} parent=0 // loop_footer
    %s14 = sadd.s32 1, %s10
  $region7: #{conv_bn_relu.2} parent=0 // loop_footer_branch
    %9 = sbr.rel target = $region3
  $region8: #{conv_bn_relu.2} parent=0 // loop_exit
    _

</llo_original>
